<compile_context>
chip_gen: v5e
topology: v5e:2x2
jax: 0.10.0
libtpu: 0.0.40
codegen_flags: <defaults>
</compile_context>

<pallas_src>
import functools

import jax
import jax.numpy as jnp
from jax.experimental import pallas as pl
from jax.experimental.pallas import tpu as pltpu

WAVELET = 16
WAVELET_KSIZE = 32
UNTIL_TIME = 25
N_SEGMENTS = 2           # surrogate for Temporal_Grouping_Algorithm.Segment
NEG_BIG = -1e30          # finite "-inf" pad for the Until window max


# --------------------------- static length trace ----------------------------

def _lengths(L):
    lw = L - WAVELET_KSIZE + 1            # wavelet conv, no padding
    lf = (lw - 3) // 2 + 1                # maxpool(3,2)
    lm = (lf - 3) // 2 + 1                # maxpool(3,2) -> x_miu / w length
    lp1 = (lm - 3) // 2 + 1               # AE pool 1
    lp2 = (lp1 - 3) // 2 + 1              # AE pool 2
    lu1 = 2 * lp2                         # upsample x2
    lae3 = lu1 + 2                        # conv k=3 pad=2
    lu2 = 2 * lae3                        # upsample x2
    lae4 = lu2 + 2                        # conv k=3 pad=2
    lw_out = lae4 - 4 + 1                 # maxpool(4,1)
    assert lw_out == lm, (lw_out, lm)
    return dict(lw=lw, lf=lf, lm=lm, lp1=lp1, lp2=lp2,
                lu1=lu1, lae3=lae3, lu2=lu2, lae4=lae4)


# --------------------------- constant matrices -------------------------------

def _pool_select(l_in, kernel, stride):
    """Selection matrix: stride-1 window max (length l_in-kernel+1) -> strided output."""
    l_m = l_in - kernel + 1
    l_out = (l_in - kernel) // stride + 1
    i = jnp.arange(l_m)[:, None]
    t = jnp.arange(l_out)[None, :]
    return (i == stride * t).astype(jnp.float32)


def _shift_mats(l_in, K, pad):
    """T_k (l_in, l_out) with T_k[i,t]=1 iff i == t+k-pad; zero-padded conv via MXU."""
    l_out = l_in + 2 * pad - K + 1
    i = jnp.arange(l_in)[:, None, None]
    t = jnp.arange(l_out)[None, :, None]
    k = jnp.arange(K)[None, None, :]
    m = (i == (t + k - pad)).astype(jnp.float32)          # (l_in, l_out, K)
    return jnp.transpose(m, (2, 0, 1))                     # (K, l_in, l_out)


def _upsample_mat(l_in):
    """nn.Upsample(scale_factor=2, mode='linear', align_corners=False) as (L, 2L)."""
    l_out = 2 * l_in
    i = jnp.arange(l_out, dtype=jnp.float32)
    src = jnp.clip((i + 0.5) / 2.0 - 0.5, 0.0, l_in - 1.0)
    i0 = jnp.floor(src)
    w1 = src - i0
    i1 = jnp.minimum(i0 + 1.0, l_in - 1.0)
    rows = jnp.arange(l_in, dtype=jnp.float32)[:, None]
    return ((rows == i0[None, :]) * (1.0 - w1)[None, :]
            + (rows == i1[None, :]) * w1[None, :]).astype(jnp.float32)


def _stack_taps(w):
    """(Cout, Cin, K) torch conv weight -> (K*Cout, Cin), row order k*Cout+co."""
    cout, cin, K = w.shape
    return jnp.transpose(w, (2, 0, 1)).reshape(K * cout, cin)


# ------------------------------ Pallas kernels -------------------------------

def _window_max(h, k):
    """Stride-1 window max over the lane axis via contiguous shifted slices."""
    lo = h.shape[1] - k + 1
    m = h[:, 0:lo]
    for j in range(1, k):
        m = jnp.maximum(m, h[:, j:j + lo])
    return m


def _conv_taps(h, w_ref, b_ref, t_ref):
    """Padded Conv1d as out = sum_k W_k @ (h @ T_k) + b  (all MXU, no concat)."""
    cout = b_ref.shape[0]
    K = t_ref.shape[0]
    out = None
    for k in range(K):
        hk = jnp.dot(h, t_ref[k], preferred_element_type=jnp.float32)
        term = jnp.dot(w_ref[k * cout:(k + 1) * cout, :], hk,
                       preferred_element_type=jnp.float32)
        out = term if out is None else out + term
    return out + b_ref[...]


def _frontend_kernel(xp_ref, wf_ref, bf_ref, sel1_ref, sel2_ref, o_ref):
    """Wavelet conv (BN folded) + ReLU + pool(3,2) + Miu(+/-) + pool(3,2) -> x_miu."""
    h = jnp.dot(wf_ref[...], xp_ref[0],
                preferred_element_type=jnp.float32) + bf_ref[...]      # (16, lw)
    h = jnp.maximum(h, 0.0)
    f = jnp.dot(_window_max(h, 3), sel1_ref[...],
                preferred_element_type=jnp.float32)                     # (16, lf)

    # TODO(synk): Modules.Miu(+/-1, wavelet) undefined; surrogate = sigmoid(+/-x).
    def pool2(v):
        return jnp.dot(_window_max(v, 3), sel2_ref[...],
                       preferred_element_type=jnp.float32)

    o_ref[0, 0:WAVELET, :] = pool2(jax.nn.sigmoid(f))
    o_ref[0, WAVELET:2 * WAVELET, :] = pool2(jax.nn.sigmoid(-f))


def _autoenc_kernel(xm_ref,
                    w1_ref, b1_ref, t1_ref, s1_ref,
                    w2_ref, b2_ref, t2_ref, s2_ref,
                    u1_ref,
                    w3_ref, b3_ref, t3_ref,
                    u2_ref,
                    w4_ref, b4_ref, t4_ref,
                    o_ref):
    """AutoEncoder + temporal grouping (masked multiplies) -> `input` (padded)."""
    xm = xm_ref[0]                                                      # (32, Lm)
    h = jnp.tanh(_conv_taps(xm, w1_ref, b1_ref, t1_ref))                # (64, Lm)
    h = jnp.dot(_window_max(h, 3), s1_ref[...], preferred_element_type=jnp.float32)
    h = jnp.maximum(_conv_taps(h, w2_ref, b2_ref, t2_ref), 0.0)
    h = jnp.dot(_window_max(h, 3), s2_ref[...], preferred_element_type=jnp.float32)
    h = jnp.dot(h, u1_ref[...], preferred_element_type=jnp.float32)     # upsample x2
    h = jnp.tanh(_conv_taps(h, w3_ref, b3_ref, t3_ref))
    h = jnp.dot(h, u2_ref[...], preferred_element_type=jnp.float32)     # upsample x2
    h = jax.nn.sigmoid(_conv_taps(h, w4_ref, b4_ref, t4_ref))
    w = _window_max(h, 4)                                               # (32, Lm)

    # TODO(synk): Temporal_Grouping_Algorithm.Segment undefined; surrogate =
    # N_SEGMENTS boolean masks splitting the time axis into equal chunks.
    prod = w * xm
    lm = xm_ref.shape[2]
    tt = jax.lax.broadcasted_iota(jnp.int32, prod.shape, 1)
    lo = 0
    for s in range(N_SEGMENTS):
        hi = (lm * (s + 1)) // N_SEGMENTS
        seg = jnp.where((tt >= lo) & (tt < hi), prod, 0.0)
        o_ref[0, s * 2 * WAVELET:(s + 1) * 2 * WAVELET, 0:lm] = seg
        lo = hi
    # pad columns with a large-negative constant so Until uses clean shifted slices
    o_ref[0, :, lm:] = jnp.full((o_ref.shape[1], o_ref.shape[2] - lm),
                                NEG_BIG, jnp.float32)


def _logic_kernel(inp_ref, wao1_ref, bao1_ref, wao2_ref, bao2_ref, o_ref, *, lm):
    """Until + merged And/Or level-1 + merged And/Or level-2 -> x_2."""
    xp = inp_ref[0]                       # (64, lm + UNTIL_TIME - 1), tail = NEG_BIG
    x = xp[:, 0:lm]
    l_u = lm - 1

    # TODO(synk): Modules.Until undefined; surrogate = sliding "eventually within
    # UNTIL_TIME" max, here as a shifted-slice running max over the padded buffer.
    m = xp[:, 0:l_u]
    for d in range(1, UNTIL_TIME):
        m = jnp.maximum(m, xp[:, d:d + l_u])
    until = m                             # (64, lm-1)

    # merged And_2d / Or_2d (k=2 conv) + ReLU
    n1 = bao1_ref.shape[0]
    a1 = (jnp.dot(wao1_ref[0:n1, :], x[:, 0:lm - 1], preferred_element_type=jnp.float32)
          + jnp.dot(wao1_ref[n1:2 * n1, :], x[:, 1:lm], preferred_element_type=jnp.float32)
          + bao1_ref[...])
    a1 = jnp.maximum(a1, 0.0)             # (40, lm-1)

    # merged And / Or (k=2 conv) on x_1 = [a1 ; until] without materializing concat
    n2 = bao2_ref.shape[0]
    l2 = l_u - 1
    out2 = (jnp.dot(wao2_ref[0:n2, 0:n1], a1[:, 0:l2], preferred_element_type=jnp.float32)
            + jnp.dot(wao2_ref[0:n2, n1:], until[:, 0:l2], preferred_element_type=jnp.float32)
            + jnp.dot(wao2_ref[n2:2 * n2, 0:n1], a1[:, 1:l2 + 1], preferred_element_type=jnp.float32)
            + jnp.dot(wao2_ref[n2:2 * n2, n1:], until[:, 1:l2 + 1], preferred_element_type=jnp.float32)
            + bao2_ref[...])
    o_ref[0] = jnp.maximum(out2, 0.0)     # (12, lm-2)


def _classifier_kernel(x_ref, w1_ref, b1_ref, w2_ref, b2_ref, w3_ref, b3_ref, o_ref):
    """fc1 -> ReLU -> fc2 -> ReLU -> fc3 fused; bf16 weights, f32 accumulate."""
    h = x_ref[...]
    h = jnp.maximum(jnp.dot(h.astype(jnp.bfloat16), w1_ref[...],
                            preferred_element_type=jnp.float32) + b1_ref[...], 0.0)
    h = jnp.maximum(jnp.dot(h.astype(jnp.bfloat16), w2_ref[...],
                            preferred_element_type=jnp.float32) + b2_ref[...], 0.0)
    o_ref[...] = jnp.dot(h.astype(jnp.bfloat16), w3_ref[...],
                         preferred_element_type=jnp.float32) + b3_ref[...]


# ------------------------------- BlockSpecs ----------------------------------

def _const_spec(a):
    z = (0,) * a.ndim
    return pl.BlockSpec(a.shape, lambda b, _z=z: _z)


def _batched_spec(shape):
    nd = len(shape)
    return pl.BlockSpec((1,) + tuple(shape[1:]),
                        lambda b, _nd=nd: (b,) + (0,) * (_nd - 1))


# ------------------------------- Parameters ----------------------------------

def init_params(key, input_len, out_channel=10):
    keys = jax.random.split(key, 12)

    def rnd(k, shape):
        return jax.random.normal(k, shape, jnp.float32) * 0.1

    lens = _lengths(input_len)
    p = {}
    # TODO(synk): Modules.Wavelet_Convolution(16, 32) is undefined; surrogate =
    # fixed Ricker-wavelet filter bank (16 scales x 32 taps), no bias.
    taps = jnp.arange(WAVELET_KSIZE, dtype=jnp.float32) - (WAVELET_KSIZE - 1) / 2.0
    scales = jnp.arange(1, WAVELET + 1, dtype=jnp.float32)[:, None]
    tt = (taps[None, :] / scales) ** 2
    ricker = (1.0 - tt) * jnp.exp(-0.5 * tt) * (2.0 / (jnp.sqrt(3.0 * scales) * jnp.pi ** 0.25))
    p["wavelet_w"] = ricker.reshape(WAVELET, 1, WAVELET_KSIZE)
    p["wavelet_b"] = jnp.zeros((WAVELET,), jnp.float32)

    # BatchNorm1d(16), eval mode with default stats.
    p["bn_gamma"] = jnp.ones((WAVELET,), jnp.float32)
    p["bn_beta"] = jnp.zeros((WAVELET,), jnp.float32)
    p["bn_mean"] = jnp.zeros((WAVELET,), jnp.float32)
    p["bn_var"] = jnp.ones((WAVELET,), jnp.float32)

    # AutoEncoder conv stack.
    p["ae1_w"] = rnd(keys[0], (64, 2 * WAVELET, 3)); p["ae1_b"] = jnp.zeros((64,), jnp.float32)
    p["ae2_w"] = rnd(keys[1], (32, 64, 3));          p["ae2_b"] = jnp.zeros((32,), jnp.float32)
    p["ae3_w"] = rnd(keys[2], (64, 32, 3));          p["ae3_b"] = jnp.zeros((64,), jnp.float32)
    p["ae4_w"] = rnd(keys[3], (2 * WAVELET, 64, 3)); p["ae4_b"] = jnp.zeros((2 * WAVELET,), jnp.float32)

    # TODO(synk): And/Or_Convolution(_2d) are undefined; surrogate Conv1d(k=2, s=1).
    in_seg = 2 * WAVELET * N_SEGMENTS
    p["and2d_w"] = rnd(keys[4], (20, in_seg, 2)); p["and2d_b"] = jnp.zeros((20,), jnp.float32)
    p["or2d_w"] = rnd(keys[5], (20, in_seg, 2));  p["or2d_b"] = jnp.zeros((20,), jnp.float32)
    in_lvl2 = 20 + 20 + in_seg
    p["and_w"] = rnd(keys[6], (6, in_lvl2, 2)); p["and_b"] = jnp.zeros((6,), jnp.float32)
    p["or_w"] = rnd(keys[7], (6, in_lvl2, 2));  p["or_b"] = jnp.zeros((6,), jnp.float32)

    # TODO(synk): original Linear(170, 1024) in_features depends on the undefined
    # custom modules' output length; derived from the surrogate pipeline here.
    cls_in = lens["lm"] - 2
    p["fc1_w"] = rnd(keys[8], (cls_in, 1024)); p["fc1_b"] = jnp.zeros((1024,), jnp.float32)
    p["fc2_w"] = rnd(keys[9], (1024, 256));    p["fc2_b"] = jnp.zeros((256,), jnp.float32)
    p["fc3_w"] = rnd(keys[10], (256, out_channel)); p["fc3_b"] = jnp.zeros((out_channel,), jnp.float32)
    return p


_AE_KEYS = ("ae1_w", "ae1_b", "ae1_t", "sel_ae1",
            "ae2_w", "ae2_b", "ae2_t", "sel_ae2",
            "up1",
            "ae3_w", "ae3_b", "ae3_t",
            "up2",
            "ae4_w", "ae4_b", "ae4_t")


def build_kernel_params(p, input_len, eps=1e-5):
    """Fold BN, stack conv taps, merge And/Or weights, precompute constant mats."""
    lens = _lengths(input_len)
    lm = lens["lm"]
    kp = {}

    # eval-mode BatchNorm folded into the wavelet conv (affine fold).
    scale = p["bn_gamma"] / jnp.sqrt(p["bn_var"] + eps)
    kp["wavelet_wf"] = (p["wavelet_w"][:, 0, :] * scale[:, None]).astype(jnp.float32)
    kp["wavelet_bf"] = (p["wavelet_b"] * scale + p["bn_beta"]
                        - p["bn_mean"] * scale).reshape(WAVELET, 1)
    kp["sel_lw"] = _pool_select(lens["lw"], 3, 2)
    kp["sel_lf"] = _pool_select(lens["lf"], 3, 2)

    # AutoEncoder: per-tap stacked weights + shift / pool-select / upsample mats.
    kp["ae1_w"] = _stack_taps(p["ae1_w"]); kp["ae1_b"] = p["ae1_b"].reshape(-1, 1)
    kp["ae1_t"] = _shift_mats(lm, 3, 1)
    kp["sel_ae1"] = _pool_select(lm, 3, 2)
    kp["ae2_w"] = _stack_taps(p["ae2_w"]); kp["ae2_b"] = p["ae2_b"].reshape(-1, 1)
    kp["ae2_t"] = _shift_mats(lens["lp1"], 3, 1)
    kp["sel_ae2"] = _pool_select(lens["lp1"], 3, 2)
    kp["up1"] = _upsample_mat(lens["lp2"])
    kp["ae3_w"] = _stack_taps(p["ae3_w"]); kp["ae3_b"] = p["ae3_b"].reshape(-1, 1)
    kp["ae3_t"] = _shift_mats(lens["lu1"], 3, 2)
    kp["up2"] = _upsample_mat(lens["lae3"])
    kp["ae4_w"] = _stack_taps(p["ae4_w"]); kp["ae4_b"] = p["ae4_b"].reshape(-1, 1)
    kp["ae4_t"] = _shift_mats(lens["lu2"], 3, 2)

    # Merged And/Or convolutions (output order [and, or] matches torch.cat).
    kp["ao1_w"] = _stack_taps(jnp.concatenate([p["and2d_w"], p["or2d_w"]], axis=0))
    kp["ao1_b"] = jnp.concatenate([p["and2d_b"], p["or2d_b"]]).reshape(-1, 1)
    kp["ao2_w"] = _stack_taps(jnp.concatenate([p["and_w"], p["or_w"]], axis=0))
    kp["ao2_b"] = jnp.concatenate([p["and_b"], p["or_b"]]).reshape(-1, 1)

    # Classifier weights in bf16 (MXU operands); biases stay f32.
    kp["fc1_w"] = p["fc1_w"].astype(jnp.bfloat16); kp["fc1_b"] = p["fc1_b"].reshape(1, -1)
    kp["fc2_w"] = p["fc2_w"].astype(jnp.bfloat16); kp["fc2_b"] = p["fc2_b"].reshape(1, -1)
    kp["fc3_w"] = p["fc3_w"].astype(jnp.bfloat16); kp["fc3_b"] = p["fc3_b"].reshape(1, -1)
    return kp


# ------------------------------ Forward pass ---------------------------------

@jax.jit
def tln_forward(kp, x):
    """x: (B, 1, L) -> (B, 12, out_channel) via 4 fused Pallas kernels."""
    B, _, L = x.shape
    lens = _lengths(L)
    lw, lm = lens["lw"], lens["lm"]
    n_inp = N_SEGMENTS * 2 * WAVELET
    pad = UNTIL_TIME - 1
    par = pltpu.CompilerParams(dimension_semantics=("parallel",))

    # im2col patches for the wavelet conv (XLA glue on the raw input, fused by jit).
    xs = x.reshape(B, L)
    xpatch = jnp.stack([xs[:, k:k + lw] for k in range(WAVELET_KSIZE)], axis=1)

    # 1) Basic_Predicate_Network (BN folded) + Miu_Pos/Neg + pools -> x_miu
    x_miu = pl.pallas_call(
        _frontend_kernel,
        out_shape=jax.ShapeDtypeStruct((B, 2 * WAVELET, lm), jnp.float32),
        grid=(B,),
        in_specs=[_batched_spec(xpatch.shape),
                  _const_spec(kp["wavelet_wf"]), _const_spec(kp["wavelet_bf"]),
                  _const_spec(kp["sel_lw"]), _const_spec(kp["sel_lf"])],
        out_specs=_batched_spec((B, 2 * WAVELET, lm)),
        compiler_params=par,
    )(xpatch, kp["wavelet_wf"], kp["wavelet_bf"], kp["sel_lw"], kp["sel_lf"])

    # 2) AutoEncoder + temporal grouping -> `input` (padded for Until)
    ae_args = [kp[k] for k in _AE_KEYS]
    inp = pl.pallas_call(
        _autoenc_kernel,
        out_shape=jax.ShapeDtypeStruct((B, n_inp, lm + pad), jnp.float32),
        grid=(B,),
        in_specs=[_batched_spec(x_miu.shape)] + [_const_spec(a) for a in ae_args],
        out_specs=_batched_spec((B, n_inp, lm + pad)),
        compiler_params=par,
    )(x_miu, *ae_args)

    # 3) Until + merged And/Or level 1 + merged And/Or level 2 -> x_2
    n2 = kp["ao2_b"].shape[0]
    x_2 = pl.pallas_call(
        functools.partial(_logic_kernel, lm=lm),
        out_shape=jax.ShapeDtypeStruct((B, n2, lm - 2), jnp.float32),
        grid=(B,),
        in_specs=[_batched_spec(inp.shape),
                  _const_spec(kp["ao1_w"]), _const_spec(kp["ao1_b"]),
                  _const_spec(kp["ao2_w"]), _const_spec(kp["ao2_b"])],
        out_specs=_batched_spec((B, n2, lm - 2)),
        compiler_params=par,
    )(inp, kp["ao1_w"], kp["ao1_b"], kp["ao2_w"], kp["ao2_b"])

    # 4) Classifier (Dropout = identity in eval); nn.Linear acts on the last axis.
    Bc, Cc, F = x_2.shape
    rows = x_2.reshape(Bc * Cc, F)
    out = pl.pallas_call(
        _classifier_kernel,
        out_shape=jax.ShapeDtypeStruct((Bc * Cc, kp["fc3_b"].shape[1]), jnp.float32),
    )(rows, kp["fc1_w"], kp["fc1_b"], kp["fc2_w"], kp["fc2_b"],
      kp["fc3_w"], kp["fc3_b"])
    return out.reshape(Bc, Cc, -1)                       # (B, 12, out_channel)


# ---------------------------------- Main --------------------------------------

if __name__ == "__main__":
    key = jax.random.PRNGKey(0)
    k_x, k_p = jax.random.split(key)

    B, L = 2, 126                       # x is (batch, 1 channel, length)
    x = jax.random.normal(k_x, (B, 1, L), jnp.float32)

    params = init_params(k_p, input_len=L, out_channel=10)
    kparams = build_kernel_params(params, input_len=L)

    out = tln_forward(kparams, x)
    out = jax.block_until_ready(out)
    assert out.shape == (B, 12, 10), out.shape
    assert bool(jnp.all(jnp.isfinite(out)))
    print("KERNEL_OK")
</pallas_src>

<mosaic_0001>
module attributes {stable_mosaic.version = 11 : i64} {
  func.func @_frontend_kernel(%arg0: i32, %arg1: memref<1x32x95xf32, #tpu.memory_space<vmem>>, %arg2: memref<16x32xf32, #tpu.memory_space<vmem>>, %arg3: memref<16x1xf32, #tpu.memory_space<vmem>>, %arg4: memref<93x47xf32, #tpu.memory_space<vmem>>, %arg5: memref<45x23xf32, #tpu.memory_space<vmem>>, %arg6: memref<1x32x23xf32, #tpu.memory_space<vmem>>) attributes {dimension_semantics = [#tpu.dimension_semantics<parallel>], iteration_bounds = array<i64: 2>, scalar_prefetch = 0 : i64, scratch_operands = 0 : i64, tpu.core_type = #tpu.core_type<tc>, window_params = [{transform_indices = @transform_0, window_bounds = array<i64: 1, 32, 95>}, {pipeline_mode = #tpu.pipeline_mode<synchronous>, transform_indices = @transform_1, window_bounds = array<i64: 16, 32>}, {pipeline_mode = #tpu.pipeline_mode<synchronous>, transform_indices = @transform_2, window_bounds = array<i64: 16, 1>}, {pipeline_mode = #tpu.pipeline_mode<synchronous>, transform_indices = @transform_3, window_bounds = array<i64: 93, 47>}, {pipeline_mode = #tpu.pipeline_mode<synchronous>, transform_indices = @transform_4, window_bounds = array<i64: 45, 23>}, {transform_indices = @transform_5, window_bounds = array<i64: 1, 32, 23>}]} {
    %c0 = arith.constant 0 : index
    %c0_0 = arith.constant 0 : index
    %0 = vector.load %arg2[%c0, %c0_0] : memref<16x32xf32, #tpu.memory_space<vmem>>, vector<16x32xf32>
    %c0_1 = arith.constant 0 : index
    %c0_2 = arith.constant 0 : index
    %c0_3 = arith.constant 0 : index
    %1 = vector.load %arg1[%c0_1, %c0_2, %c0_3] : memref<1x32x95xf32, #tpu.memory_space<vmem>>, vector<1x32x95xf32>
    %2 = vector.shape_cast %1 : vector<1x32x95xf32> to vector<32x95xf32>
    %cst = arith.constant dense<0.000000e+00> : vector<16x95xf32>
    %3 = tpu.matmul %0, %2, %cst {dimension_numbers = #tpu.dot_dimension_numbers<[1], [0], [0], [1], [0, 0, 1, 1], [], []>} : vector<16x32xf32>, vector<32x95xf32>, vector<16x95xf32> -> vector<16x95xf32>
    %c0_4 = arith.constant 0 : index
    %c0_5 = arith.constant 0 : index
    %4 = vector.load %arg3[%c0_4, %c0_5] : memref<16x1xf32, #tpu.memory_space<vmem>>, vector<16x1xf32>
    %5 = vector.broadcast %4 : vector<16x1xf32> to vector<16x95xf32>
    %6 = arith.addf %3, %5 : vector<16x95xf32>
    %cst_6 = arith.constant 0.000000e+00 : f32
    %7 = vector.broadcast %cst_6 : f32 to vector<16x95xf32>
    %8 = arith.maximumf %6, %7 : vector<16x95xf32>
    %9 = vector.extract_strided_slice %8 {offsets = [0, 0], sizes = [16, 93], strides = [1, 1]} : vector<16x95xf32> to vector<16x93xf32>
    %10 = vector.extract_strided_slice %8 {offsets = [0, 1], sizes = [16, 93], strides = [1, 1]} : vector<16x95xf32> to vector<16x93xf32>
    %11 = arith.maximumf %9, %10 : vector<16x93xf32>
    %12 = vector.extract_strided_slice %8 {offsets = [0, 2], sizes = [16, 93], strides = [1, 1]} : vector<16x95xf32> to vector<16x93xf32>
    %13 = arith.maximumf %11, %12 : vector<16x93xf32>
    %c0_7 = arith.constant 0 : index
    %c0_8 = arith.constant 0 : index
    %14 = vector.load %arg4[%c0_7, %c0_8] : memref<93x47xf32, #tpu.memory_space<vmem>>, vector<93x47xf32>
    %cst_9 = arith.constant dense<0.000000e+00> : vector<16x47xf32>
    %15 = tpu.matmul %13, %14, %cst_9 {dimension_numbers = #tpu.dot_dimension_numbers<[1], [0], [0], [1], [0, 0, 1, 1], [], []>} : vector<16x93xf32>, vector<93x47xf32>, vector<16x47xf32> -> vector<16x47xf32>
    %16 = arith.negf %15 : vector<16x47xf32>
    %17 = math.exp %16 : vector<16x47xf32>
    %cst_10 = arith.constant 1.000000e+00 : f32
    %18 = vector.broadcast %cst_10 : f32 to vector<16x47xf32>
    %19 = arith.addf %18, %17 : vector<16x47xf32>
    %20 = arith.divf %18, %19 : vector<16x47xf32>
    %21 = vector.extract_strided_slice %20 {offsets = [0, 0], sizes = [16, 45], strides = [1, 1]} : vector<16x47xf32> to vector<16x45xf32>
    %22 = vector.extract_strided_slice %20 {offsets = [0, 1], sizes = [16, 45], strides = [1, 1]} : vector<16x47xf32> to vector<16x45xf32>
    %23 = arith.maximumf %21, %22 : vector<16x45xf32>
    %24 = vector.extract_strided_slice %20 {offsets = [0, 2], sizes = [16, 45], strides = [1, 1]} : vector<16x47xf32> to vector<16x45xf32>
    %25 = arith.maximumf %23, %24 : vector<16x45xf32>
    %c0_11 = arith.constant 0 : index
    %c0_12 = arith.constant 0 : index
    %26 = vector.load %arg5[%c0_11, %c0_12] : memref<45x23xf32, #tpu.memory_space<vmem>>, vector<45x23xf32>
    %cst_13 = arith.constant dense<0.000000e+00> : vector<16x23xf32>
    %27 = tpu.matmul %25, %26, %cst_13 {dimension_numbers = #tpu.dot_dimension_numbers<[1], [0], [0], [1], [0, 0, 1, 1], [], []>} : vector<16x45xf32>, vector<45x23xf32>, vector<16x23xf32> -> vector<16x23xf32>
    %c0_14 = arith.constant 0 : index
    %c0_15 = arith.constant 0 : index
    %c0_16 = arith.constant 0 : index
    %28 = vector.load %arg6[%c0_14, %c0_15, %c0_16] : memref<1x32x23xf32, #tpu.memory_space<vmem>>, vector<1x16x23xf32>
    %29 = vector.shape_cast %28 : vector<1x16x23xf32> to vector<16x23xf32>
    %30 = vector.shape_cast %27 : vector<16x23xf32> to vector<1x16x23xf32>
    tpu.vector_store %arg6[%c0_14, %c0_15, %c0_16], %30 {strides = array<i32>} : memref<1x32x23xf32, #tpu.memory_space<vmem>>, vector<1x16x23xf32>,
    %cst_17 = arith.constant 0.000000e+00 : f32
    %31 = vector.broadcast %cst_17 : f32 to vector<16x47xf32>
    %32 = arith.subf %31, %15 : vector<16x47xf32>
    %33 = arith.negf %32 : vector<16x47xf32>
    %34 = math.exp %33 : vector<16x47xf32>
    %cst_18 = arith.constant 1.000000e+00 : f32
    %35 = vector.broadcast %cst_18 : f32 to vector<16x47xf32>
    %36 = arith.addf %35, %34 : vector<16x47xf32>
    %37 = arith.divf %35, %36 : vector<16x47xf32>
    %38 = vector.extract_strided_slice %37 {offsets = [0, 0], sizes = [16, 45], strides = [1, 1]} : vector<16x47xf32> to vector<16x45xf32>
    %39 = vector.extract_strided_slice %37 {offsets = [0, 1], sizes = [16, 45], strides = [1, 1]} : vector<16x47xf32> to vector<16x45xf32>
    %40 = arith.maximumf %38, %39 : vector<16x45xf32>
    %41 = vector.extract_strided_slice %37 {offsets = [0, 2], sizes = [16, 45], strides = [1, 1]} : vector<16x47xf32> to vector<16x45xf32>
    %42 = arith.maximumf %40, %41 : vector<16x45xf32>
    %c0_19 = arith.constant 0 : index
    %c0_20 = arith.constant 0 : index
    %43 = vector.load %arg5[%c0_19, %c0_20] : memref<45x23xf32, #tpu.memory_space<vmem>>, vector<45x23xf32>
    %cst_21 = arith.constant dense<0.000000e+00> : vector<16x23xf32>
    %44 = tpu.matmul %42, %43, %cst_21 {dimension_numbers = #tpu.dot_dimension_numbers<[1], [0], [0], [1], [0, 0, 1, 1], [], []>} : vector<16x45xf32>, vector<45x23xf32>, vector<16x23xf32> -> vector<16x23xf32>
    %c0_22 = arith.constant 0 : index
    %c16 = arith.constant 16 : index
    %c0_23 = arith.constant 0 : index
    %45 = vector.load %arg6[%c0_22, %c16, %c0_23] : memref<1x32x23xf32, #tpu.memory_space<vmem>>, vector<1x16x23xf32>
    %46 = vector.shape_cast %45 : vector<1x16x23xf32> to vector<16x23xf32>
    %47 = vector.shape_cast %44 : vector<16x23xf32> to vector<1x16x23xf32>
    tpu.vector_store %arg6[%c0_22, %c16, %c0_23], %47 {strides = array<i32>} : memref<1x32x23xf32, #tpu.memory_space<vmem>>, vector<1x16x23xf32>,
    return
  }
  func.func @transform_0(%arg0: i32) -> (i32, i32, i32) {
    %c0_i32 = arith.constant 0 : i32
    %c0_i32_0 = arith.constant 0 : i32
    %c0_i32_1 = arith.constant 0 : i32
    return %arg0, %c0_i32, %c0_i32_0 : i32, i32, i32
  }
  func.func @transform_1(%arg0: i32) -> (i32, i32) {
    %c0_i32 = arith.constant 0 : i32
    %c0_i32_0 = arith.constant 0 : i32
    %c0_i32_1 = arith.constant 0 : i32
    return %c0_i32, %c0_i32_0 : i32, i32
  }
  func.func @transform_2(%arg0: i32) -> (i32, i32) {
    %c0_i32 = arith.constant 0 : i32
    %c0_i32_0 = arith.constant 0 : i32
    %c0_i32_1 = arith.constant 0 : i32
    return %c0_i32, %c0_i32_0 : i32, i32
  }
  func.func @transform_3(%arg0: i32) -> (i32, i32) {
    %c0_i32 = arith.constant 0 : i32
    %c0_i32_0 = arith.constant 0 : i32
    %c0_i32_1 = arith.constant 0 : i32
    return %c0_i32, %c0_i32_0 : i32, i32
  }
  func.func @transform_4(%arg0: i32) -> (i32, i32) {
    %c0_i32 = arith.constant 0 : i32
    %c0_i32_0 = arith.constant 0 : i32
    %c0_i32_1 = arith.constant 0 : i32
    return %c0_i32, %c0_i32_0 : i32, i32
  }
  func.func @transform_5(%arg0: i32) -> (i32, i32, i32) {
    %c0_i32 = arith.constant 0 : i32
    %c0_i32_0 = arith.constant 0 : i32
    %c0_i32_1 = arith.constant 0 : i32
    return %arg0, %c0_i32, %c0_i32_0 : i32, i32, i32
  }
}

module attributes {stable_mosaic.version = 11 : i64} {
  func.func @_logic_kernel(%arg0: i32, %arg1: memref<1x64x47xf32, #tpu.memory_space<vmem>>, %arg2: memref<80x64xf32, #tpu.memory_space<vmem>>, %arg3: memref<40x1xf32, #tpu.memory_space<vmem>>, %arg4: memref<24x104xf32, #tpu.memory_space<vmem>>, %arg5: memref<12x1xf32, #tpu.memory_space<vmem>>, %arg6: memref<1x12x21xf32, #tpu.memory_space<vmem>>) attributes {dimension_semantics = [#tpu.dimension_semantics<parallel>], iteration_bounds = array<i64: 2>, scalar_prefetch = 0 : i64, scratch_operands = 0 : i64, tpu.core_type = #tpu.core_type<tc>, window_params = [{transform_indices = @transform_0, window_bounds = array<i64: 1, 64, 47>}, {pipeline_mode = #tpu.pipeline_mode<synchronous>, transform_indices = @transform_1, window_bounds = array<i64: 80, 64>}, {pipeline_mode = #tpu.pipeline_mode<synchronous>, transform_indices = @transform_2, window_bounds = array<i64: 40, 1>}, {pipeline_mode = #tpu.pipeline_mode<synchronous>, transform_indices = @transform_3, window_bounds = array<i64: 24, 104>}, {pipeline_mode = #tpu.pipeline_mode<synchronous>, transform_indices = @transform_4, window_bounds = array<i64: 12, 1>}, {transform_indices = @transform_5, window_bounds = array<i64: 1, 12, 21>}]} {
    %c0 = arith.constant 0 : index
    %c0_0 = arith.constant 0 : index
    %c0_1 = arith.constant 0 : index
    %0 = vector.load %arg1[%c0, %c0_0, %c0_1] : memref<1x64x47xf32, #tpu.memory_space<vmem>>, vector<1x64x47xf32>
    %1 = vector.shape_cast %0 : vector<1x64x47xf32> to vector<64x47xf32>
    %2 = vector.extract_strided_slice %1 {offsets = [0, 0], sizes = [64, 23], strides = [1, 1]} : vector<64x47xf32> to vector<64x23xf32>
    %3 = vector.extract_strided_slice %1 {offsets = [0, 0], sizes = [64, 22], strides = [1, 1]} : vector<64x47xf32> to vector<64x22xf32>
    %4 = vector.extract_strided_slice %1 {offsets = [0, 1], sizes = [64, 22], strides = [1, 1]} : vector<64x47xf32> to vector<64x22xf32>
    %5 = arith.maximumf %3, %4 : vector<64x22xf32>
    %6 = vector.extract_strided_slice %1 {offsets = [0, 2], sizes = [64, 22], strides = [1, 1]} : vector<64x47xf32> to vector<64x22xf32>
    %7 = arith.maximumf %5, %6 : vector<64x22xf32>
    %8 = vector.extract_strided_slice %1 {offsets = [0, 3], sizes = [64, 22], strides = [1, 1]} : vector<64x47xf32> to vector<64x22xf32>
    %9 = arith.maximumf %7, %8 : vector<64x22xf32>
    %10 = vector.extract_strided_slice %1 {offsets = [0, 4], sizes = [64, 22], strides = [1, 1]} : vector<64x47xf32> to vector<64x22xf32>
    %11 = arith.maximumf %9, %10 : vector<64x22xf32>
    %12 = vector.extract_strided_slice %1 {offsets = [0, 5], sizes = [64, 22], strides = [1, 1]} : vector<64x47xf32> to vector<64x22xf32>
    %13 = arith.maximumf %11, %12 : vector<64x22xf32>
    %14 = vector.extract_strided_slice %1 {offsets = [0, 6], sizes = [64, 22], strides = [1, 1]} : vector<64x47xf32> to vector<64x22xf32>
    %15 = arith.maximumf %13, %14 : vector<64x22xf32>
    %16 = vector.extract_strided_slice %1 {offsets = [0, 7], sizes = [64, 22], strides = [1, 1]} : vector<64x47xf32> to vector<64x22xf32>
    %17 = arith.maximumf %15, %16 : vector<64x22xf32>
    %18 = vector.extract_strided_slice %1 {offsets = [0, 8], sizes = [64, 22], strides = [1, 1]} : vector<64x47xf32> to vector<64x22xf32>
    %19 = arith.maximumf %17, %18 : vector<64x22xf32>
    %20 = vector.extract_strided_slice %1 {offsets = [0, 9], sizes = [64, 22], strides = [1, 1]} : vector<64x47xf32> to vector<64x22xf32>
    %21 = arith.maximumf %19, %20 : vector<64x22xf32>
    %22 = vector.extract_strided_slice %1 {offsets = [0, 10], sizes = [64, 22], strides = [1, 1]} : vector<64x47xf32> to vector<64x22xf32>
    %23 = arith.maximumf %21, %22 : vector<64x22xf32>
    %24 = vector.extract_strided_slice %1 {offsets = [0, 11], sizes = [64, 22], strides = [1, 1]} : vector<64x47xf32> to vector<64x22xf32>
    %25 = arith.maximumf %23, %24 : vector<64x22xf32>
    %26 = vector.extract_strided_slice %1 {offsets = [0, 12], sizes = [64, 22], strides = [1, 1]} : vector<64x47xf32> to vector<64x22xf32>
    %27 = arith.maximumf %25, %26 : vector<64x22xf32>
    %28 = vector.extract_strided_slice %1 {offsets = [0, 13], sizes = [64, 22], strides = [1, 1]} : vector<64x47xf32> to vector<64x22xf32>
    %29 = arith.maximumf %27, %28 : vector<64x22xf32>
    %30 = vector.extract_strided_slice %1 {offsets = [0, 14], sizes = [64, 22], strides = [1, 1]} : vector<64x47xf32> to vector<64x22xf32>
    %31 = arith.maximumf %29, %30 : vector<64x22xf32>
    %32 = vector.extract_strided_slice %1 {offsets = [0, 15], sizes = [64, 22], strides = [1, 1]} : vector<64x47xf32> to vector<64x22xf32>
    %33 = arith.maximumf %31, %32 : vector<64x22xf32>
    %34 = vector.extract_strided_slice %1 {offsets = [0, 16], sizes = [64, 22], strides = [1, 1]} : vector<64x47xf32> to vector<64x22xf32>
    %35 = arith.maximumf %33, %34 : vector<64x22xf32>
    %36 = vector.extract_strided_slice %1 {offsets = [0, 17], sizes = [64, 22], strides = [1, 1]} : vector<64x47xf32> to vector<64x22xf32>
    %37 = arith.maximumf %35, %36 : vector<64x22xf32>
    %38 = vector.extract_strided_slice %1 {offsets = [0, 18], sizes = [64, 22], strides = [1, 1]} : vector<64x47xf32> to vector<64x22xf32>
    %39 = arith.maximumf %37, %38 : vector<64x22xf32>
    %40 = vector.extract_strided_slice %1 {offsets = [0, 19], sizes = [64, 22], strides = [1, 1]} : vector<64x47xf32> to vector<64x22xf32>
    %41 = arith.maximumf %39, %40 : vector<64x22xf32>
    %42 = vector.extract_strided_slice %1 {offsets = [0, 20], sizes = [64, 22], strides = [1, 1]} : vector<64x47xf32> to vector<64x22xf32>
    %43 = arith.maximumf %41, %42 : vector<64x22xf32>
    %44 = vector.extract_strided_slice %1 {offsets = [0, 21], sizes = [64, 22], strides = [1, 1]} : vector<64x47xf32> to vector<64x22xf32>
    %45 = arith.maximumf %43, %44 : vector<64x22xf32>
    %46 = vector.extract_strided_slice %1 {offsets = [0, 22], sizes = [64, 22], strides = [1, 1]} : vector<64x47xf32> to vector<64x22xf32>
    %47 = arith.maximumf %45, %46 : vector<64x22xf32>
    %48 = vector.extract_strided_slice %1 {offsets = [0, 23], sizes = [64, 22], strides = [1, 1]} : vector<64x47xf32> to vector<64x22xf32>
    %49 = arith.maximumf %47, %48 : vector<64x22xf32>
    %50 = vector.extract_strided_slice %1 {offsets = [0, 24], sizes = [64, 22], strides = [1, 1]} : vector<64x47xf32> to vector<64x22xf32>
    %51 = arith.maximumf %49, %50 : vector<64x22xf32>
    %c0_2 = arith.constant 0 : index
    %c0_3 = arith.constant 0 : index
    %52 = vector.load %arg2[%c0_2, %c0_3] : memref<80x64xf32, #tpu.memory_space<vmem>>, vector<40x64xf32>
    %53 = vector.extract_strided_slice %2 {offsets = [0, 0], sizes = [64, 22], strides = [1, 1]} : vector<64x23xf32> to vector<64x22xf32>
    %cst = arith.constant dense<0.000000e+00> : vector<40x22xf32>
    %54 = tpu.matmul %52, %53, %cst {dimension_numbers = #tpu.dot_dimension_numbers<[1], [0], [0], [1], [0, 0, 1, 1], [], []>} : vector<40x64xf32>, vector<64x22xf32>, vector<40x22xf32> -> vector<40x22xf32>
    %c40 = arith.constant 40 : index
    %c0_4 = arith.constant 0 : index
    %55 = vector.load %arg2[%c40, %c0_4] : memref<80x64xf32, #tpu.memory_space<vmem>>, vector<40x64xf32>
    %56 = vector.extract_strided_slice %2 {offsets = [0, 1], sizes = [64, 22], strides = [1, 1]} : vector<64x23xf32> to vector<64x22xf32>
    %cst_5 = arith.constant dense<0.000000e+00> : vector<40x22xf32>
    %57 = tpu.matmul %55, %56, %cst_5 {dimension_numbers = #tpu.dot_dimension_numbers<[1], [0], [0], [1], [0, 0, 1, 1], [], []>} : vector<40x64xf32>, vector<64x22xf32>, vector<40x22xf32> -> vector<40x22xf32>
    %58 = arith.addf %54, %57 : vector<40x22xf32>
    %c0_6 = arith.constant 0 : index
    %c0_7 = arith.constant 0 : index
    %59 = vector.load %arg3[%c0_6, %c0_7] : memref<40x1xf32, #tpu.memory_space<vmem>>, vector<40x1xf32>
    %60 = vector.broadcast %59 : vector<40x1xf32> to vector<40x22xf32>
    %61 = arith.addf %58, %60 : vector<40x22xf32>
    %cst_8 = arith.constant 0.000000e+00 : f32
    %62 = vector.broadcast %cst_8 : f32 to vector<40x22xf32>
    %63 = arith.maximumf %61, %62 : vector<40x22xf32>
    %c0_9 = arith.constant 0 : index
    %c0_10 = arith.constant 0 : index
    %64 = vector.load %arg4[%c0_9, %c0_10] : memref<24x104xf32, #tpu.memory_space<vmem>>, vector<12x40xf32>
    %65 = vector.extract_strided_slice %63 {offsets = [0, 0], sizes = [40, 21], strides = [1, 1]} : vector<40x22xf32> to vector<40x21xf32>
    %cst_11 = arith.constant dense<0.000000e+00> : vector<12x21xf32>
    %66 = tpu.matmul %64, %65, %cst_11 {dimension_numbers = #tpu.dot_dimension_numbers<[1], [0], [0], [1], [0, 0, 1, 1], [], []>} : vector<12x40xf32>, vector<40x21xf32>, vector<12x21xf32> -> vector<12x21xf32>
    %c0_12 = arith.constant 0 : index
    %c40_13 = arith.constant 40 : index
    %67 = vector.load %arg4[%c0_12, %c40_13] : memref<24x104xf32, #tpu.memory_space<vmem>>, vector<12x64xf32>
    %68 = vector.extract_strided_slice %51 {offsets = [0, 0], sizes = [64, 21], strides = [1, 1]} : vector<64x22xf32> to vector<64x21xf32>
    %cst_14 = arith.constant dense<0.000000e+00> : vector<12x21xf32>
    %69 = tpu.matmul %67, %68, %cst_14 {dimension_numbers = #tpu.dot_dimension_numbers<[1], [0], [0], [1], [0, 0, 1, 1], [], []>} : vector<12x64xf32>, vector<64x21xf32>, vector<12x21xf32> -> vector<12x21xf32>
    %70 = arith.addf %66, %69 : vector<12x21xf32>
    %c12 = arith.constant 12 : index
    %c0_15 = arith.constant 0 : index
    %71 = vector.load %arg4[%c12, %c0_15] : memref<24x104xf32, #tpu.memory_space<vmem>>, vector<12x40xf32>
    %72 = vector.extract_strided_slice %63 {offsets = [0, 1], sizes = [40, 21], strides = [1, 1]} : vector<40x22xf32> to vector<40x21xf32>
    %cst_16 = arith.constant dense<0.000000e+00> : vector<12x21xf32>
    %73 = tpu.matmul %71, %72, %cst_16 {dimension_numbers = #tpu.dot_dimension_numbers<[1], [0], [0], [1], [0, 0, 1, 1], [], []>} : vector<12x40xf32>, vector<40x21xf32>, vector<12x21xf32> -> vector<12x21xf32>
    %74 = arith.addf %70, %73 : vector<12x21xf32>
    %c12_17 = arith.constant 12 : index
    %c40_18 = arith.constant 40 : index
    %75 = vector.load %arg4[%c12_17, %c40_18] : memref<24x104xf32, #tpu.memory_space<vmem>>, vector<12x64xf32>
    %76 = vector.extract_strided_slice %51 {offsets = [0, 1], sizes = [64, 21], strides = [1, 1]} : vector<64x22xf32> to vector<64x21xf32>
    %cst_19 = arith.constant dense<0.000000e+00> : vector<12x21xf32>
    %77 = tpu.matmul %75, %76, %cst_19 {dimension_numbers = #tpu.dot_dimension_numbers<[1], [0], [0], [1], [0, 0, 1, 1], [], []>} : vector<12x64xf32>, vector<64x21xf32>, vector<12x21xf32> -> vector<12x21xf32>
    %78 = arith.addf %74, %77 : vector<12x21xf32>
    %c0_20 = arith.constant 0 : index
    %c0_21 = arith.constant 0 : index
    %79 = vector.load %arg5[%c0_20, %c0_21] : memref<12x1xf32, #tpu.memory_space<vmem>>, vector<12x1xf32>
    %80 = vector.broadcast %79 : vector<12x1xf32> to vector<12x21xf32>
    %81 = arith.addf %78, %80 : vector<12x21xf32>
    %cst_22 = arith.constant 0.000000e+00 : f32
    %82 = vector.broadcast %cst_22 : f32 to vector<12x21xf32>
    %83 = arith.maximumf %81, %82 : vector<12x21xf32>
    %c0_23 = arith.constant 0 : index
    %c0_24 = arith.constant 0 : index
    %c0_25 = arith.constant 0 : index
    %84 = vector.load %arg6[%c0_23, %c0_24, %c0_25] : memref<1x12x21xf32, #tpu.memory_space<vmem>>, vector<1x12x21xf32>
    %85 = vector.shape_cast %84 : vector<1x12x21xf32> to vector<12x21xf32>
    %86 = vector.shape_cast %83 : vector<12x21xf32> to vector<1x12x21xf32>
    tpu.vector_store %arg6[%c0_23, %c0_24, %c0_25], %86 {strides = array<i32>} : memref<1x12x21xf32, #tpu.memory_space<vmem>>, vector<1x12x21xf32>,
    return
  }
  func.func @transform_0(%arg0: i32) -> (i32, i32, i32) {
    %c0_i32 = arith.constant 0 : i32
    %c0_i32_0 = arith.constant 0 : i32
    %c0_i32_1 = arith.constant 0 : i32
    return %arg0, %c0_i32, %c0_i32_0 : i32, i32, i32
  }
  func.func @transform_1(%arg0: i32) -> (i32, i32) {
    %c0_i32 = arith.constant 0 : i32
    %c0_i32_0 = arith.constant 0 : i32
    %c0_i32_1 = arith.constant 0 : i32
    return %c0_i32, %c0_i32_0 : i32, i32
  }
  func.func @transform_2(%arg0: i32) -> (i32, i32) {
    %c0_i32 = arith.constant 0 : i32
    %c0_i32_0 = arith.constant 0 : i32
    %c0_i32_1 = arith.constant 0 : i32
    return %c0_i32, %c0_i32_0 : i32, i32
  }
  func.func @transform_3(%arg0: i32) -> (i32, i32) {
    %c0_i32 = arith.constant 0 : i32
    %c0_i32_0 = arith.constant 0 : i32
    %c0_i32_1 = arith.constant 0 : i32
    return %c0_i32, %c0_i32_0 : i32, i32
  }
  func.func @transform_4(%arg0: i32) -> (i32, i32) {
    %c0_i32 = arith.constant 0 : i32
    %c0_i32_0 = arith.constant 0 : i32
    %c0_i32_1 = arith.constant 0 : i32
    return %c0_i32, %c0_i32_0 : i32, i32
  }
  func.func @transform_5(%arg0: i32) -> (i32, i32, i32) {
    %c0_i32 = arith.constant 0 : i32
    %c0_i32_0 = arith.constant 0 : i32
    %c0_i32_1 = arith.constant 0 : i32
    return %arg0, %c0_i32, %c0_i32_0 : i32, i32, i32
  }
}

module attributes {stable_mosaic.version = 11 : i64} {
  func.func @_autoenc_kernel(%arg0: i32, %arg1: memref<1x32x23xf32, #tpu.memory_space<vmem>>, %arg2: memref<192x32xf32, #tpu.memory_space<vmem>>, %arg3: memref<64x1xf32, #tpu.memory_space<vmem>>, %arg4: memref<3x23x23xf32, #tpu.memory_space<vmem>>, %arg5: memref<21x11xf32, #tpu.memory_space<vmem>>, %arg6: memref<96x64xf32, #tpu.memory_space<vmem>>, %arg7: memref<32x1xf32, #tpu.memory_space<vmem>>, %arg8: memref<3x11x11xf32, #tpu.memory_space<vmem>>, %arg9: memref<9x5xf32, #tpu.memory_space<vmem>>, %arg10: memref<5x10xf32, #tpu.memory_space<vmem>>, %arg11: memref<192x32xf32, #tpu.memory_space<vmem>>, %arg12: memref<64x1xf32, #tpu.memory_space<vmem>>, %arg13: memref<3x10x12xf32, #tpu.memory_space<vmem>>, %arg14: memref<12x24xf32, #tpu.memory_space<vmem>>, %arg15: memref<96x64xf32, #tpu.memory_space<vmem>>, %arg16: memref<32x1xf32, #tpu.memory_space<vmem>>, %arg17: memref<3x24x26xf32, #tpu.memory_space<vmem>>, %arg18: memref<1x64x47xf32, #tpu.memory_space<vmem>>) attributes {dimension_semantics = [#tpu.dimension_semantics<parallel>], iteration_bounds = array<i64: 2>, scalar_prefetch = 0 : i64, scratch_operands = 0 : i64, tpu.core_type = #tpu.core_type<tc>, window_params = [{transform_indices = @transform_0, window_bounds = array<i64: 1, 32, 23>}, {pipeline_mode = #tpu.pipeline_mode<synchronous>, transform_indices = @transform_1, window_bounds = array<i64: 192, 32>}, {pipeline_mode = #tpu.pipeline_mode<synchronous>, transform_indices = @transform_2, window_bounds = array<i64: 64, 1>}, {pipeline_mode = #tpu.pipeline_mode<synchronous>, transform_indices = @transform_3, window_bounds = array<i64: 3, 23, 23>}, {pipeline_mode = #tpu.pipeline_mode<synchronous>, transform_indices = @transform_4, window_bounds = array<i64: 21, 11>}, {pipeline_mode = #tpu.pipeline_mode<synchronous>, transform_indices = @transform_5, window_bounds = array<i64: 96, 64>}, {pipeline_mode = #tpu.pipeline_mode<synchronous>, transform_indices = @transform_6, window_bounds = array<i64: 32, 1>}, {pipeline_mode = #tpu.pipeline_mode<synchronous>, transform_indices = @transform_7, window_bounds = array<i64: 3, 11, 11>}, {pipeline_mode = #tpu.pipeline_mode<synchronous>, transform_indices = @transform_8, window_bounds = array<i64: 9, 5>}, {pipeline_mode = #tpu.pipeline_mode<synchronous>, transform_indices = @transform_9, window_bounds = array<i64: 5, 10>}, {pipeline_mode = #tpu.pipeline_mode<synchronous>, transform_indices = @transform_10, window_bounds = array<i64: 192, 32>}, {pipeline_mode = #tpu.pipeline_mode<synchronous>, transform_indices = @transform_11, window_bounds = array<i64: 64, 1>}, {pipeline_mode = #tpu.pipeline_mode<synchronous>, transform_indices = @transform_12, window_bounds = array<i64: 3, 10, 12>}, {pipeline_mode = #tpu.pipeline_mode<synchronous>, transform_indices = @transform_13, window_bounds = array<i64: 12, 24>}, {pipeline_mode = #tpu.pipeline_mode<synchronous>, transform_indices = @transform_14, window_bounds = array<i64: 96, 64>}, {pipeline_mode = #tpu.pipeline_mode<synchronous>, transform_indices = @transform_15, window_bounds = array<i64: 32, 1>}, {pipeline_mode = #tpu.pipeline_mode<synchronous>, transform_indices = @transform_16, window_bounds = array<i64: 3, 24, 26>}, {transform_indices = @transform_17, window_bounds = array<i64: 1, 64, 47>}]} {
    %c0 = arith.constant 0 : index
    %c0_0 = arith.constant 0 : index
    %c0_1 = arith.constant 0 : index
    %0 = vector.load %arg1[%c0, %c0_0, %c0_1] : memref<1x32x23xf32, #tpu.memory_space<vmem>>, vector<1x32x23xf32>
    %1 = vector.shape_cast %0 : vector<1x32x23xf32> to vector<32x23xf32>
    %c0_2 = arith.constant 0 : index
    %c0_3 = arith.constant 0 : index
    %c0_4 = arith.constant 0 : index
    %2 = vector.load %arg4[%c0_2, %c0_3, %c0_4] : memref<3x23x23xf32, #tpu.memory_space<vmem>>, vector<1x23x23xf32>
    %3 = vector.shape_cast %2 : vector<1x23x23xf32> to vector<23x23xf32>
    %cst = arith.constant dense<0.000000e+00> : vector<32x23xf32>
    %4 = tpu.matmul %1, %3, %cst {dimension_numbers = #tpu.dot_dimension_numbers<[1], [0], [0], [1], [0, 0, 1, 1], [], []>} : vector<32x23xf32>, vector<23x23xf32>, vector<32x23xf32> -> vector<32x23xf32>
    %c0_5 = arith.constant 0 : index
    %c0_6 = arith.constant 0 : index
    %5 = vector.load %arg2[%c0_5, %c0_6] : memref<192x32xf32, #tpu.memory_space<vmem>>, vector<64x32xf32>
    %cst_7 = arith.constant dense<0.000000e+00> : vector<64x23xf32>
    %6 = tpu.matmul %5, %4, %cst_7 {dimension_numbers = #tpu.dot_dimension_numbers<[1], [0], [0], [1], [0, 0, 1, 1], [], []>} : vector<64x32xf32>, vector<32x23xf32>, vector<64x23xf32> -> vector<64x23xf32>
    %c1 = arith.constant 1 : index
    %c0_8 = arith.constant 0 : index
    %c0_9 = arith.constant 0 : index
    %7 = vector.load %arg4[%c1, %c0_8, %c0_9] : memref<3x23x23xf32, #tpu.memory_space<vmem>>, vector<1x23x23xf32>
    %8 = vector.shape_cast %7 : vector<1x23x23xf32> to vector<23x23xf32>
    %cst_10 = arith.constant dense<0.000000e+00> : vector<32x23xf32>
    %9 = tpu.matmul %1, %8, %cst_10 {dimension_numbers = #tpu.dot_dimension_numbers<[1], [0], [0], [1], [0, 0, 1, 1], [], []>} : vector<32x23xf32>, vector<23x23xf32>, vector<32x23xf32> -> vector<32x23xf32>
    %c64 = arith.constant 64 : index
    %c0_11 = arith.constant 0 : index
    %10 = vector.load %arg2[%c64, %c0_11] : memref<192x32xf32, #tpu.memory_space<vmem>>, vector<64x32xf32>
    %cst_12 = arith.constant dense<0.000000e+00> : vector<64x23xf32>
    %11 = tpu.matmul %10, %9, %cst_12 {dimension_numbers = #tpu.dot_dimension_numbers<[1], [0], [0], [1], [0, 0, 1, 1], [], []>} : vector<64x32xf32>, vector<32x23xf32>, vector<64x23xf32> -> vector<64x23xf32>
    %12 = arith.addf %6, %11 : vector<64x23xf32>
    %c2 = arith.constant 2 : index
    %c0_13 = arith.constant 0 : index
    %c0_14 = arith.constant 0 : index
    %13 = vector.load %arg4[%c2, %c0_13, %c0_14] : memref<3x23x23xf32, #tpu.memory_space<vmem>>, vector<1x23x23xf32>
    %14 = vector.shape_cast %13 : vector<1x23x23xf32> to vector<23x23xf32>
    %cst_15 = arith.constant dense<0.000000e+00> : vector<32x23xf32>
    %15 = tpu.matmul %1, %14, %cst_15 {dimension_numbers = #tpu.dot_dimension_numbers<[1], [0], [0], [1], [0, 0, 1, 1], [], []>} : vector<32x23xf32>, vector<23x23xf32>, vector<32x23xf32> -> vector<32x23xf32>
    %c128 = arith.constant 128 : index
    %c0_16 = arith.constant 0 : index
    %16 = vector.load %arg2[%c128, %c0_16] : memref<192x32xf32, #tpu.memory_space<vmem>>, vector<64x32xf32>
    %cst_17 = arith.constant dense<0.000000e+00> : vector<64x23xf32>
    %17 = tpu.matmul %16, %15, %cst_17 {dimension_numbers = #tpu.dot_dimension_numbers<[1], [0], [0], [1], [0, 0, 1, 1], [], []>} : vector<64x32xf32>, vector<32x23xf32>, vector<64x23xf32> -> vector<64x23xf32>
    %18 = arith.addf %12, %17 : vector<64x23xf32>
    %c0_18 = arith.constant 0 : index
    %c0_19 = arith.constant 0 : index
    %19 = vector.load %arg3[%c0_18, %c0_19] : memref<64x1xf32, #tpu.memory_space<vmem>>, vector<64x1xf32>
    %20 = vector.broadcast %19 : vector<64x1xf32> to vector<64x23xf32>
    %21 = arith.addf %18, %20 : vector<64x23xf32>
    %22 = math.tanh %21 : vector<64x23xf32>
    %23 = vector.extract_strided_slice %22 {offsets = [0, 0], sizes = [64, 21], strides = [1, 1]} : vector<64x23xf32> to vector<64x21xf32>
    %24 = vector.extract_strided_slice %22 {offsets = [0, 1], sizes = [64, 21], strides = [1, 1]} : vector<64x23xf32> to vector<64x21xf32>
    %25 = arith.maximumf %23, %24 : vector<64x21xf32>
    %26 = vector.extract_strided_slice %22 {offsets = [0, 2], sizes = [64, 21], strides = [1, 1]} : vector<64x23xf32> to vector<64x21xf32>
    %27 = arith.maximumf %25, %26 : vector<64x21xf32>
    %c0_20 = arith.constant 0 : index
    %c0_21 = arith.constant 0 : index
    %28 = vector.load %arg5[%c0_20, %c0_21] : memref<21x11xf32, #tpu.memory_space<vmem>>, vector<21x11xf32>
    %cst_22 = arith.constant dense<0.000000e+00> : vector<64x11xf32>
    %29 = tpu.matmul %27, %28, %cst_22 {dimension_numbers = #tpu.dot_dimension_numbers<[1], [0], [0], [1], [0, 0, 1, 1], [], []>} : vector<64x21xf32>, vector<21x11xf32>, vector<64x11xf32> -> vector<64x11xf32>
    %c0_23 = arith.constant 0 : index
    %c0_24 = arith.constant 0 : index
    %c0_25 = arith.constant 0 : index
    %30 = vector.load %arg8[%c0_23, %c0_24, %c0_25] : memref<3x11x11xf32, #tpu.memory_space<vmem>>, vector<1x11x11xf32>
    %31 = vector.shape_cast %30 : vector<1x11x11xf32> to vector<11x11xf32>
    %cst_26 = arith.constant dense<0.000000e+00> : vector<64x11xf32>
    %32 = tpu.matmul %29, %31, %cst_26 {dimension_numbers = #tpu.dot_dimension_numbers<[1], [0], [0], [1], [0, 0, 1, 1], [], []>} : vector<64x11xf32>, vector<11x11xf32>, vector<64x11xf32> -> vector<64x11xf32>
    %c0_27 = arith.constant 0 : index
    %c0_28 = arith.constant 0 : index
    %33 = vector.load %arg6[%c0_27, %c0_28] : memref<96x64xf32, #tpu.memory_space<vmem>>, vector<32x64xf32>
    %cst_29 = arith.constant dense<0.000000e+00> : vector<32x11xf32>
    %34 = tpu.matmul %33, %32, %cst_29 {dimension_numbers = #tpu.dot_dimension_numbers<[1], [0], [0], [1], [0, 0, 1, 1], [], []>} : vector<32x64xf32>, vector<64x11xf32>, vector<32x11xf32> -> vector<32x11xf32>
    %c1_30 = arith.constant 1 : index
    %c0_31 = arith.constant 0 : index
    %c0_32 = arith.constant 0 : index
    %35 = vector.load %arg8[%c1_30, %c0_31, %c0_32] : memref<3x11x11xf32, #tpu.memory_space<vmem>>, vector<1x11x11xf32>
    %36 = vector.shape_cast %35 : vector<1x11x11xf32> to vector<11x11xf32>
    %cst_33 = arith.constant dense<0.000000e+00> : vector<64x11xf32>
    %37 = tpu.matmul %29, %36, %cst_33 {dimension_numbers = #tpu.dot_dimension_numbers<[1], [0], [0], [1], [0, 0, 1, 1], [], []>} : vector<64x11xf32>, vector<11x11xf32>, vector<64x11xf32> -> vector<64x11xf32>
    %c32 = arith.constant 32 : index
    %c0_34 = arith.constant 0 : index
    %38 = vector.load %arg6[%c32, %c0_34] : memref<96x64xf32, #tpu.memory_space<vmem>>, vector<32x64xf32>
    %cst_35 = arith.constant dense<0.000000e+00> : vector<32x11xf32>
    %39 = tpu.matmul %38, %37, %cst_35 {dimension_numbers = #tpu.dot_dimension_numbers<[1], [0], [0], [1], [0, 0, 1, 1], [], []>} : vector<32x64xf32>, vector<64x11xf32>, vector<32x11xf32> -> vector<32x11xf32>
    %40 = arith.addf %34, %39 : vector<32x11xf32>
    %c2_36 = arith.constant 2 : index
    %c0_37 = arith.constant 0 : index
    %c0_38 = arith.constant 0 : index
    %41 = vector.load %arg8[%c2_36, %c0_37, %c0_38] : memref<3x11x11xf32, #tpu.memory_space<vmem>>, vector<1x11x11xf32>
    %42 = vector.shape_cast %41 : vector<1x11x11xf32> to vector<11x11xf32>
    %cst_39 = arith.constant dense<0.000000e+00> : vector<64x11xf32>
    %43 = tpu.matmul %29, %42, %cst_39 {dimension_numbers = #tpu.dot_dimension_numbers<[1], [0], [0], [1], [0, 0, 1, 1], [], []>} : vector<64x11xf32>, vector<11x11xf32>, vector<64x11xf32> -> vector<64x11xf32>
    %c64_40 = arith.constant 64 : index
    %c0_41 = arith.constant 0 : index
    %44 = vector.load %arg6[%c64_40, %c0_41] : memref<96x64xf32, #tpu.memory_space<vmem>>, vector<32x64xf32>
    %cst_42 = arith.constant dense<0.000000e+00> : vector<32x11xf32>
    %45 = tpu.matmul %44, %43, %cst_42 {dimension_numbers = #tpu.dot_dimension_numbers<[1], [0], [0], [1], [0, 0, 1, 1], [], []>} : vector<32x64xf32>, vector<64x11xf32>, vector<32x11xf32> -> vector<32x11xf32>
    %46 = arith.addf %40, %45 : vector<32x11xf32>
    %c0_43 = arith.constant 0 : index
    %c0_44 = arith.constant 0 : index
    %47 = vector.load %arg7[%c0_43, %c0_44] : memref<32x1xf32, #tpu.memory_space<vmem>>, vector<32x1xf32>
    %48 = vector.broadcast %47 : vector<32x1xf32> to vector<32x11xf32>
    %49 = arith.addf %46, %48 : vector<32x11xf32>
    %cst_45 = arith.constant 0.000000e+00 : f32
    %50 = vector.broadcast %cst_45 : f32 to vector<32x11xf32>
    %51 = arith.maximumf %49, %50 : vector<32x11xf32>
    %52 = vector.extract_strided_slice %51 {offsets = [0, 0], sizes = [32, 9], strides = [1, 1]} : vector<32x11xf32> to vector<32x9xf32>
    %53 = vector.extract_strided_slice %51 {offsets = [0, 1], sizes = [32, 9], strides = [1, 1]} : vector<32x11xf32> to vector<32x9xf32>
    %54 = arith.maximumf %52, %53 : vector<32x9xf32>
    %55 = vector.extract_strided_slice %51 {offsets = [0, 2], sizes = [32, 9], strides = [1, 1]} : vector<32x11xf32> to vector<32x9xf32>
    %56 = arith.maximumf %54, %55 : vector<32x9xf32>
    %c0_46 = arith.constant 0 : index
    %c0_47 = arith.constant 0 : index
    %57 = vector.load %arg9[%c0_46, %c0_47] : memref<9x5xf32, #tpu.memory_space<vmem>>, vector<9x5xf32>
    %cst_48 = arith.constant dense<0.000000e+00> : vector<32x5xf32>
    %58 = tpu.matmul %56, %57, %cst_48 {dimension_numbers = #tpu.dot_dimension_numbers<[1], [0], [0], [1], [0, 0, 1, 1], [], []>} : vector<32x9xf32>, vector<9x5xf32>, vector<32x5xf32> -> vector<32x5xf32>
    %c0_49 = arith.constant 0 : index
    %c0_50 = arith.constant 0 : index
    %59 = vector.load %arg10[%c0_49, %c0_50] : memref<5x10xf32, #tpu.memory_space<vmem>>, vector<5x10xf32>
    %cst_51 = arith.constant dense<0.000000e+00> : vector<32x10xf32>
    %60 = tpu.matmul %58, %59, %cst_51 {dimension_numbers = #tpu.dot_dimension_numbers<[1], [0], [0], [1], [0, 0, 1, 1], [], []>} : vector<32x5xf32>, vector<5x10xf32>, vector<32x10xf32> -> vector<32x10xf32>
    %c0_52 = arith.constant 0 : index
    %c0_53 = arith.constant 0 : index
    %c0_54 = arith.constant 0 : index
    %61 = vector.load %arg13[%c0_52, %c0_53, %c0_54] : memref<3x10x12xf32, #tpu.memory_space<vmem>>, vector<1x10x12xf32>
    %62 = vector.shape_cast %61 : vector<1x10x12xf32> to vector<10x12xf32>
    %cst_55 = arith.constant dense<0.000000e+00> : vector<32x12xf32>
    %63 = tpu.matmul %60, %62, %cst_55 {dimension_numbers = #tpu.dot_dimension_numbers<[1], [0], [0], [1], [0, 0, 1, 1], [], []>} : vector<32x10xf32>, vector<10x12xf32>, vector<32x12xf32> -> vector<32x12xf32>
    %c0_56 = arith.constant 0 : index
    %c0_57 = arith.constant 0 : index
    %64 = vector.load %arg11[%c0_56, %c0_57] : memref<192x32xf32, #tpu.memory_space<vmem>>, vector<64x32xf32>
    %cst_58 = arith.constant dense<0.000000e+00> : vector<64x12xf32>
    %65 = tpu.matmul %64, %63, %cst_58 {dimension_numbers = #tpu.dot_dimension_numbers<[1], [0], [0], [1], [0, 0, 1, 1], [], []>} : vector<64x32xf32>, vector<32x12xf32>, vector<64x12xf32> -> vector<64x12xf32>
    %c1_59 = arith.constant 1 : index
    %c0_60 = arith.constant 0 : index
    %c0_61 = arith.constant 0 : index
    %66 = vector.load %arg13[%c1_59, %c0_60, %c0_61] : memref<3x10x12xf32, #tpu.memory_space<vmem>>, vector<1x10x12xf32>
    %67 = vector.shape_cast %66 : vector<1x10x12xf32> to vector<10x12xf32>
    %cst_62 = arith.constant dense<0.000000e+00> : vector<32x12xf32>
    %68 = tpu.matmul %60, %67, %cst_62 {dimension_numbers = #tpu.dot_dimension_numbers<[1], [0], [0], [1], [0, 0, 1, 1], [], []>} : vector<32x10xf32>, vector<10x12xf32>, vector<32x12xf32> -> vector<32x12xf32>
    %c64_63 = arith.constant 64 : index
    %c0_64 = arith.constant 0 : index
    %69 = vector.load %arg11[%c64_63, %c0_64] : memref<192x32xf32, #tpu.memory_space<vmem>>, vector<64x32xf32>
    %cst_65 = arith.constant dense<0.000000e+00> : vector<64x12xf32>
    %70 = tpu.matmul %69, %68, %cst_65 {dimension_numbers = #tpu.dot_dimension_numbers<[1], [0], [0], [1], [0, 0, 1, 1], [], []>} : vector<64x32xf32>, vector<32x12xf32>, vector<64x12xf32> -> vector<64x12xf32>
    %71 = arith.addf %65, %70 : vector<64x12xf32>
    %c2_66 = arith.constant 2 : index
    %c0_67 = arith.constant 0 : index
    %c0_68 = arith.constant 0 : index
    %72 = vector.load %arg13[%c2_66, %c0_67, %c0_68] : memref<3x10x12xf32, #tpu.memory_space<vmem>>, vector<1x10x12xf32>
    %73 = vector.shape_cast %72 : vector<1x10x12xf32> to vector<10x12xf32>
    %cst_69 = arith.constant dense<0.000000e+00> : vector<32x12xf32>
    %74 = tpu.matmul %60, %73, %cst_69 {dimension_numbers = #tpu.dot_dimension_numbers<[1], [0], [0], [1], [0, 0, 1, 1], [], []>} : vector<32x10xf32>, vector<10x12xf32>, vector<32x12xf32> -> vector<32x12xf32>
    %c128_70 = arith.constant 128 : index
    %c0_71 = arith.constant 0 : index
    %75 = vector.load %arg11[%c128_70, %c0_71] : memref<192x32xf32, #tpu.memory_space<vmem>>, vector<64x32xf32>
    %cst_72 = arith.constant dense<0.000000e+00> : vector<64x12xf32>
    %76 = tpu.matmul %75, %74, %cst_72 {dimension_numbers = #tpu.dot_dimension_numbers<[1], [0], [0], [1], [0, 0, 1, 1], [], []>} : vector<64x32xf32>, vector<32x12xf32>, vector<64x12xf32> -> vector<64x12xf32>
    %77 = arith.addf %71, %76 : vector<64x12xf32>
    %c0_73 = arith.constant 0 : index
    %c0_74 = arith.constant 0 : index
    %78 = vector.load %arg12[%c0_73, %c0_74] : memref<64x1xf32, #tpu.memory_space<vmem>>, vector<64x1xf32>
    %79 = vector.broadcast %78 : vector<64x1xf32> to vector<64x12xf32>
    %80 = arith.addf %77, %79 : vector<64x12xf32>
    %81 = math.tanh %80 : vector<64x12xf32>
    %c0_75 = arith.constant 0 : index
    %c0_76 = arith.constant 0 : index
    %82 = vector.load %arg14[%c0_75, %c0_76] : memref<12x24xf32, #tpu.memory_space<vmem>>, vector<12x24xf32>
    %cst_77 = arith.constant dense<0.000000e+00> : vector<64x24xf32>
    %83 = tpu.matmul %81, %82, %cst_77 {dimension_numbers = #tpu.dot_dimension_numbers<[1], [0], [0], [1], [0, 0, 1, 1], [], []>} : vector<64x12xf32>, vector<12x24xf32>, vector<64x24xf32> -> vector<64x24xf32>
    %c0_78 = arith.constant 0 : index
    %c0_79 = arith.constant 0 : index
    %c0_80 = arith.constant 0 : index
    %84 = vector.load %arg17[%c0_78, %c0_79, %c0_80] : memref<3x24x26xf32, #tpu.memory_space<vmem>>, vector<1x24x26xf32>
    %85 = vector.shape_cast %84 : vector<1x24x26xf32> to vector<24x26xf32>
    %cst_81 = arith.constant dense<0.000000e+00> : vector<64x26xf32>
    %86 = tpu.matmul %83, %85, %cst_81 {dimension_numbers = #tpu.dot_dimension_numbers<[1], [0], [0], [1], [0, 0, 1, 1], [], []>} : vector<64x24xf32>, vector<24x26xf32>, vector<64x26xf32> -> vector<64x26xf32>
    %c0_82 = arith.constant 0 : index
    %c0_83 = arith.constant 0 : index
    %87 = vector.load %arg15[%c0_82, %c0_83] : memref<96x64xf32, #tpu.memory_space<vmem>>, vector<32x64xf32>
    %cst_84 = arith.constant dense<0.000000e+00> : vector<32x26xf32>
    %88 = tpu.matmul %87, %86, %cst_84 {dimension_numbers = #tpu.dot_dimension_numbers<[1], [0], [0], [1], [0, 0, 1, 1], [], []>} : vector<32x64xf32>, vector<64x26xf32>, vector<32x26xf32> -> vector<32x26xf32>
    %c1_85 = arith.constant 1 : index
    %c0_86 = arith.constant 0 : index
    %c0_87 = arith.constant 0 : index
    %89 = vector.load %arg17[%c1_85, %c0_86, %c0_87] : memref<3x24x26xf32, #tpu.memory_space<vmem>>, vector<1x24x26xf32>
    %90 = vector.shape_cast %89 : vector<1x24x26xf32> to vector<24x26xf32>
    %cst_88 = arith.constant dense<0.000000e+00> : vector<64x26xf32>
    %91 = tpu.matmul %83, %90, %cst_88 {dimension_numbers = #tpu.dot_dimension_numbers<[1], [0], [0], [1], [0, 0, 1, 1], [], []>} : vector<64x24xf32>, vector<24x26xf32>, vector<64x26xf32> -> vector<64x26xf32>
    %c32_89 = arith.constant 32 : index
    %c0_90 = arith.constant 0 : index
    %92 = vector.load %arg15[%c32_89, %c0_90] : memref<96x64xf32, #tpu.memory_space<vmem>>, vector<32x64xf32>
    %cst_91 = arith.constant dense<0.000000e+00> : vector<32x26xf32>
    %93 = tpu.matmul %92, %91, %cst_91 {dimension_numbers = #tpu.dot_dimension_numbers<[1], [0], [0], [1], [0, 0, 1, 1], [], []>} : vector<32x64xf32>, vector<64x26xf32>, vector<32x26xf32> -> vector<32x26xf32>
    %94 = arith.addf %88, %93 : vector<32x26xf32>
    %c2_92 = arith.constant 2 : index
    %c0_93 = arith.constant 0 : index
    %c0_94 = arith.constant 0 : index
    %95 = vector.load %arg17[%c2_92, %c0_93, %c0_94] : memref<3x24x26xf32, #tpu.memory_space<vmem>>, vector<1x24x26xf32>
    %96 = vector.shape_cast %95 : vector<1x24x26xf32> to vector<24x26xf32>
    %cst_95 = arith.constant dense<0.000000e+00> : vector<64x26xf32>
    %97 = tpu.matmul %83, %96, %cst_95 {dimension_numbers = #tpu.dot_dimension_numbers<[1], [0], [0], [1], [0, 0, 1, 1], [], []>} : vector<64x24xf32>, vector<24x26xf32>, vector<64x26xf32> -> vector<64x26xf32>
    %c64_96 = arith.constant 64 : index
    %c0_97 = arith.constant 0 : index
    %98 = vector.load %arg15[%c64_96, %c0_97] : memref<96x64xf32, #tpu.memory_space<vmem>>, vector<32x64xf32>
    %cst_98 = arith.constant dense<0.000000e+00> : vector<32x26xf32>
    %99 = tpu.matmul %98, %97, %cst_98 {dimension_numbers = #tpu.dot_dimension_numbers<[1], [0], [0], [1], [0, 0, 1, 1], [], []>} : vector<32x64xf32>, vector<64x26xf32>, vector<32x26xf32> -> vector<32x26xf32>
    %100 = arith.addf %94, %99 : vector<32x26xf32>
    %c0_99 = arith.constant 0 : index
    %c0_100 = arith.constant 0 : index
    %101 = vector.load %arg16[%c0_99, %c0_100] : memref<32x1xf32, #tpu.memory_space<vmem>>, vector<32x1xf32>
    %102 = vector.broadcast %101 : vector<32x1xf32> to vector<32x26xf32>
    %103 = arith.addf %100, %102 : vector<32x26xf32>
    %104 = arith.negf %103 : vector<32x26xf32>
    %105 = math.exp %104 : vector<32x26xf32>
    %cst_101 = arith.constant 1.000000e+00 : f32
    %106 = vector.broadcast %cst_101 : f32 to vector<32x26xf32>
    %107 = arith.addf %106, %105 : vector<32x26xf32>
    %108 = arith.divf %106, %107 : vector<32x26xf32>
    %109 = vector.extract_strided_slice %108 {offsets = [0, 0], sizes = [32, 23], strides = [1, 1]} : vector<32x26xf32> to vector<32x23xf32>
    %110 = vector.extract_strided_slice %108 {offsets = [0, 1], sizes = [32, 23], strides = [1, 1]} : vector<32x26xf32> to vector<32x23xf32>
    %111 = arith.maximumf %109, %110 : vector<32x23xf32>
    %112 = vector.extract_strided_slice %108 {offsets = [0, 2], sizes = [32, 23], strides = [1, 1]} : vector<32x26xf32> to vector<32x23xf32>
    %113 = arith.maximumf %111, %112 : vector<32x23xf32>
    %114 = vector.extract_strided_slice %108 {offsets = [0, 3], sizes = [32, 23], strides = [1, 1]} : vector<32x26xf32> to vector<32x23xf32>
    %115 = arith.maximumf %113, %114 : vector<32x23xf32>
    %116 = arith.mulf %115, %1 : vector<32x23xf32>
    %117 = tpu.iota {dimensions = array<i32: 1>} : vector<32x23xi32>
    %c0_i32 = arith.constant 0 : i32
    %118 = vector.broadcast %c0_i32 : i32 to vector<32x23xi32>
    %119 = arith.cmpi sge, %117, %118 : vector<32x23xi32>
    %c11_i32 = arith.constant 11 : i32
    %120 = vector.broadcast %c11_i32 : i32 to vector<32x23xi32>
    %121 = arith.cmpi slt, %117, %120 : vector<32x23xi32>
    %122 = arith.andi %119, %121 : vector<32x23xi1>
    %cst_102 = arith.constant 0.000000e+00 : f32
    %123 = vector.broadcast %cst_102 : f32 to vector<32x23xf32>
    %124 = arith.select %122, %116, %123 : vector<32x23xi1>, vector<32x23xf32>
    %c0_103 = arith.constant 0 : index
    %c0_104 = arith.constant 0 : index
    %c0_105 = arith.constant 0 : index
    %125 = vector.load %arg18[%c0_103, %c0_104, %c0_105] : memref<1x64x47xf32, #tpu.memory_space<vmem>>, vector<1x32x23xf32>
    %126 = vector.shape_cast %125 : vector<1x32x23xf32> to vector<32x23xf32>
    %127 = vector.shape_cast %124 : vector<32x23xf32> to vector<1x32x23xf32>
    tpu.vector_store %arg18[%c0_103, %c0_104, %c0_105], %127 {strides = array<i32>} : memref<1x64x47xf32, #tpu.memory_space<vmem>>, vector<1x32x23xf32>,
    %c11_i32_106 = arith.constant 11 : i32
    %128 = vector.broadcast %c11_i32_106 : i32 to vector<32x23xi32>
    %129 = arith.cmpi sge, %117, %128 : vector<32x23xi32>
    %c23_i32 = arith.constant 23 : i32
    %130 = vector.broadcast %c23_i32 : i32 to vector<32x23xi32>
    %131 = arith.cmpi slt, %117, %130 : vector<32x23xi32>
    %132 = arith.andi %129, %131 : vector<32x23xi1>
    %cst_107 = arith.constant 0.000000e+00 : f32
    %133 = vector.broadcast %cst_107 : f32 to vector<32x23xf32>
    %134 = arith.select %132, %116, %133 : vector<32x23xi1>, vector<32x23xf32>
    %c0_108 = arith.constant 0 : index
    %c32_109 = arith.constant 32 : index
    %c0_110 = arith.constant 0 : index
    %135 = vector.load %arg18[%c0_108, %c32_109, %c0_110] : memref<1x64x47xf32, #tpu.memory_space<vmem>>, vector<1x32x23xf32>
    %136 = vector.shape_cast %135 : vector<1x32x23xf32> to vector<32x23xf32>
    %137 = vector.shape_cast %134 : vector<32x23xf32> to vector<1x32x23xf32>
    tpu.vector_store %arg18[%c0_108, %c32_109, %c0_110], %137 {strides = array<i32>} : memref<1x64x47xf32, #tpu.memory_space<vmem>>, vector<1x32x23xf32>,
    %cst_111 = arith.constant -1.000000e+30 : f32
    %138 = vector.broadcast %cst_111 : f32 to vector<64x24xf32>
    %c0_112 = arith.constant 0 : index
    %c0_113 = arith.constant 0 : index
    %c23 = arith.constant 23 : index
    %139 = vector.load %arg18[%c0_112, %c0_113, %c23] : memref<1x64x47xf32, #tpu.memory_space<vmem>>, vector<1x64x24xf32>
    %140 = vector.shape_cast %139 : vector<1x64x24xf32> to vector<64x24xf32>
    %141 = vector.shape_cast %138 : vector<64x24xf32> to vector<1x64x24xf32>
    tpu.vector_store %arg18[%c0_112, %c0_113, %c23], %141 {strides = array<i32>} : memref<1x64x47xf32, #tpu.memory_space<vmem>>, vector<1x64x24xf32>,
    return
  }
  func.func @transform_0(%arg0: i32) -> (i32, i32, i32) {
    %c0_i32 = arith.constant 0 : i32
    %c0_i32_0 = arith.constant 0 : i32
    %c0_i32_1 = arith.constant 0 : i32
    return %arg0, %c0_i32, %c0_i32_0 : i32, i32, i32
  }
  func.func @transform_1(%arg0: i32) -> (i32, i32) {
    %c0_i32 = arith.constant 0 : i32
    %c0_i32_0 = arith.constant 0 : i32
    %c0_i32_1 = arith.constant 0 : i32
    return %c0_i32, %c0_i32_0 : i32, i32
  }
  func.func @transform_2(%arg0: i32) -> (i32, i32) {
    %c0_i32 = arith.constant 0 : i32
    %c0_i32_0 = arith.constant 0 : i32
    %c0_i32_1 = arith.constant 0 : i32
    return %c0_i32, %c0_i32_0 : i32, i32
  }
  func.func @transform_3(%arg0: i32) -> (i32, i32, i32) {
    %c0_i32 = arith.constant 0 : i32
    %c0_i32_0 = arith.constant 0 : i32
    %c0_i32_1 = arith.constant 0 : i32
    %c0_i32_2 = arith.constant 0 : i32
    return %c0_i32, %c0_i32_0, %c0_i32_1 : i32, i32, i32
  }
  func.func @transform_4(%arg0: i32) -> (i32, i32) {
    %c0_i32 = arith.constant 0 : i32
    %c0_i32_0 = arith.constant 0 : i32
    %c0_i32_1 = arith.constant 0 : i32
    return %c0_i32, %c0_i32_0 : i32, i32
  }
  func.func @transform_5(%arg0: i32) -> (i32, i32) {
    %c0_i32 = arith.constant 0 : i32
    %c0_i32_0 = arith.constant 0 : i32
    %c0_i32_1 = arith.constant 0 : i32
    return %c0_i32, %c0_i32_0 : i32, i32
  }
  func.func @transform_6(%arg0: i32) -> (i32, i32) {
    %c0_i32 = arith.constant 0 : i32
    %c0_i32_0 = arith.constant 0 : i32
    %c0_i32_1 = arith.constant 0 : i32
    return %c0_i32, %c0_i32_0 : i32, i32
  }
  func.func @transform_7(%arg0: i32) -> (i32, i32, i32) {
    %c0_i32 = arith.constant 0 : i32
    %c0_i32_0 = arith.constant 0 : i32
    %c0_i32_1 = arith.constant 0 : i32
    %c0_i32_2 = arith.constant 0 : i32
    return %c0_i32, %c0_i32_0, %c0_i32_1 : i32, i32, i32
  }
  func.func @transform_8(%arg0: i32) -> (i32, i32) {
    %c0_i32 = arith.constant 0 : i32
    %c0_i32_0 = arith.constant 0 : i32
    %c0_i32_1 = arith.constant 0 : i32
    return %c0_i32, %c0_i32_0 : i32, i32
  }
  func.func @transform_9(%arg0: i32) -> (i32, i32) {
    %c0_i32 = arith.constant 0 : i32
    %c0_i32_0 = arith.constant 0 : i32
    %c0_i32_1 = arith.constant 0 : i32
    return %c0_i32, %c0_i32_0 : i32, i32
  }
  func.func @transform_10(%arg0: i32) -> (i32, i32) {
    %c0_i32 = arith.constant 0 : i32
    %c0_i32_0 = arith.constant 0 : i32
    %c0_i32_1 = arith.constant 0 : i32
    return %c0_i32, %c0_i32_0 : i32, i32
  }
  func.func @transform_11(%arg0: i32) -> (i32, i32) {
    %c0_i32 = arith.constant 0 : i32
    %c0_i32_0 = arith.constant 0 : i32
    %c0_i32_1 = arith.constant 0 : i32
    return %c0_i32, %c0_i32_0 : i32, i32
  }
  func.func @transform_12(%arg0: i32) -> (i32, i32, i32) {
    %c0_i32 = arith.constant 0 : i32
    %c0_i32_0 = arith.constant 0 : i32
    %c0_i32_1 = arith.constant 0 : i32
    %c0_i32_2 = arith.constant 0 : i32
    return %c0_i32, %c0_i32_0, %c0_i32_1 : i32, i32, i32
  }
  func.func @transform_13(%arg0: i32) -> (i32, i32) {
    %c0_i32 = arith.constant 0 : i32
    %c0_i32_0 = arith.constant 0 : i32
    %c0_i32_1 = arith.constant 0 : i32
    return %c0_i32, %c0_i32_0 : i32, i32
  }
  func.func @transform_14(%arg0: i32) -> (i32, i32) {
    %c0_i32 = arith.constant 0 : i32
    %c0_i32_0 = arith.constant 0 : i32
    %c0_i32_1 = arith.constant 0 : i32
    return %c0_i32, %c0_i32_0 : i32, i32
  }
  func.func @transform_15(%arg0: i32) -> (i32, i32) {
    %c0_i32 = arith.constant 0 : i32
    %c0_i32_0 = arith.constant 0 : i32
    %c0_i32_1 = arith.constant 0 : i32
    return %c0_i32, %c0_i32_0 : i32, i32
  }
  func.func @transform_16(%arg0: i32) -> (i32, i32, i32) {
    %c0_i32 = arith.constant 0 : i32
    %c0_i32_0 = arith.constant 0 : i32
    %c0_i32_1 = arith.constant 0 : i32
    %c0_i32_2 = arith.constant 0 : i32
    return %c0_i32, %c0_i32_0, %c0_i32_1 : i32, i32, i32
  }
  func.func @transform_17(%arg0: i32) -> (i32, i32, i32) {
    %c0_i32 = arith.constant 0 : i32
    %c0_i32_0 = arith.constant 0 : i32
    %c0_i32_1 = arith.constant 0 : i32
    return %arg0, %c0_i32, %c0_i32_0 : i32, i32, i32
  }
}

module attributes {stable_mosaic.version = 11 : i64} {
  func.func @_classifier_kernel(%arg0: memref<24x21xf32, #tpu.memory_space<vmem>>, %arg1: memref<21x1024xbf16, #tpu.memory_space<vmem>>, %arg2: memref<1x1024xf32, #tpu.memory_space<vmem>>, %arg3: memref<1024x256xbf16, #tpu.memory_space<vmem>>, %arg4: memref<1x256xf32, #tpu.memory_space<vmem>>, %arg5: memref<256x10xbf16, #tpu.memory_space<vmem>>, %arg6: memref<1x10xf32, #tpu.memory_space<vmem>>, %arg7: memref<24x10xf32, #tpu.memory_space<vmem>>) attributes {dimension_semantics = [], scalar_prefetch = 0 : i64, scratch_operands = 0 : i64, tpu.core_type = #tpu.core_type<tc>} {
    %c0 = arith.constant 0 : index
    %c0_0 = arith.constant 0 : index
    %0 = vector.load %arg0[%c0, %c0_0] : memref<24x21xf32, #tpu.memory_space<vmem>>, vector<24x21xf32>
    %1 = arith.truncf %0 : vector<24x21xf32> to vector<24x21xbf16>
    %c0_1 = arith.constant 0 : index
    %c0_2 = arith.constant 0 : index
    %2 = vector.load %arg1[%c0_1, %c0_2] : memref<21x1024xbf16, #tpu.memory_space<vmem>>, vector<21x1024xbf16>
    %cst = arith.constant dense<0.000000e+00> : vector<24x1024xf32>
    %3 = tpu.matmul %1, %2, %cst {dimension_numbers = #tpu.dot_dimension_numbers<[1], [0], [0], [1], [0, 0, 1, 1], [], []>} : vector<24x21xbf16>, vector<21x1024xbf16>, vector<24x1024xf32> -> vector<24x1024xf32>
    %c0_3 = arith.constant 0 : index
    %c0_4 = arith.constant 0 : index
    %4 = vector.load %arg2[%c0_3, %c0_4] : memref<1x1024xf32, #tpu.memory_space<vmem>>, vector<1x1024xf32>
    %5 = vector.broadcast %4 : vector<1x1024xf32> to vector<24x1024xf32>
    %6 = arith.addf %3, %5 : vector<24x1024xf32>
    %cst_5 = arith.constant 0.000000e+00 : f32
    %7 = vector.broadcast %cst_5 : f32 to vector<24x1024xf32>
    %8 = arith.maximumf %6, %7 : vector<24x1024xf32>
    %9 = arith.truncf %8 : vector<24x1024xf32> to vector<24x1024xbf16>
    %c0_6 = arith.constant 0 : index
    %c0_7 = arith.constant 0 : index
    %10 = vector.load %arg3[%c0_6, %c0_7] : memref<1024x256xbf16, #tpu.memory_space<vmem>>, vector<1024x256xbf16>
    %cst_8 = arith.constant dense<0.000000e+00> : vector<24x256xf32>
    %11 = tpu.matmul %9, %10, %cst_8 {dimension_numbers = #tpu.dot_dimension_numbers<[1], [0], [0], [1], [0, 0, 1, 1], [], []>} : vector<24x1024xbf16>, vector<1024x256xbf16>, vector<24x256xf32> -> vector<24x256xf32>
    %c0_9 = arith.constant 0 : index
    %c0_10 = arith.constant 0 : index
    %12 = vector.load %arg4[%c0_9, %c0_10] : memref<1x256xf32, #tpu.memory_space<vmem>>, vector<1x256xf32>
    %13 = vector.broadcast %12 : vector<1x256xf32> to vector<24x256xf32>
    %14 = arith.addf %11, %13 : vector<24x256xf32>
    %cst_11 = arith.constant 0.000000e+00 : f32
    %15 = vector.broadcast %cst_11 : f32 to vector<24x256xf32>
    %16 = arith.maximumf %14, %15 : vector<24x256xf32>
    %17 = arith.truncf %16 : vector<24x256xf32> to vector<24x256xbf16>
    %c0_12 = arith.constant 0 : index
    %c0_13 = arith.constant 0 : index
    %18 = vector.load %arg5[%c0_12, %c0_13] : memref<256x10xbf16, #tpu.memory_space<vmem>>, vector<256x10xbf16>
    %cst_14 = arith.constant dense<0.000000e+00> : vector<24x10xf32>
    %19 = tpu.matmul %17, %18, %cst_14 {dimension_numbers = #tpu.dot_dimension_numbers<[1], [0], [0], [1], [0, 0, 1, 1], [], []>} : vector<24x256xbf16>, vector<256x10xbf16>, vector<24x10xf32> -> vector<24x10xf32>
    %c0_15 = arith.constant 0 : index
    %c0_16 = arith.constant 0 : index
    %20 = vector.load %arg6[%c0_15, %c0_16] : memref<1x10xf32, #tpu.memory_space<vmem>>, vector<1x10xf32>
    %21 = vector.broadcast %20 : vector<1x10xf32> to vector<24x10xf32>
    %22 = arith.addf %19, %21 : vector<24x10xf32>
    %c0_17 = arith.constant 0 : index
    %c0_18 = arith.constant 0 : index
    %23 = vector.load %arg7[%c0_17, %c0_18] : memref<24x10xf32, #tpu.memory_space<vmem>>, vector<24x10xf32>
    tpu.vector_store %arg7[%c0_17, %c0_18], %22 {strides = array<i32>} : memref<24x10xf32, #tpu.memory_space<vmem>>, vector<24x10xf32>,
    return
  }
}

</mosaic_0001>

<llo_original>
// kernel: tln_forward.4
$region0: #{tln_forward.4}
  #allocation0 [shape = 'u32[]', space=smem, size = 0x4, offset = 0x4, fixed_abs, tag = 'smem constant byte address 0x4 - core index']
  #allocation1 [shape = 'u32[72,128]{1,0:T(1,128)}', space=vmem, size = 0x9000, scoped, tag = 'internal scratch']
  %s0 = inlined_call_operand.vmem [shape: f32[2,32,95], index: 0, kind: input, shape index: {}]
  %s1 = inlined_call_operand.vmem [shape: f32[16,32], index: 1, kind: input, shape index: {}]
  %s2 = inlined_call_operand.vmem [shape: f32[16,1], index: 2, kind: input, shape index: {}]
  %s3 = inlined_call_operand.vmem [shape: f32[93,47], index: 3, kind: input, shape index: {}]
  %s4 = inlined_call_operand.vmem [shape: f32[45,23], index: 4, kind: input, shape index: {}]
  %s5 = inlined_call_operand.vmem [shape: f32[2,32,23], index: 5, kind: output, shape index: {}]
  %s6 = sld [smem:[#allocation0]]
  $region53: #{tln_forward.4} parent=0
    _
  %s8 = ssub.s32 1, %s6
  %s9 = scalar_select 0, %s8, %s6
  loop: start=0, step=1, limit=4
  $region2: #{tln_forward.4} parent=0 // loop_pre_header
    _
  $region3: #{tln_forward.4} parent=0 // loop_header
    %s11 = sphi 0, %s15
    %p12 = scmp.ge.s32.totalorder %s11, 4
    %s21 = sphi 0, %s23
    %s24 = sphi 0, %s21
    %s25 = sphi 0, %s24
    %s41 = sphi 0, %s25
    %s45 = sphi 0, %s45
    %s47 = sphi 0, %s45
    %s48 = sphi 0, %s47
    %s62 = sphi 0, %s48
    %s66 = sphi 0, %s66
    %s68 = sphi 0, %s66
    %s69 = sphi 0, %s68
    %s83 = sphi 0, %s69
    %s87 = sphi 0, %s87
    %s89 = sphi 0, %s87
    %s90 = sphi 0, %s89
    %s104 = sphi 0, %s90
    %s108 = sphi 0, %s108
    %s110 = sphi 0, %s108
    %s111 = sphi 0, %s110
    %s125 = sphi 0, %s111
    %s131 = sphi 0, %s133
    %s134 = sphi 0, %s131
    %s135 = sphi 0, %s134
    %s151 = sphi 0, %s135
  $region4: #{tln_forward.4} parent=0 // loop_header_branch
    %14 = sbr.rel (%p12) target = $region8
  $region5: #{tln_forward.4} parent=0 // loop_body
    %s16 = ssub.s32 %s11, 1
    %s17 = ssub.s32 %s11, 2
    %s18 = sadd.s32 %s11, 1
    %s19 = ssub.s32 %s11, %s18
    %p20 = scmp.eq.s32.totalorder %s19, 0
    %s22 = sadd.s32 %s21, 1
    %s23 = scalar_select %p20, %s21, %s22
    %p26 = pneg %p20
    %p27 = scmp.eq.s32.totalorder %s11, 1
    %p28 = por %p26, %p27
    %p29 = scmp.ne.s32.totalorder %s21, %s24
    %p30 = scmp.eq.s32.totalorder %s11, 0
    %p31 = por %p29, %p30
    %p32 = scmp.ne.s32.totalorder %s21, %s24
    %p33 = scmp.eq.s32.totalorder %s16, 1
    %p34 = por %p32, %p33
    %p35 = scmp.ne.s32.totalorder %s24, %s25
    %p36 = scmp.eq.s32.totalorder %s16, 0
    %p37 = por %p35, %p36
    %p38 = scmp.ne.s32.totalorder %s24, %s25
    %p39 = scmp.eq.s32.totalorder %s17, 1
    %p40 = por %p38, %p39
    %p42 = scmp.ne.s32.totalorder %s25, %s41
    %p43 = scmp.eq.s32.totalorder %s17, 0
    %p44 = por %p42, %p43
    %s46 = sadd.s32 %s45, 1
    %p49 = scmp.eq.s32.totalorder %s11, 1
    %p50 = scmp.ne.s32.totalorder %s45, %s47
    %p51 = scmp.eq.s32.totalorder %s11, 0
    %p52 = por %p50, %p51
    %p53 = scmp.ne.s32.totalorder %s45, %s47
    %p54 = scmp.eq.s32.totalorder %s16, 1
    %p55 = por %p53, %p54
    %p56 = scmp.ne.s32.totalorder %s47, %s48
    %p57 = scmp.eq.s32.totalorder %s16, 0
    %p58 = por %p56, %p57
    %p59 = scmp.ne.s32.totalorder %s47, %s48
    %p60 = scmp.eq.s32.totalorder %s17, 1
    %p61 = por %p59, %p60
    %p63 = scmp.ne.s32.totalorder %s48, %s62
    %p64 = scmp.eq.s32.totalorder %s17, 0
    %p65 = por %p63, %p64
    %s67 = sadd.s32 %s66, 1
    %p70 = scmp.eq.s32.totalorder %s11, 1
    %p71 = scmp.ne.s32.totalorder %s66, %s68
    %p72 = scmp.eq.s32.totalorder %s11, 0
    %p73 = por %p71, %p72
    %p74 = scmp.ne.s32.totalorder %s66, %s68
    %p75 = scmp.eq.s32.totalorder %s16, 1
    %p76 = por %p74, %p75
    %p77 = scmp.ne.s32.totalorder %s68, %s69
    %p78 = scmp.eq.s32.totalorder %s16, 0
    %p79 = por %p77, %p78
    %p80 = scmp.ne.s32.totalorder %s68, %s69
    %p81 = scmp.eq.s32.totalorder %s17, 1
    %p82 = por %p80, %p81
    %p84 = scmp.ne.s32.totalorder %s69, %s83
    %p85 = scmp.eq.s32.totalorder %s17, 0
    %p86 = por %p84, %p85
    %s88 = sadd.s32 %s87, 1
    %p91 = scmp.eq.s32.totalorder %s11, 1
    %p92 = scmp.ne.s32.totalorder %s87, %s89
    %p93 = scmp.eq.s32.totalorder %s11, 0
    %p94 = por %p92, %p93
    %p95 = scmp.ne.s32.totalorder %s87, %s89
    %p96 = scmp.eq.s32.totalorder %s16, 1
    %p97 = por %p95, %p96
    %p98 = scmp.ne.s32.totalorder %s89, %s90
    %p99 = scmp.eq.s32.totalorder %s16, 0
    %p100 = por %p98, %p99
    %p101 = scmp.ne.s32.totalorder %s89, %s90
    %p102 = scmp.eq.s32.totalorder %s17, 1
    %p103 = por %p101, %p102
    %p105 = scmp.ne.s32.totalorder %s90, %s104
    %p106 = scmp.eq.s32.totalorder %s17, 0
    %p107 = por %p105, %p106
    %s109 = sadd.s32 %s108, 1
    %p112 = scmp.eq.s32.totalorder %s11, 1
    %p113 = scmp.ne.s32.totalorder %s108, %s110
    %p114 = scmp.eq.s32.totalorder %s11, 0
    %p115 = por %p113, %p114
    %p116 = scmp.ne.s32.totalorder %s108, %s110
    %p117 = scmp.eq.s32.totalorder %s16, 1
    %p118 = por %p116, %p117
    %p119 = scmp.ne.s32.totalorder %s110, %s111
    %p120 = scmp.eq.s32.totalorder %s16, 0
    %p121 = por %p119, %p120
    %p122 = scmp.ne.s32.totalorder %s110, %s111
    %p123 = scmp.eq.s32.totalorder %s17, 1
    %p124 = por %p122, %p123
    %p126 = scmp.ne.s32.totalorder %s111, %s125
    %p127 = scmp.eq.s32.totalorder %s17, 0
    %p128 = por %p126, %p127
    %s129 = ssub.s32 %s11, %s18
    %p130 = scmp.eq.s32.totalorder %s129, 0
    %s132 = sadd.s32 %s131, 1
    %s133 = scalar_select %p130, %s131, %s132
    %p136 = pneg %p130
    %p137 = scmp.eq.s32.totalorder %s11, 1
    %p138 = por %p136, %p137
    %p139 = scmp.ne.s32.totalorder %s131, %s134
    %p140 = scmp.eq.s32.totalorder %s11, 0
    %p141 = por %p139, %p140
    %p142 = scmp.ne.s32.totalorder %s131, %s134
    %p143 = scmp.eq.s32.totalorder %s16, 1
    %p144 = por %p142, %p143
    %p145 = scmp.ne.s32.totalorder %s134, %s135
    %p146 = scmp.eq.s32.totalorder %s16, 0
    %p147 = por %p145, %p146
    %p148 = scmp.ne.s32.totalorder %s134, %s135
    %p149 = scmp.eq.s32.totalorder %s17, 1
    %p150 = por %p148, %p149
    %p152 = scmp.ne.s32.totalorder %s135, %s151
    %p153 = scmp.eq.s32.totalorder %s17, 0
    %p154 = por %p152, %p153
    %p155 = scmp.le.s32.totalorder 1, %s11
    %p156 = scmp.lt.s32.totalorder %s11, 3
    %p157 = pnand %p155, %p156
    %p158 = pneg %p157
    // Predicated region
    $region9: #{tln_forward.4} parent=5 // pred_check
      _
    $region10: #{tln_forward.4} parent=5 // pred_check_branch
      %160 = sbr.rel (%p157) target = $region12
    $region11: #{tln_forward.4} parent=5 // pred_region
      %s161 = ssub.s32 %s11, 1
      // Predicated region
      $region13: #{tln_forward.4} parent=11 // pred_check
        %p162 = pneg %p58
      $region14: #{tln_forward.4} parent=11 // pred_check_branch
        %164 = sbr.rel (%p162) target = $region16
      $region15: #{tln_forward.4} parent=11 // pred_region
        _
      $region16: #{tln_forward.4} parent=11 // pred_fallthru
        _
      // Predicated region
      $region17: #{tln_forward.4} parent=11 // pred_check
        %p165 = pneg %p79
      $region18: #{tln_forward.4} parent=11 // pred_check_branch
        %167 = sbr.rel (%p165) target = $region20
      $region19: #{tln_forward.4} parent=11 // pred_region
        _
      $region20: #{tln_forward.4} parent=11 // pred_fallthru
        _
      // Predicated region
      $region21: #{tln_forward.4} parent=11 // pred_check
        %p168 = pneg %p100
      $region22: #{tln_forward.4} parent=11 // pred_check_branch
        %170 = sbr.rel (%p168) target = $region24
      $region23: #{tln_forward.4} parent=11 // pred_region
        _
      $region24: #{tln_forward.4} parent=11 // pred_fallthru
        _
      // Predicated region
      $region25: #{tln_forward.4} parent=11 // pred_check
        %p171 = pneg %p121
      $region26: #{tln_forward.4} parent=11 // pred_check_branch
        %173 = sbr.rel (%p171) target = $region28
      $region27: #{tln_forward.4} parent=11 // pred_region
        _
      $region28: #{tln_forward.4} parent=11 // pred_fallthru
        _
    $region12: #{tln_forward.4} parent=5 // pred_fallthru
      _
    %p174 = scmp.lt.s32.totalorder %s11, 2
    // Predicated region
    $region29: #{tln_forward.4} parent=5 // pred_check
      %p175 = pneg %p174
    $region30: #{tln_forward.4} parent=5 // pred_check_branch
      %177 = sbr.rel (%p175) target = $region32
    $region31: #{tln_forward.4} parent=5 // pred_region
      // Predicated region
      $region33: #{tln_forward.4} parent=31 // pred_check
        %p178 = pneg %p31
      $region34: #{tln_forward.4} parent=31 // pred_check_branch
        %180 = sbr.rel (%p178) target = $region36
      $region35: #{tln_forward.4} parent=31 // pred_region
        %p181 = scmp.lt.s32.totalorder %s11, 1
        %s182 = scalar_select %p181, %s11, 1
        %s183 = smul.addr %s182, 4
        %s184 = smul.addr %s183, 8
        %s185 = scalar_lea.vmem %s0, %s184
      $region36: #{tln_forward.4} parent=31 // pred_fallthru
        _
    $region32: #{tln_forward.4} parent=5 // pred_fallthru
      _
    %p186 = scmp.le.s32.totalorder 1, %s11
    %p187 = scmp.lt.s32.totalorder %s11, 3
    %p188 = pnand %p186, %p187
    %p189 = pneg %p188
    // Predicated region
    $region37: #{tln_forward.4} parent=5 // pred_check
      _
    $region38: #{tln_forward.4} parent=5 // pred_check_branch
      %191 = sbr.rel (%p188) target = $region40
    $region39: #{tln_forward.4} parent=5 // pred_region
      %s192 = ssub.s32 %s11, 1
      %p193 = scmp.lt.s32.totalorder %s16, 1
      %s194 = scalar_select %p193, %s16, 1
      %s195 = smul.addr %s194, 4
      %s196 = smul.addr %s195, 8
      %s197 = scalar_lea.vmem %s0, %s196
      %p198 = pneg %p37
      %p199 = pneg %p34
      %p200 = pneg %p58
      %p201 = pneg %p55
      %p202 = pneg %p79
      %p203 = pneg %p76
      %p204 = pneg %p100
      %p205 = pneg %p97
      %p206 = pneg %p121
      %p207 = pneg %p118
      %p208 = pneg %p147
      %p209 = pneg %p144
      %p210 = scmp.lt.s32.totalorder %s16, 1
      %s211 = scalar_select %p210, %s16, 1
      %s212 = smul.addr %s211, 4
      %s213 = smul.addr %s212, 8
      %s214 = scalar_lea.vmem %s5, %s213
      %p215 = scmp.lt.s32.totalorder %s16, 1
      %s216 = scalar_select %p215, %s16, 1
      %s217 = smul.addr %s216, 4
      %s218 = smul.addr %s217, 8
      %s219 = scalar_lea.vmem %s0, %s218
      %p220 = scmp.lt.s32.totalorder %s16, 1
      %s221 = scalar_select %p220, %s16, 1
      %s222 = smul.addr %s221, 4
      %s223 = smul.addr %s222, 8
      %s224 = scalar_lea.vmem %s5, %s223
      %v225 = vld [vmem:[%s1] sm:$0xff]
      %v226 = vld [vmem:[%s1 + $0x8] sm:$0xff]
      %v227 = vld [vmem:[%s219] sm:$0xff]
      %v228 = vld [vmem:[%s219 + $0x8] sm:$0xff]
      %v229 = vld [vmem:[%s219 + $0x10] sm:$0xff]
      %v230 = vld [vmem:[%s219 + $0x18] sm:$0xff]
      %v231 = vld [vmem:[%s2] sm:$0xff]
      %v232 = vld [vmem:[%s2 + $0x8] sm:$0xff]
      %234 = vset.pattern.permute.xlu0 0
      %235 = vperm.xlu0 %234, %v231
      %v236 = vpop.permute.xlu0 %235
      %239 = vset.pattern.permute.xlu0 0
      %240 = vperm.xlu0 %239, %v232
      %v241 = vpop.permute.xlu0 %240
      %vm243 = vcmask 261120
      %v245 = vsel %vm243, %v225, 0
      %v248 = vsel %vm243, %v226, 0
      %250 = vmatpush.msra.mxu0 0.0
      %251 = vmatpush.msra.mxu0 0.0
      %252 = vmatpush.msra.mxu0 0.0
      %253 = vmatpush.msra.mxu0 0.0
      %254 = vmatpush.msra.mxu0 0.0
      %255 = vmatpush.msra.mxu0 0.0
      %256 = vmatpush.msra.mxu0 0.0
      %257 = vmatpush.msra.mxu0 0.0
      %258 = vmatpush.msra.mxu0 0.0
      %259 = vmatpush.msra.mxu0 0.0
      %260 = vmatpush.msra.mxu0 0.0
      %261 = vmatpush.msra.mxu0 0.0
      %262 = vmatpush.msra.mxu0 %v230
      %263 = vmatpush.msra.mxu0 %v229
      %264 = vmatpush.msra.mxu0 %v228
      %265 = vmatpush.msra.mxu0 %v227
      %266 = vmatmul.f32.gmra.mxu0 %v245
      %v267 = vpop.f32.mrf.mxu0
      %v268 = vadd.f32 %v236, %v267
      %269 = vmatmul.f32.gmra.mxu0 %v248
      %v270 = vpop.f32.mrf.mxu0
      %v271 = vadd.f32 %v241, %v270
      %272 = vdwg.mxu0
      %v273 = vmax.f32 %v268, 0.0
      %v274 = vmax.f32 %v271, 0.0
      %277 = vrot.lane.b32.xlu0 %v273, 127
      %v278 = vpop.permute.xlu0 %277
      %279 = vrot.lane.b32.xlu0 %v274, 127
      %v280 = vpop.permute.xlu0 %279
      %v283 = vmax.f32 %v273, %v278
      %v284 = vmax.f32 %v274, %v280
      %285 = vrot.lane.b32.xlu0 %v273, 126
      %v286 = vpop.permute.xlu0 %285
      %287 = vrot.lane.b32.xlu0 %v274, 126
      %v288 = vpop.permute.xlu0 %287
      %v291 = vmax.f32 %v283, %v286
      %v292 = vmax.f32 %v284, %v288
      %v293 = vld [vmem:[%s3] sm:$0xff]
      %v294 = vld [vmem:[%s3 + $0x8] sm:$0xff]
      %v295 = vld [vmem:[%s3 + $0x10] sm:$0xff]
      %v296 = vld [vmem:[%s3 + $0x18] sm:$0xff]
      %v297 = vld [vmem:[%s3 + $0x20] sm:$0xff]
      %v298 = vld [vmem:[%s3 + $0x28] sm:$0xff]
      %v299 = vld [vmem:[%s3 + $0x30] sm:$0xff]
      %v300 = vld [vmem:[%s3 + $0x38] sm:$0xff]
      %v301 = vld [vmem:[%s3 + $0x40] sm:$0xff]
      %v302 = vld [vmem:[%s3 + $0x48] sm:$0xff]
      %v303 = vld [vmem:[%s3 + $0x50] sm:$0xff]
      %v304 = vld [vmem:[%s3 + $0x58] sm:$0x1f]
      %vm305 = vcmask 760832
      %v307 = vsel %vm305, %v291, 0
      %v310 = vsel %vm305, %v292, 0
      %vm312 = vcmask 1044480
      %v314 = vsel %vm312, %v304, 0
      %316 = vmatpush.msra.mxu0 0.0
      %317 = vmatpush.msra.mxu0 0.0
      %318 = vmatpush.msra.mxu0 0.0
      %319 = vmatpush.msra.mxu0 0.0
      %320 = vmatpush.msra.mxu0 %v314
      %321 = vmatpush.msra.mxu0 %v303
      %322 = vmatpush.msra.mxu0 %v302
      %323 = vmatpush.msra.mxu0 %v301
      %324 = vmatpush.msra.mxu0 %v300
      %325 = vmatpush.msra.mxu0 %v299
      %326 = vmatpush.msra.mxu0 %v298
      %327 = vmatpush.msra.mxu0 %v297
      %328 = vmatpush.msra.mxu0 %v296
      %329 = vmatpush.msra.mxu0 %v295
      %330 = vmatpush.msra.mxu0 %v294
      %331 = vmatpush.msra.mxu0 %v293
      %332 = vmatmul.f32.gmra.mxu0 %v307
      %v333 = vpop.f32.mrf.mxu0
      %v334 = vadd.f32 0.0, %v333
      %335 = vmatmul.f32.gmra.mxu0 %v310
      %v336 = vpop.f32.mrf.mxu0
      %v337 = vadd.f32 0.0, %v336
      %338 = vdwg.mxu0
      %v339 = vxor.u32 %v334, 2147483648
      %v340 = vxor.u32 %v337, 2147483648
      %v341 = vmul.f32 %v339, 1.442695
      %v342 = vpow.pop %v341
      %v343 = vmul.f32 %v340, 1.442695
      %v344 = vpow.pop %v343
      %v345 = vadd.f32 %v342, 1.0
      %v346 = vadd.f32 %v344, 1.0
      %v347 = vrcp.pop %v345
      %v348 = vmul.f32 %v345, %v347
      %v349 = vsub.f32 1.0, %v348
      %v350 = vmul.f32 %v347, %v349
      %v351 = vadd.f32 %v347, %v350
      %vm352 = vweird.f32 %v345
      %vm353 = vweird.f32 %v347
      %vm354 = vmor %vm352, %vm353
      %v355 = vsel %vm354, %v347, %v351
      %v356 = vand.u32 2147483647, %v345
      %vm357 = vcmp.eq.f32.partialorder %v356, 8.507059e+37
      %v358 = vand.u32 %v345, 2147483648
      %v359 = vor.u32 1.1754944e-38, %v358
      %v360 = vsel %vm357, %v359, %v355
      %v361 = vmul.f32 1.0, %v360
      %v362 = vrcp.pop %v346
      %v363 = vmul.f32 %v346, %v362
      %v364 = vsub.f32 1.0, %v363
      %v365 = vmul.f32 %v362, %v364
      %v366 = vadd.f32 %v362, %v365
      %vm367 = vweird.f32 %v346
      %vm368 = vweird.f32 %v362
      %vm369 = vmor %vm367, %vm368
      %v370 = vsel %vm369, %v362, %v366
      %v371 = vand.u32 2147483647, %v346
      %vm372 = vcmp.eq.f32.partialorder %v371, 8.507059e+37
      %v373 = vand.u32 %v346, 2147483648
      %v374 = vor.u32 1.1754944e-38, %v373
      %v375 = vsel %vm372, %v374, %v370
      %v376 = vmul.f32 1.0, %v375
      %379 = vrot.lane.b32.xlu0 %v361, 127
      %v380 = vpop.permute.xlu0 %379
      %381 = vrot.lane.b32.xlu0 %v376, 127
      %v382 = vpop.permute.xlu0 %381
      %v385 = vmax.f32 %v361, %v380
      %v386 = vmax.f32 %v376, %v382
      %387 = vrot.lane.b32.xlu0 %v361, 126
      %v388 = vpop.permute.xlu0 %387
      %389 = vrot.lane.b32.xlu0 %v376, 126
      %v390 = vpop.permute.xlu0 %389
      %v393 = vmax.f32 %v385, %v388
      %v394 = vmax.f32 %v386, %v390
      %v395 = vld [vmem:[%s4] sm:$0xff]
      %v396 = vld [vmem:[%s4 + $0x8] sm:$0xff]
      %v397 = vld [vmem:[%s4 + $0x10] sm:$0xff]
      %v398 = vld [vmem:[%s4 + $0x18] sm:$0xff]
      %v399 = vld [vmem:[%s4 + $0x20] sm:$0xff]
      %v400 = vld [vmem:[%s4 + $0x28] sm:$0x1f]
      %vm401 = vcmask 367616
      %v403 = vsel %vm401, %v393, 0
      %v406 = vsel %vm401, %v394, 0
      %v409 = vsel %vm312, %v400, 0
      %411 = vmatpush.msra.mxu0 0.0
      %412 = vmatpush.msra.mxu0 0.0
      %413 = vmatpush.msra.mxu0 0.0
      %414 = vmatpush.msra.mxu0 0.0
      %415 = vmatpush.msra.mxu0 0.0
      %416 = vmatpush.msra.mxu0 0.0
      %417 = vmatpush.msra.mxu0 0.0
      %418 = vmatpush.msra.mxu0 0.0
      %419 = vmatpush.msra.mxu0 0.0
      %420 = vmatpush.msra.mxu0 0.0
      %421 = vmatpush.msra.mxu0 %v409
      %422 = vmatpush.msra.mxu0 %v399
      %423 = vmatpush.msra.mxu0 %v398
      %424 = vmatpush.msra.mxu0 %v397
      %425 = vmatpush.msra.mxu0 %v396
      %426 = vmatpush.msra.mxu0 %v395
      %427 = vmatmul.f32.gmra.mxu0 %v403
      %v428 = vpop.f32.mrf.mxu0
      %v429 = vadd.f32 0.0, %v428
      %430 = vmatmul.f32.gmra.mxu0 %v406
      %v431 = vpop.f32.mrf.mxu0
      %v432 = vadd.f32 0.0, %v431
      %433 = vdwg.mxu0
      %vm434 = vcmask 187392
      %435 = vst.msk [vmem:[%s224] sm:$0xff] %vm434, %v429
      %436 = vst.msk [vmem:[%s224 + $0x8] sm:$0xff] %vm434, %v432
      %v437 = vsub.f32 0.0, %v334
      %v438 = vsub.f32 0.0, %v337
      %v439 = vxor.u32 %v437, 2147483648
      %v440 = vxor.u32 %v438, 2147483648
      %v441 = vmul.f32 %v439, 1.442695
      %v442 = vpow.pop %v441
      %v443 = vmul.f32 %v440, 1.442695
      %v444 = vpow.pop %v443
      %v445 = vadd.f32 %v442, 1.0
      %v446 = vadd.f32 %v444, 1.0
      %v447 = vrcp.pop %v445
      %v448 = vmul.f32 %v445, %v447
      %v449 = vsub.f32 1.0, %v448
      %v450 = vmul.f32 %v447, %v449
      %v451 = vadd.f32 %v447, %v450
      %vm452 = vweird.f32 %v445
      %vm453 = vweird.f32 %v447
      %vm454 = vmor %vm452, %vm453
      %v455 = vsel %vm454, %v447, %v451
      %v456 = vand.u32 2147483647, %v445
      %vm457 = vcmp.eq.f32.partialorder %v456, 8.507059e+37
      %v458 = vand.u32 %v445, 2147483648
      %v459 = vor.u32 1.1754944e-38, %v458
      %v460 = vsel %vm457, %v459, %v455
      %v461 = vmul.f32 1.0, %v460
      %v462 = vrcp.pop %v446
      %v463 = vmul.f32 %v446, %v462
      %v464 = vsub.f32 1.0, %v463
      %v465 = vmul.f32 %v462, %v464
      %v466 = vadd.f32 %v462, %v465
      %vm467 = vweird.f32 %v446
      %vm468 = vweird.f32 %v462
      %vm469 = vmor %vm467, %vm468
      %v470 = vsel %vm469, %v462, %v466
      %v471 = vand.u32 2147483647, %v446
      %vm472 = vcmp.eq.f32.partialorder %v471, 8.507059e+37
      %v473 = vand.u32 %v446, 2147483648
      %v474 = vor.u32 1.1754944e-38, %v473
      %v475 = vsel %vm472, %v474, %v470
      %v476 = vmul.f32 1.0, %v475
      %479 = vrot.lane.b32.xlu0 %v461, 127
      %v480 = vpop.permute.xlu0 %479
      %481 = vrot.lane.b32.xlu0 %v476, 127
      %v482 = vpop.permute.xlu0 %481
      %v485 = vmax.f32 %v461, %v480
      %v486 = vmax.f32 %v476, %v482
      %487 = vrot.lane.b32.xlu0 %v461, 126
      %v488 = vpop.permute.xlu0 %487
      %489 = vrot.lane.b32.xlu0 %v476, 126
      %v490 = vpop.permute.xlu0 %489
      %v493 = vmax.f32 %v485, %v488
      %v494 = vmax.f32 %v486, %v490
      %v495 = vld [vmem:[%s4] sm:$0xff]
      %v496 = vld [vmem:[%s4 + $0x8] sm:$0xff]
      %v497 = vld [vmem:[%s4 + $0x10] sm:$0xff]
      %v498 = vld [vmem:[%s4 + $0x18] sm:$0xff]
      %v499 = vld [vmem:[%s4 + $0x20] sm:$0xff]
      %v500 = vld [vmem:[%s4 + $0x28] sm:$0x1f]
      %v502 = vsel %vm401, %v493, 0
      %v505 = vsel %vm401, %v494, 0
      %v508 = vsel %vm312, %v500, 0
      %510 = vmatpush.msra.mxu0 0.0
      %511 = vmatpush.msra.mxu0 0.0
      %512 = vmatpush.msra.mxu0 0.0
      %513 = vmatpush.msra.mxu0 0.0
      %514 = vmatpush.msra.mxu0 0.0
      %515 = vmatpush.msra.mxu0 0.0
      %516 = vmatpush.msra.mxu0 0.0
      %517 = vmatpush.msra.mxu0 0.0
      %518 = vmatpush.msra.mxu0 0.0
      %519 = vmatpush.msra.mxu0 0.0
      %520 = vmatpush.msra.mxu0 %v508
      %521 = vmatpush.msra.mxu0 %v499
      %522 = vmatpush.msra.mxu0 %v498
      %523 = vmatpush.msra.mxu0 %v497
      %524 = vmatpush.msra.mxu0 %v496
      %525 = vmatpush.msra.mxu0 %v495
      %526 = vmatmul.f32.gmra.mxu0 %v502
      %v527 = vpop.f32.mrf.mxu0
      %v528 = vadd.f32 0.0, %v527
      %529 = vmatmul.f32.gmra.mxu0 %v505
      %v530 = vpop.f32.mrf.mxu0
      %v531 = vadd.f32 0.0, %v530
      %532 = vdwg.mxu0
      %533 = vst.msk [vmem:[%s224 + $0x10] sm:$0xff] %vm434, %v528
      %534 = vst.msk [vmem:[%s224 + $0x18] sm:$0xff] %vm434, %v531
      %p535 = scmp.lt.s32.totalorder %s16, 1
      %s536 = scalar_select %p535, %s16, 1
      %s537 = smul.addr %s536, 4
      %s538 = smul.addr %s537, 8
      %s539 = scalar_lea.vmem %s5, %s538
      // Predicated region
      $region41: #{tln_forward.4} parent=39 // pred_check
        %p540 = pneg %p144
      $region42: #{tln_forward.4} parent=39 // pred_check_branch
        %542 = sbr.rel (%p540) target = $region44
      $region43: #{tln_forward.4} parent=39 // pred_region
        _
      $region44: #{tln_forward.4} parent=39 // pred_fallthru
        _
    $region40: #{tln_forward.4} parent=5 // pred_fallthru
      _
    %p543 = scmp.le.s32.totalorder 2, %s11
    // Predicated region
    $region45: #{tln_forward.4} parent=5 // pred_check
      %p544 = pneg %p543
    $region46: #{tln_forward.4} parent=5 // pred_check_branch
      %546 = sbr.rel (%p544) target = $region48
    $region47: #{tln_forward.4} parent=5 // pred_region
      %s547 = ssub.s32 %s11, 2
      // Predicated region
      $region49: #{tln_forward.4} parent=47 // pred_check
        %p548 = pneg %p150
      $region50: #{tln_forward.4} parent=47 // pred_check_branch
        %550 = sbr.rel (%p548) target = $region52
      $region51: #{tln_forward.4} parent=47 // pred_region
        %p551 = scmp.lt.s32.totalorder %s17, 1
        %s552 = scalar_select %p551, %s17, 1
        %s553 = smul.addr %s552, 4
        %s554 = smul.addr %s553, 8
        %s555 = scalar_lea.vmem %s5, %s554
      $region52: #{tln_forward.4} parent=47 // pred_fallthru
        _
    $region48: #{tln_forward.4} parent=5 // pred_fallthru
      _
  $region6: #{tln_forward.4} parent=0 // loop_footer
    %s15 = sadd.s32 1, %s11
  $region7: #{tln_forward.4} parent=0 // loop_footer_branch
    %10 = sbr.rel target = $region3
  $region8: #{tln_forward.4} parent=0 // loop_exit
    _

// kernel: tln_forward.6
$region0: #{tln_forward.6}
  #allocation0 [shape = 'u32[]', space=smem, size = 0x4, offset = 0x4, fixed_abs, tag = 'smem constant byte address 0x4 - core index']
  #allocation1 [shape = 'u32[72,128]{1,0:T(1,128)}', space=vmem, size = 0x9000, scoped, tag = 'internal scratch']
  %s0 = inlined_call_operand.vmem [shape: f32[2,64,47], index: 0, kind: input, shape index: {}]
  %s1 = inlined_call_operand.vmem [shape: f32[80,64], index: 1, kind: input, shape index: {}]
  %s2 = inlined_call_operand.vmem [shape: f32[40,1], index: 2, kind: input, shape index: {}]
  %s3 = inlined_call_operand.vmem [shape: f32[24,104], index: 3, kind: input, shape index: {}]
  %s4 = inlined_call_operand.vmem [shape: f32[12,1], index: 4, kind: input, shape index: {}]
  %s5 = inlined_call_operand.vmem [shape: f32[2,12,21], index: 5, kind: output, shape index: {}]
  %s6 = sld [smem:[#allocation0]]
  $region53: #{tln_forward.6} parent=0
    _
  %s8 = ssub.s32 1, %s6
  %s9 = scalar_select 0, %s8, %s6
  loop: start=0, step=1, limit=4
  $region2: #{tln_forward.6} parent=0 // loop_pre_header
    _
  $region3: #{tln_forward.6} parent=0 // loop_header
    %s11 = sphi 0, %s15
    %p12 = scmp.ge.s32.totalorder %s11, 4
    %s21 = sphi 0, %s23
    %s24 = sphi 0, %s21
    %s25 = sphi 0, %s24
    %s41 = sphi 0, %s25
    %s45 = sphi 0, %s45
    %s47 = sphi 0, %s45
    %s48 = sphi 0, %s47
    %s62 = sphi 0, %s48
    %s66 = sphi 0, %s66
    %s68 = sphi 0, %s66
    %s69 = sphi 0, %s68
    %s83 = sphi 0, %s69
    %s87 = sphi 0, %s87
    %s89 = sphi 0, %s87
    %s90 = sphi 0, %s89
    %s104 = sphi 0, %s90
    %s108 = sphi 0, %s108
    %s110 = sphi 0, %s108
    %s111 = sphi 0, %s110
    %s125 = sphi 0, %s111
    %s131 = sphi 0, %s133
    %s134 = sphi 0, %s131
    %s135 = sphi 0, %s134
    %s151 = sphi 0, %s135
  $region4: #{tln_forward.6} parent=0 // loop_header_branch
    %14 = sbr.rel (%p12) target = $region8
  $region5: #{tln_forward.6} parent=0 // loop_body
    %s16 = ssub.s32 %s11, 1
    %s17 = ssub.s32 %s11, 2
    %s18 = sadd.s32 %s11, 1
    %s19 = ssub.s32 %s11, %s18
    %p20 = scmp.eq.s32.totalorder %s19, 0
    %s22 = sadd.s32 %s21, 1
    %s23 = scalar_select %p20, %s21, %s22
    %p26 = pneg %p20
    %p27 = scmp.eq.s32.totalorder %s11, 1
    %p28 = por %p26, %p27
    %p29 = scmp.ne.s32.totalorder %s21, %s24
    %p30 = scmp.eq.s32.totalorder %s11, 0
    %p31 = por %p29, %p30
    %p32 = scmp.ne.s32.totalorder %s21, %s24
    %p33 = scmp.eq.s32.totalorder %s16, 1
    %p34 = por %p32, %p33
    %p35 = scmp.ne.s32.totalorder %s24, %s25
    %p36 = scmp.eq.s32.totalorder %s16, 0
    %p37 = por %p35, %p36
    %p38 = scmp.ne.s32.totalorder %s24, %s25
    %p39 = scmp.eq.s32.totalorder %s17, 1
    %p40 = por %p38, %p39
    %p42 = scmp.ne.s32.totalorder %s25, %s41
    %p43 = scmp.eq.s32.totalorder %s17, 0
    %p44 = por %p42, %p43
    %s46 = sadd.s32 %s45, 1
    %p49 = scmp.eq.s32.totalorder %s11, 1
    %p50 = scmp.ne.s32.totalorder %s45, %s47
    %p51 = scmp.eq.s32.totalorder %s11, 0
    %p52 = por %p50, %p51
    %p53 = scmp.ne.s32.totalorder %s45, %s47
    %p54 = scmp.eq.s32.totalorder %s16, 1
    %p55 = por %p53, %p54
    %p56 = scmp.ne.s32.totalorder %s47, %s48
    %p57 = scmp.eq.s32.totalorder %s16, 0
    %p58 = por %p56, %p57
    %p59 = scmp.ne.s32.totalorder %s47, %s48
    %p60 = scmp.eq.s32.totalorder %s17, 1
    %p61 = por %p59, %p60
    %p63 = scmp.ne.s32.totalorder %s48, %s62
    %p64 = scmp.eq.s32.totalorder %s17, 0
    %p65 = por %p63, %p64
    %s67 = sadd.s32 %s66, 1
    %p70 = scmp.eq.s32.totalorder %s11, 1
    %p71 = scmp.ne.s32.totalorder %s66, %s68
    %p72 = scmp.eq.s32.totalorder %s11, 0
    %p73 = por %p71, %p72
    %p74 = scmp.ne.s32.totalorder %s66, %s68
    %p75 = scmp.eq.s32.totalorder %s16, 1
    %p76 = por %p74, %p75
    %p77 = scmp.ne.s32.totalorder %s68, %s69
    %p78 = scmp.eq.s32.totalorder %s16, 0
    %p79 = por %p77, %p78
    %p80 = scmp.ne.s32.totalorder %s68, %s69
    %p81 = scmp.eq.s32.totalorder %s17, 1
    %p82 = por %p80, %p81
    %p84 = scmp.ne.s32.totalorder %s69, %s83
    %p85 = scmp.eq.s32.totalorder %s17, 0
    %p86 = por %p84, %p85
    %s88 = sadd.s32 %s87, 1
    %p91 = scmp.eq.s32.totalorder %s11, 1
    %p92 = scmp.ne.s32.totalorder %s87, %s89
    %p93 = scmp.eq.s32.totalorder %s11, 0
    %p94 = por %p92, %p93
    %p95 = scmp.ne.s32.totalorder %s87, %s89
    %p96 = scmp.eq.s32.totalorder %s16, 1
    %p97 = por %p95, %p96
    %p98 = scmp.ne.s32.totalorder %s89, %s90
    %p99 = scmp.eq.s32.totalorder %s16, 0
    %p100 = por %p98, %p99
    %p101 = scmp.ne.s32.totalorder %s89, %s90
    %p102 = scmp.eq.s32.totalorder %s17, 1
    %p103 = por %p101, %p102
    %p105 = scmp.ne.s32.totalorder %s90, %s104
    %p106 = scmp.eq.s32.totalorder %s17, 0
    %p107 = por %p105, %p106
    %s109 = sadd.s32 %s108, 1
    %p112 = scmp.eq.s32.totalorder %s11, 1
    %p113 = scmp.ne.s32.totalorder %s108, %s110
    %p114 = scmp.eq.s32.totalorder %s11, 0
    %p115 = por %p113, %p114
    %p116 = scmp.ne.s32.totalorder %s108, %s110
    %p117 = scmp.eq.s32.totalorder %s16, 1
    %p118 = por %p116, %p117
    %p119 = scmp.ne.s32.totalorder %s110, %s111
    %p120 = scmp.eq.s32.totalorder %s16, 0
    %p121 = por %p119, %p120
    %p122 = scmp.ne.s32.totalorder %s110, %s111
    %p123 = scmp.eq.s32.totalorder %s17, 1
    %p124 = por %p122, %p123
    %p126 = scmp.ne.s32.totalorder %s111, %s125
    %p127 = scmp.eq.s32.totalorder %s17, 0
    %p128 = por %p126, %p127
    %s129 = ssub.s32 %s11, %s18
    %p130 = scmp.eq.s32.totalorder %s129, 0
    %s132 = sadd.s32 %s131, 1
    %s133 = scalar_select %p130, %s131, %s132
    %p136 = pneg %p130
    %p137 = scmp.eq.s32.totalorder %s11, 1
    %p138 = por %p136, %p137
    %p139 = scmp.ne.s32.totalorder %s131, %s134
    %p140 = scmp.eq.s32.totalorder %s11, 0
    %p141 = por %p139, %p140
    %p142 = scmp.ne.s32.totalorder %s131, %s134
    %p143 = scmp.eq.s32.totalorder %s16, 1
    %p144 = por %p142, %p143
    %p145 = scmp.ne.s32.totalorder %s134, %s135
    %p146 = scmp.eq.s32.totalorder %s16, 0
    %p147 = por %p145, %p146
    %p148 = scmp.ne.s32.totalorder %s134, %s135
    %p149 = scmp.eq.s32.totalorder %s17, 1
    %p150 = por %p148, %p149
    %p152 = scmp.ne.s32.totalorder %s135, %s151
    %p153 = scmp.eq.s32.totalorder %s17, 0
    %p154 = por %p152, %p153
    %p155 = scmp.le.s32.totalorder 1, %s11
    %p156 = scmp.lt.s32.totalorder %s11, 3
    %p157 = pnand %p155, %p156
    %p158 = pneg %p157
    // Predicated region
    $region9: #{tln_forward.6} parent=5 // pred_check
      _
    $region10: #{tln_forward.6} parent=5 // pred_check_branch
      %160 = sbr.rel (%p157) target = $region12
    $region11: #{tln_forward.6} parent=5 // pred_region
      %s161 = ssub.s32 %s11, 1
      // Predicated region
      $region13: #{tln_forward.6} parent=11 // pred_check
        %p162 = pneg %p58
      $region14: #{tln_forward.6} parent=11 // pred_check_branch
        %164 = sbr.rel (%p162) target = $region16
      $region15: #{tln_forward.6} parent=11 // pred_region
        _
      $region16: #{tln_forward.6} parent=11 // pred_fallthru
        _
      // Predicated region
      $region17: #{tln_forward.6} parent=11 // pred_check
        %p165 = pneg %p79
      $region18: #{tln_forward.6} parent=11 // pred_check_branch
        %167 = sbr.rel (%p165) target = $region20
      $region19: #{tln_forward.6} parent=11 // pred_region
        _
      $region20: #{tln_forward.6} parent=11 // pred_fallthru
        _
      // Predicated region
      $region21: #{tln_forward.6} parent=11 // pred_check
        %p168 = pneg %p100
      $region22: #{tln_forward.6} parent=11 // pred_check_branch
        %170 = sbr.rel (%p168) target = $region24
      $region23: #{tln_forward.6} parent=11 // pred_region
        _
      $region24: #{tln_forward.6} parent=11 // pred_fallthru
        _
      // Predicated region
      $region25: #{tln_forward.6} parent=11 // pred_check
        %p171 = pneg %p121
      $region26: #{tln_forward.6} parent=11 // pred_check_branch
        %173 = sbr.rel (%p171) target = $region28
      $region27: #{tln_forward.6} parent=11 // pred_region
        _
      $region28: #{tln_forward.6} parent=11 // pred_fallthru
        _
    $region12: #{tln_forward.6} parent=5 // pred_fallthru
      _
    %p174 = scmp.lt.s32.totalorder %s11, 2
    // Predicated region
    $region29: #{tln_forward.6} parent=5 // pred_check
      %p175 = pneg %p174
    $region30: #{tln_forward.6} parent=5 // pred_check_branch
      %177 = sbr.rel (%p175) target = $region32
    $region31: #{tln_forward.6} parent=5 // pred_region
      // Predicated region
      $region33: #{tln_forward.6} parent=31 // pred_check
        %p178 = pneg %p31
      $region34: #{tln_forward.6} parent=31 // pred_check_branch
        %180 = sbr.rel (%p178) target = $region36
      $region35: #{tln_forward.6} parent=31 // pred_region
        %p181 = scmp.lt.s32.totalorder %s11, 1
        %s182 = scalar_select %p181, %s11, 1
        %s183 = smul.addr %s182, 8
        %s184 = smul.addr %s183, 8
        %s185 = scalar_lea.vmem %s0, %s184
      $region36: #{tln_forward.6} parent=31 // pred_fallthru
        _
    $region32: #{tln_forward.6} parent=5 // pred_fallthru
      _
    %p186 = scmp.le.s32.totalorder 1, %s11
    %p187 = scmp.lt.s32.totalorder %s11, 3
    %p188 = pnand %p186, %p187
    %p189 = pneg %p188
    // Predicated region
    $region37: #{tln_forward.6} parent=5 // pred_check
      _
    $region38: #{tln_forward.6} parent=5 // pred_check_branch
      %191 = sbr.rel (%p188) target = $region40
    $region39: #{tln_forward.6} parent=5 // pred_region
      %s192 = ssub.s32 %s11, 1
      %p193 = scmp.lt.s32.totalorder %s16, 1
      %s194 = scalar_select %p193, %s16, 1
      %s195 = smul.addr %s194, 8
      %s196 = smul.addr %s195, 8
      %s197 = scalar_lea.vmem %s0, %s196
      %p198 = pneg %p37
      %p199 = pneg %p34
      %p200 = pneg %p58
      %p201 = pneg %p55
      %p202 = pneg %p79
      %p203 = pneg %p76
      %p204 = pneg %p100
      %p205 = pneg %p97
      %p206 = pneg %p121
      %p207 = pneg %p118
      %p208 = pneg %p147
      %p209 = pneg %p144
      %p210 = scmp.lt.s32.totalorder %s16, 1
      %s211 = scalar_select %p210, %s16, 1
      %s212 = smul.addr %s211, 2
      %s213 = smul.addr %s212, 8
      %s214 = scalar_lea.vmem %s5, %s213
      %p215 = scmp.lt.s32.totalorder %s16, 1
      %s216 = scalar_select %p215, %s16, 1
      %s217 = smul.addr %s216, 8
      %s218 = smul.addr %s217, 8
      %s219 = scalar_lea.vmem %s0, %s218
      %p220 = scmp.lt.s32.totalorder %s16, 1
      %s221 = scalar_select %p220, %s16, 1
      %s222 = smul.addr %s221, 2
      %s223 = smul.addr %s222, 8
      %s224 = scalar_lea.vmem %s5, %s223
      %v225 = vld [vmem:[%s219] sm:$0xff]
      %v226 = vld [vmem:[%s219 + $0x8] sm:$0xff]
      %v227 = vld [vmem:[%s219 + $0x10] sm:$0xff]
      %v228 = vld [vmem:[%s219 + $0x18] sm:$0xff]
      %v229 = vld [vmem:[%s219 + $0x20] sm:$0xff]
      %v230 = vld [vmem:[%s219 + $0x28] sm:$0xff]
      %v231 = vld [vmem:[%s219 + $0x30] sm:$0xff]
      %v232 = vld [vmem:[%s219 + $0x38] sm:$0xff]
      %241 = vrot.lane.b32.xlu0 %v225, 127
      %v242 = vpop.permute.xlu0 %241
      %243 = vrot.lane.b32.xlu0 %v226, 127
      %v244 = vpop.permute.xlu0 %243
      %245 = vrot.lane.b32.xlu0 %v227, 127
      %v246 = vpop.permute.xlu0 %245
      %247 = vrot.lane.b32.xlu0 %v228, 127
      %v248 = vpop.permute.xlu0 %247
      %249 = vrot.lane.b32.xlu0 %v229, 127
      %v250 = vpop.permute.xlu0 %249
      %251 = vrot.lane.b32.xlu0 %v230, 127
      %v252 = vpop.permute.xlu0 %251
      %253 = vrot.lane.b32.xlu0 %v231, 127
      %v254 = vpop.permute.xlu0 %253
      %255 = vrot.lane.b32.xlu0 %v232, 127
      %v256 = vpop.permute.xlu0 %255
      %v265 = vmax.f32 %v225, %v242
      %v266 = vmax.f32 %v226, %v244
      %v267 = vmax.f32 %v227, %v246
      %v268 = vmax.f32 %v228, %v248
      %v269 = vmax.f32 %v229, %v250
      %v270 = vmax.f32 %v230, %v252
      %v271 = vmax.f32 %v231, %v254
      %v272 = vmax.f32 %v232, %v256
      %273 = vrot.lane.b32.xlu0 %v225, 126
      %v274 = vpop.permute.xlu0 %273
      %275 = vrot.lane.b32.xlu0 %v226, 126
      %v276 = vpop.permute.xlu0 %275
      %277 = vrot.lane.b32.xlu0 %v227, 126
      %v278 = vpop.permute.xlu0 %277
      %279 = vrot.lane.b32.xlu0 %v228, 126
      %v280 = vpop.permute.xlu0 %279
      %281 = vrot.lane.b32.xlu0 %v229, 126
      %v282 = vpop.permute.xlu0 %281
      %283 = vrot.lane.b32.xlu0 %v230, 126
      %v284 = vpop.permute.xlu0 %283
      %285 = vrot.lane.b32.xlu0 %v231, 126
      %v286 = vpop.permute.xlu0 %285
      %287 = vrot.lane.b32.xlu0 %v232, 126
      %v288 = vpop.permute.xlu0 %287
      %v297 = vmax.f32 %v265, %v274
      %v298 = vmax.f32 %v266, %v276
      %v299 = vmax.f32 %v267, %v278
      %v300 = vmax.f32 %v268, %v280
      %v301 = vmax.f32 %v269, %v282
      %v302 = vmax.f32 %v270, %v284
      %v303 = vmax.f32 %v271, %v286
      %v304 = vmax.f32 %v272, %v288
      %305 = vrot.lane.b32.xlu0 %v225, 125
      %v306 = vpop.permute.xlu0 %305
      %307 = vrot.lane.b32.xlu0 %v226, 125
      %v308 = vpop.permute.xlu0 %307
      %309 = vrot.lane.b32.xlu0 %v227, 125
      %v310 = vpop.permute.xlu0 %309
      %311 = vrot.lane.b32.xlu0 %v228, 125
      %v312 = vpop.permute.xlu0 %311
      %313 = vrot.lane.b32.xlu0 %v229, 125
      %v314 = vpop.permute.xlu0 %313
      %315 = vrot.lane.b32.xlu0 %v230, 125
      %v316 = vpop.permute.xlu0 %315
      %317 = vrot.lane.b32.xlu0 %v231, 125
      %v318 = vpop.permute.xlu0 %317
      %319 = vrot.lane.b32.xlu0 %v232, 125
      %v320 = vpop.permute.xlu0 %319
      %v329 = vmax.f32 %v297, %v306
      %v330 = vmax.f32 %v298, %v308
      %v331 = vmax.f32 %v299, %v310
      %v332 = vmax.f32 %v300, %v312
      %v333 = vmax.f32 %v301, %v314
      %v334 = vmax.f32 %v302, %v316
      %v335 = vmax.f32 %v303, %v318
      %v336 = vmax.f32 %v304, %v320
      %337 = vrot.lane.b32.xlu0 %v225, 124
      %v338 = vpop.permute.xlu0 %337
      %339 = vrot.lane.b32.xlu0 %v226, 124
      %v340 = vpop.permute.xlu0 %339
      %341 = vrot.lane.b32.xlu0 %v227, 124
      %v342 = vpop.permute.xlu0 %341
      %343 = vrot.lane.b32.xlu0 %v228, 124
      %v344 = vpop.permute.xlu0 %343
      %345 = vrot.lane.b32.xlu0 %v229, 124
      %v346 = vpop.permute.xlu0 %345
      %347 = vrot.lane.b32.xlu0 %v230, 124
      %v348 = vpop.permute.xlu0 %347
      %349 = vrot.lane.b32.xlu0 %v231, 124
      %v350 = vpop.permute.xlu0 %349
      %351 = vrot.lane.b32.xlu0 %v232, 124
      %v352 = vpop.permute.xlu0 %351
      %v361 = vmax.f32 %v329, %v338
      %v362 = vmax.f32 %v330, %v340
      %v363 = vmax.f32 %v331, %v342
      %v364 = vmax.f32 %v332, %v344
      %v365 = vmax.f32 %v333, %v346
      %v366 = vmax.f32 %v334, %v348
      %v367 = vmax.f32 %v335, %v350
      %v368 = vmax.f32 %v336, %v352
      %369 = vrot.lane.b32.xlu0 %v225, 123
      %v370 = vpop.permute.xlu0 %369
      %371 = vrot.lane.b32.xlu0 %v226, 123
      %v372 = vpop.permute.xlu0 %371
      %373 = vrot.lane.b32.xlu0 %v227, 123
      %v374 = vpop.permute.xlu0 %373
      %375 = vrot.lane.b32.xlu0 %v228, 123
      %v376 = vpop.permute.xlu0 %375
      %377 = vrot.lane.b32.xlu0 %v229, 123
      %v378 = vpop.permute.xlu0 %377
      %379 = vrot.lane.b32.xlu0 %v230, 123
      %v380 = vpop.permute.xlu0 %379
      %381 = vrot.lane.b32.xlu0 %v231, 123
      %v382 = vpop.permute.xlu0 %381
      %383 = vrot.lane.b32.xlu0 %v232, 123
      %v384 = vpop.permute.xlu0 %383
      %v393 = vmax.f32 %v361, %v370
      %v394 = vmax.f32 %v362, %v372
      %v395 = vmax.f32 %v363, %v374
      %v396 = vmax.f32 %v364, %v376
      %v397 = vmax.f32 %v365, %v378
      %v398 = vmax.f32 %v366, %v380
      %v399 = vmax.f32 %v367, %v382
      %v400 = vmax.f32 %v368, %v384
      %401 = vrot.lane.b32.xlu0 %v225, 122
      %v402 = vpop.permute.xlu0 %401
      %403 = vrot.lane.b32.xlu0 %v226, 122
      %v404 = vpop.permute.xlu0 %403
      %405 = vrot.lane.b32.xlu0 %v227, 122
      %v406 = vpop.permute.xlu0 %405
      %407 = vrot.lane.b32.xlu0 %v228, 122
      %v408 = vpop.permute.xlu0 %407
      %409 = vrot.lane.b32.xlu0 %v229, 122
      %v410 = vpop.permute.xlu0 %409
      %411 = vrot.lane.b32.xlu0 %v230, 122
      %v412 = vpop.permute.xlu0 %411
      %413 = vrot.lane.b32.xlu0 %v231, 122
      %v414 = vpop.permute.xlu0 %413
      %415 = vrot.lane.b32.xlu0 %v232, 122
      %v416 = vpop.permute.xlu0 %415
      %v425 = vmax.f32 %v393, %v402
      %v426 = vmax.f32 %v394, %v404
      %v427 = vmax.f32 %v395, %v406
      %v428 = vmax.f32 %v396, %v408
      %v429 = vmax.f32 %v397, %v410
      %v430 = vmax.f32 %v398, %v412
      %v431 = vmax.f32 %v399, %v414
      %v432 = vmax.f32 %v400, %v416
      %433 = vrot.lane.b32.xlu0 %v225, 121
      %v434 = vpop.permute.xlu0 %433
      %435 = vrot.lane.b32.xlu0 %v226, 121
      %v436 = vpop.permute.xlu0 %435
      %437 = vrot.lane.b32.xlu0 %v227, 121
      %v438 = vpop.permute.xlu0 %437
      %439 = vrot.lane.b32.xlu0 %v228, 121
      %v440 = vpop.permute.xlu0 %439
      %441 = vrot.lane.b32.xlu0 %v229, 121
      %v442 = vpop.permute.xlu0 %441
      %443 = vrot.lane.b32.xlu0 %v230, 121
      %v444 = vpop.permute.xlu0 %443
      %445 = vrot.lane.b32.xlu0 %v231, 121
      %v446 = vpop.permute.xlu0 %445
      %447 = vrot.lane.b32.xlu0 %v232, 121
      %v448 = vpop.permute.xlu0 %447
      %v457 = vmax.f32 %v425, %v434
      %v458 = vmax.f32 %v426, %v436
      %v459 = vmax.f32 %v427, %v438
      %v460 = vmax.f32 %v428, %v440
      %v461 = vmax.f32 %v429, %v442
      %v462 = vmax.f32 %v430, %v444
      %v463 = vmax.f32 %v431, %v446
      %v464 = vmax.f32 %v432, %v448
      %465 = vrot.lane.b32.xlu0 %v225, 120
      %v466 = vpop.permute.xlu0 %465
      %467 = vrot.lane.b32.xlu0 %v226, 120
      %v468 = vpop.permute.xlu0 %467
      %469 = vrot.lane.b32.xlu0 %v227, 120
      %v470 = vpop.permute.xlu0 %469
      %471 = vrot.lane.b32.xlu0 %v228, 120
      %v472 = vpop.permute.xlu0 %471
      %473 = vrot.lane.b32.xlu0 %v229, 120
      %v474 = vpop.permute.xlu0 %473
      %475 = vrot.lane.b32.xlu0 %v230, 120
      %v476 = vpop.permute.xlu0 %475
      %477 = vrot.lane.b32.xlu0 %v231, 120
      %v478 = vpop.permute.xlu0 %477
      %479 = vrot.lane.b32.xlu0 %v232, 120
      %v480 = vpop.permute.xlu0 %479
      %v489 = vmax.f32 %v457, %v466
      %v490 = vmax.f32 %v458, %v468
      %v491 = vmax.f32 %v459, %v470
      %v492 = vmax.f32 %v460, %v472
      %v493 = vmax.f32 %v461, %v474
      %v494 = vmax.f32 %v462, %v476
      %v495 = vmax.f32 %v463, %v478
      %v496 = vmax.f32 %v464, %v480
      %497 = vrot.lane.b32.xlu0 %v225, 119
      %v498 = vpop.permute.xlu0 %497
      %499 = vrot.lane.b32.xlu0 %v226, 119
      %v500 = vpop.permute.xlu0 %499
      %501 = vrot.lane.b32.xlu0 %v227, 119
      %v502 = vpop.permute.xlu0 %501
      %503 = vrot.lane.b32.xlu0 %v228, 119
      %v504 = vpop.permute.xlu0 %503
      %505 = vrot.lane.b32.xlu0 %v229, 119
      %v506 = vpop.permute.xlu0 %505
      %507 = vrot.lane.b32.xlu0 %v230, 119
      %v508 = vpop.permute.xlu0 %507
      %509 = vrot.lane.b32.xlu0 %v231, 119
      %v510 = vpop.permute.xlu0 %509
      %511 = vrot.lane.b32.xlu0 %v232, 119
      %v512 = vpop.permute.xlu0 %511
      %v521 = vmax.f32 %v489, %v498
      %v522 = vmax.f32 %v490, %v500
      %v523 = vmax.f32 %v491, %v502
      %v524 = vmax.f32 %v492, %v504
      %v525 = vmax.f32 %v493, %v506
      %v526 = vmax.f32 %v494, %v508
      %v527 = vmax.f32 %v495, %v510
      %v528 = vmax.f32 %v496, %v512
      %529 = vrot.lane.b32.xlu0 %v225, 118
      %v530 = vpop.permute.xlu0 %529
      %531 = vrot.lane.b32.xlu0 %v226, 118
      %v532 = vpop.permute.xlu0 %531
      %533 = vrot.lane.b32.xlu0 %v227, 118
      %v534 = vpop.permute.xlu0 %533
      %535 = vrot.lane.b32.xlu0 %v228, 118
      %v536 = vpop.permute.xlu0 %535
      %537 = vrot.lane.b32.xlu0 %v229, 118
      %v538 = vpop.permute.xlu0 %537
      %539 = vrot.lane.b32.xlu0 %v230, 118
      %v540 = vpop.permute.xlu0 %539
      %541 = vrot.lane.b32.xlu0 %v231, 118
      %v542 = vpop.permute.xlu0 %541
      %543 = vrot.lane.b32.xlu0 %v232, 118
      %v544 = vpop.permute.xlu0 %543
      %v553 = vmax.f32 %v521, %v530
      %v554 = vmax.f32 %v522, %v532
      %v555 = vmax.f32 %v523, %v534
      %v556 = vmax.f32 %v524, %v536
      %v557 = vmax.f32 %v525, %v538
      %v558 = vmax.f32 %v526, %v540
      %v559 = vmax.f32 %v527, %v542
      %v560 = vmax.f32 %v528, %v544
      %561 = vrot.lane.b32.xlu0 %v225, 117
      %v562 = vpop.permute.xlu0 %561
      %563 = vrot.lane.b32.xlu0 %v226, 117
      %v564 = vpop.permute.xlu0 %563
      %565 = vrot.lane.b32.xlu0 %v227, 117
      %v566 = vpop.permute.xlu0 %565
      %567 = vrot.lane.b32.xlu0 %v228, 117
      %v568 = vpop.permute.xlu0 %567
      %569 = vrot.lane.b32.xlu0 %v229, 117
      %v570 = vpop.permute.xlu0 %569
      %571 = vrot.lane.b32.xlu0 %v230, 117
      %v572 = vpop.permute.xlu0 %571
      %573 = vrot.lane.b32.xlu0 %v231, 117
      %v574 = vpop.permute.xlu0 %573
      %575 = vrot.lane.b32.xlu0 %v232, 117
      %v576 = vpop.permute.xlu0 %575
      %v585 = vmax.f32 %v553, %v562
      %v586 = vmax.f32 %v554, %v564
      %v587 = vmax.f32 %v555, %v566
      %v588 = vmax.f32 %v556, %v568
      %v589 = vmax.f32 %v557, %v570
      %v590 = vmax.f32 %v558, %v572
      %v591 = vmax.f32 %v559, %v574
      %v592 = vmax.f32 %v560, %v576
      %593 = vrot.lane.b32.xlu0 %v225, 116
      %v594 = vpop.permute.xlu0 %593
      %595 = vrot.lane.b32.xlu0 %v226, 116
      %v596 = vpop.permute.xlu0 %595
      %597 = vrot.lane.b32.xlu0 %v227, 116
      %v598 = vpop.permute.xlu0 %597
      %599 = vrot.lane.b32.xlu0 %v228, 116
      %v600 = vpop.permute.xlu0 %599
      %601 = vrot.lane.b32.xlu0 %v229, 116
      %v602 = vpop.permute.xlu0 %601
      %603 = vrot.lane.b32.xlu0 %v230, 116
      %v604 = vpop.permute.xlu0 %603
      %605 = vrot.lane.b32.xlu0 %v231, 116
      %v606 = vpop.permute.xlu0 %605
      %607 = vrot.lane.b32.xlu0 %v232, 116
      %v608 = vpop.permute.xlu0 %607
      %v617 = vmax.f32 %v585, %v594
      %v618 = vmax.f32 %v586, %v596
      %v619 = vmax.f32 %v587, %v598
      %v620 = vmax.f32 %v588, %v600
      %v621 = vmax.f32 %v589, %v602
      %v622 = vmax.f32 %v590, %v604
      %v623 = vmax.f32 %v591, %v606
      %v624 = vmax.f32 %v592, %v608
      %625 = vrot.lane.b32.xlu0 %v225, 115
      %v626 = vpop.permute.xlu0 %625
      %627 = vrot.lane.b32.xlu0 %v226, 115
      %v628 = vpop.permute.xlu0 %627
      %629 = vrot.lane.b32.xlu0 %v227, 115
      %v630 = vpop.permute.xlu0 %629
      %631 = vrot.lane.b32.xlu0 %v228, 115
      %v632 = vpop.permute.xlu0 %631
      %633 = vrot.lane.b32.xlu0 %v229, 115
      %v634 = vpop.permute.xlu0 %633
      %635 = vrot.lane.b32.xlu0 %v230, 115
      %v636 = vpop.permute.xlu0 %635
      %637 = vrot.lane.b32.xlu0 %v231, 115
      %v638 = vpop.permute.xlu0 %637
      %639 = vrot.lane.b32.xlu0 %v232, 115
      %v640 = vpop.permute.xlu0 %639
      %v649 = vmax.f32 %v617, %v626
      %v650 = vmax.f32 %v618, %v628
      %v651 = vmax.f32 %v619, %v630
      %v652 = vmax.f32 %v620, %v632
      %v653 = vmax.f32 %v621, %v634
      %v654 = vmax.f32 %v622, %v636
      %v655 = vmax.f32 %v623, %v638
      %v656 = vmax.f32 %v624, %v640
      %657 = vrot.lane.b32.xlu0 %v225, 114
      %v658 = vpop.permute.xlu0 %657
      %659 = vrot.lane.b32.xlu0 %v226, 114
      %v660 = vpop.permute.xlu0 %659
      %661 = vrot.lane.b32.xlu0 %v227, 114
      %v662 = vpop.permute.xlu0 %661
      %663 = vrot.lane.b32.xlu0 %v228, 114
      %v664 = vpop.permute.xlu0 %663
      %665 = vrot.lane.b32.xlu0 %v229, 114
      %v666 = vpop.permute.xlu0 %665
      %667 = vrot.lane.b32.xlu0 %v230, 114
      %v668 = vpop.permute.xlu0 %667
      %669 = vrot.lane.b32.xlu0 %v231, 114
      %v670 = vpop.permute.xlu0 %669
      %671 = vrot.lane.b32.xlu0 %v232, 114
      %v672 = vpop.permute.xlu0 %671
      %v681 = vmax.f32 %v649, %v658
      %v682 = vmax.f32 %v650, %v660
      %v683 = vmax.f32 %v651, %v662
      %v684 = vmax.f32 %v652, %v664
      %v685 = vmax.f32 %v653, %v666
      %v686 = vmax.f32 %v654, %v668
      %v687 = vmax.f32 %v655, %v670
      %v688 = vmax.f32 %v656, %v672
      %689 = vrot.lane.b32.xlu0 %v225, 113
      %v690 = vpop.permute.xlu0 %689
      %691 = vrot.lane.b32.xlu0 %v226, 113
      %v692 = vpop.permute.xlu0 %691
      %693 = vrot.lane.b32.xlu0 %v227, 113
      %v694 = vpop.permute.xlu0 %693
      %695 = vrot.lane.b32.xlu0 %v228, 113
      %v696 = vpop.permute.xlu0 %695
      %697 = vrot.lane.b32.xlu0 %v229, 113
      %v698 = vpop.permute.xlu0 %697
      %699 = vrot.lane.b32.xlu0 %v230, 113
      %v700 = vpop.permute.xlu0 %699
      %701 = vrot.lane.b32.xlu0 %v231, 113
      %v702 = vpop.permute.xlu0 %701
      %703 = vrot.lane.b32.xlu0 %v232, 113
      %v704 = vpop.permute.xlu0 %703
      %v713 = vmax.f32 %v681, %v690
      %v714 = vmax.f32 %v682, %v692
      %v715 = vmax.f32 %v683, %v694
      %v716 = vmax.f32 %v684, %v696
      %v717 = vmax.f32 %v685, %v698
      %v718 = vmax.f32 %v686, %v700
      %v719 = vmax.f32 %v687, %v702
      %v720 = vmax.f32 %v688, %v704
      %721 = vrot.lane.b32.xlu0 %v225, 112
      %v722 = vpop.permute.xlu0 %721
      %723 = vrot.lane.b32.xlu0 %v226, 112
      %v724 = vpop.permute.xlu0 %723
      %725 = vrot.lane.b32.xlu0 %v227, 112
      %v726 = vpop.permute.xlu0 %725
      %727 = vrot.lane.b32.xlu0 %v228, 112
      %v728 = vpop.permute.xlu0 %727
      %729 = vrot.lane.b32.xlu0 %v229, 112
      %v730 = vpop.permute.xlu0 %729
      %731 = vrot.lane.b32.xlu0 %v230, 112
      %v732 = vpop.permute.xlu0 %731
      %733 = vrot.lane.b32.xlu0 %v231, 112
      %v734 = vpop.permute.xlu0 %733
      %735 = vrot.lane.b32.xlu0 %v232, 112
      %v736 = vpop.permute.xlu0 %735
      %v745 = vmax.f32 %v713, %v722
      %v746 = vmax.f32 %v714, %v724
      %v747 = vmax.f32 %v715, %v726
      %v748 = vmax.f32 %v716, %v728
      %v749 = vmax.f32 %v717, %v730
      %v750 = vmax.f32 %v718, %v732
      %v751 = vmax.f32 %v719, %v734
      %v752 = vmax.f32 %v720, %v736
      %753 = vrot.lane.b32.xlu0 %v225, 111
      %v754 = vpop.permute.xlu0 %753
      %755 = vrot.lane.b32.xlu0 %v226, 111
      %v756 = vpop.permute.xlu0 %755
      %757 = vrot.lane.b32.xlu0 %v227, 111
      %v758 = vpop.permute.xlu0 %757
      %759 = vrot.lane.b32.xlu0 %v228, 111
      %v760 = vpop.permute.xlu0 %759
      %761 = vrot.lane.b32.xlu0 %v229, 111
      %v762 = vpop.permute.xlu0 %761
      %763 = vrot.lane.b32.xlu0 %v230, 111
      %v764 = vpop.permute.xlu0 %763
      %765 = vrot.lane.b32.xlu0 %v231, 111
      %v766 = vpop.permute.xlu0 %765
      %767 = vrot.lane.b32.xlu0 %v232, 111
      %v768 = vpop.permute.xlu0 %767
      %v777 = vmax.f32 %v745, %v754
      %v778 = vmax.f32 %v746, %v756
      %v779 = vmax.f32 %v747, %v758
      %v780 = vmax.f32 %v748, %v760
      %v781 = vmax.f32 %v749, %v762
      %v782 = vmax.f32 %v750, %v764
      %v783 = vmax.f32 %v751, %v766
      %v784 = vmax.f32 %v752, %v768
      %785 = vrot.lane.b32.xlu0 %v225, 110
      %v786 = vpop.permute.xlu0 %785
      %787 = vrot.lane.b32.xlu0 %v226, 110
      %v788 = vpop.permute.xlu0 %787
      %789 = vrot.lane.b32.xlu0 %v227, 110
      %v790 = vpop.permute.xlu0 %789
      %791 = vrot.lane.b32.xlu0 %v228, 110
      %v792 = vpop.permute.xlu0 %791
      %793 = vrot.lane.b32.xlu0 %v229, 110
      %v794 = vpop.permute.xlu0 %793
      %795 = vrot.lane.b32.xlu0 %v230, 110
      %v796 = vpop.permute.xlu0 %795
      %797 = vrot.lane.b32.xlu0 %v231, 110
      %v798 = vpop.permute.xlu0 %797
      %799 = vrot.lane.b32.xlu0 %v232, 110
      %v800 = vpop.permute.xlu0 %799
      %v809 = vmax.f32 %v777, %v786
      %v810 = vmax.f32 %v778, %v788
      %v811 = vmax.f32 %v779, %v790
      %v812 = vmax.f32 %v780, %v792
      %v813 = vmax.f32 %v781, %v794
      %v814 = vmax.f32 %v782, %v796
      %v815 = vmax.f32 %v783, %v798
      %v816 = vmax.f32 %v784, %v800
      %817 = vrot.lane.b32.xlu0 %v225, 109
      %v818 = vpop.permute.xlu0 %817
      %819 = vrot.lane.b32.xlu0 %v226, 109
      %v820 = vpop.permute.xlu0 %819
      %821 = vrot.lane.b32.xlu0 %v227, 109
      %v822 = vpop.permute.xlu0 %821
      %823 = vrot.lane.b32.xlu0 %v228, 109
      %v824 = vpop.permute.xlu0 %823
      %825 = vrot.lane.b32.xlu0 %v229, 109
      %v826 = vpop.permute.xlu0 %825
      %827 = vrot.lane.b32.xlu0 %v230, 109
      %v828 = vpop.permute.xlu0 %827
      %829 = vrot.lane.b32.xlu0 %v231, 109
      %v830 = vpop.permute.xlu0 %829
      %831 = vrot.lane.b32.xlu0 %v232, 109
      %v832 = vpop.permute.xlu0 %831
      %v841 = vmax.f32 %v809, %v818
      %v842 = vmax.f32 %v810, %v820
      %v843 = vmax.f32 %v811, %v822
      %v844 = vmax.f32 %v812, %v824
      %v845 = vmax.f32 %v813, %v826
      %v846 = vmax.f32 %v814, %v828
      %v847 = vmax.f32 %v815, %v830
      %v848 = vmax.f32 %v816, %v832
      %849 = vrot.lane.b32.xlu0 %v225, 108
      %v850 = vpop.permute.xlu0 %849
      %851 = vrot.lane.b32.xlu0 %v226, 108
      %v852 = vpop.permute.xlu0 %851
      %853 = vrot.lane.b32.xlu0 %v227, 108
      %v854 = vpop.permute.xlu0 %853
      %855 = vrot.lane.b32.xlu0 %v228, 108
      %v856 = vpop.permute.xlu0 %855
      %857 = vrot.lane.b32.xlu0 %v229, 108
      %v858 = vpop.permute.xlu0 %857
      %859 = vrot.lane.b32.xlu0 %v230, 108
      %v860 = vpop.permute.xlu0 %859
      %861 = vrot.lane.b32.xlu0 %v231, 108
      %v862 = vpop.permute.xlu0 %861
      %863 = vrot.lane.b32.xlu0 %v232, 108
      %v864 = vpop.permute.xlu0 %863
      %v873 = vmax.f32 %v841, %v850
      %v874 = vmax.f32 %v842, %v852
      %v875 = vmax.f32 %v843, %v854
      %v876 = vmax.f32 %v844, %v856
      %v877 = vmax.f32 %v845, %v858
      %v878 = vmax.f32 %v846, %v860
      %v879 = vmax.f32 %v847, %v862
      %v880 = vmax.f32 %v848, %v864
      %881 = vrot.lane.b32.xlu0 %v225, 107
      %v882 = vpop.permute.xlu0 %881
      %883 = vrot.lane.b32.xlu0 %v226, 107
      %v884 = vpop.permute.xlu0 %883
      %885 = vrot.lane.b32.xlu0 %v227, 107
      %v886 = vpop.permute.xlu0 %885
      %887 = vrot.lane.b32.xlu0 %v228, 107
      %v888 = vpop.permute.xlu0 %887
      %889 = vrot.lane.b32.xlu0 %v229, 107
      %v890 = vpop.permute.xlu0 %889
      %891 = vrot.lane.b32.xlu0 %v230, 107
      %v892 = vpop.permute.xlu0 %891
      %893 = vrot.lane.b32.xlu0 %v231, 107
      %v894 = vpop.permute.xlu0 %893
      %895 = vrot.lane.b32.xlu0 %v232, 107
      %v896 = vpop.permute.xlu0 %895
      %v905 = vmax.f32 %v873, %v882
      %v906 = vmax.f32 %v874, %v884
      %v907 = vmax.f32 %v875, %v886
      %v908 = vmax.f32 %v876, %v888
      %v909 = vmax.f32 %v877, %v890
      %v910 = vmax.f32 %v878, %v892
      %v911 = vmax.f32 %v879, %v894
      %v912 = vmax.f32 %v880, %v896
      %913 = vrot.lane.b32.xlu0 %v225, 106
      %v914 = vpop.permute.xlu0 %913
      %915 = vrot.lane.b32.xlu0 %v226, 106
      %v916 = vpop.permute.xlu0 %915
      %917 = vrot.lane.b32.xlu0 %v227, 106
      %v918 = vpop.permute.xlu0 %917
      %919 = vrot.lane.b32.xlu0 %v228, 106
      %v920 = vpop.permute.xlu0 %919
      %921 = vrot.lane.b32.xlu0 %v229, 106
      %v922 = vpop.permute.xlu0 %921
      %923 = vrot.lane.b32.xlu0 %v230, 106
      %v924 = vpop.permute.xlu0 %923
      %925 = vrot.lane.b32.xlu0 %v231, 106
      %v926 = vpop.permute.xlu0 %925
      %927 = vrot.lane.b32.xlu0 %v232, 106
      %v928 = vpop.permute.xlu0 %927
      %v937 = vmax.f32 %v905, %v914
      %v938 = vmax.f32 %v906, %v916
      %v939 = vmax.f32 %v907, %v918
      %v940 = vmax.f32 %v908, %v920
      %v941 = vmax.f32 %v909, %v922
      %v942 = vmax.f32 %v910, %v924
      %v943 = vmax.f32 %v911, %v926
      %v944 = vmax.f32 %v912, %v928
      %945 = vrot.lane.b32.xlu0 %v225, 105
      %v946 = vpop.permute.xlu0 %945
      %947 = vrot.lane.b32.xlu0 %v226, 105
      %v948 = vpop.permute.xlu0 %947
      %949 = vrot.lane.b32.xlu0 %v227, 105
      %v950 = vpop.permute.xlu0 %949
      %951 = vrot.lane.b32.xlu0 %v228, 105
      %v952 = vpop.permute.xlu0 %951
      %953 = vrot.lane.b32.xlu0 %v229, 105
      %v954 = vpop.permute.xlu0 %953
      %955 = vrot.lane.b32.xlu0 %v230, 105
      %v956 = vpop.permute.xlu0 %955
      %957 = vrot.lane.b32.xlu0 %v231, 105
      %v958 = vpop.permute.xlu0 %957
      %959 = vrot.lane.b32.xlu0 %v232, 105
      %v960 = vpop.permute.xlu0 %959
      %v969 = vmax.f32 %v937, %v946
      %v970 = vmax.f32 %v938, %v948
      %v971 = vmax.f32 %v939, %v950
      %v972 = vmax.f32 %v940, %v952
      %v973 = vmax.f32 %v941, %v954
      %v974 = vmax.f32 %v942, %v956
      %v975 = vmax.f32 %v943, %v958
      %v976 = vmax.f32 %v944, %v960
      %977 = vrot.lane.b32.xlu0 %v225, 104
      %v978 = vpop.permute.xlu0 %977
      %979 = vrot.lane.b32.xlu0 %v226, 104
      %v980 = vpop.permute.xlu0 %979
      %981 = vrot.lane.b32.xlu0 %v227, 104
      %v982 = vpop.permute.xlu0 %981
      %983 = vrot.lane.b32.xlu0 %v228, 104
      %v984 = vpop.permute.xlu0 %983
      %985 = vrot.lane.b32.xlu0 %v229, 104
      %v986 = vpop.permute.xlu0 %985
      %987 = vrot.lane.b32.xlu0 %v230, 104
      %v988 = vpop.permute.xlu0 %987
      %989 = vrot.lane.b32.xlu0 %v231, 104
      %v990 = vpop.permute.xlu0 %989
      %991 = vrot.lane.b32.xlu0 %v232, 104
      %v992 = vpop.permute.xlu0 %991
      %v1001 = vmax.f32 %v969, %v978
      %v1002 = vmax.f32 %v970, %v980
      %v1003 = vmax.f32 %v971, %v982
      %v1004 = vmax.f32 %v972, %v984
      %v1005 = vmax.f32 %v973, %v986
      %v1006 = vmax.f32 %v974, %v988
      %v1007 = vmax.f32 %v975, %v990
      %v1008 = vmax.f32 %v976, %v992
      %v1009 = vld [vmem:[%s1] sm:$0xff]
      %v1010 = vld [vmem:[%s1 + $0x8] sm:$0xff]
      %v1011 = vld [vmem:[%s1 + $0x10] sm:$0xff]
      %v1012 = vld [vmem:[%s1 + $0x18] sm:$0xff]
      %v1013 = vld [vmem:[%s1 + $0x20] sm:$0xff]
      %v1014 = vld [vmem:[%s1 + $0x28] sm:$0xff]
      %v1015 = vld [vmem:[%s1 + $0x30] sm:$0xff]
      %v1016 = vld [vmem:[%s1 + $0x38] sm:$0xff]
      %v1017 = vld [vmem:[%s1 + $0x40] sm:$0xff]
      %v1018 = vld [vmem:[%s1 + $0x48] sm:$0xff]
      %vm1019 = vcmask 523264
      %v1021 = vsel %vm1019, %v1014, 0
      %v1024 = vsel %vm1019, %v1015, 0
      %v1027 = vsel %vm1019, %v1016, 0
      %v1030 = vsel %vm1019, %v1017, 0
      %v1033 = vsel %vm1019, %v1018, 0
      %1035 = vmatpush.msra.mxu0 0.0
      %1036 = vmatpush.msra.mxu0 0.0
      %1037 = vmatpush.msra.mxu0 0.0
      %1038 = vmatpush.msra.mxu0 0.0
      %1039 = vmatpush.msra.mxu0 0.0
      %1040 = vmatpush.msra.mxu0 0.0
      %1041 = vmatpush.msra.mxu0 0.0
      %1042 = vmatpush.msra.mxu0 0.0
      %1043 = vmatpush.msra.mxu0 %v256
      %1044 = vmatpush.msra.mxu0 %v254
      %1045 = vmatpush.msra.mxu0 %v252
      %1046 = vmatpush.msra.mxu0 %v250
      %1047 = vmatpush.msra.mxu0 %v248
      %1048 = vmatpush.msra.mxu0 %v246
      %1049 = vmatpush.msra.mxu0 %v244
      %1050 = vmatpush.msra.mxu0 %v242
      %1051 = vmatmul.f32.gmra.mxu0 %v1021
      %v1052 = vpop.f32.mrf.mxu0
      %v1053 = vadd.f32 0.0, %v1052
      %1054 = vmatmul.f32.gmra.mxu0 %v1024
      %v1055 = vpop.f32.mrf.mxu0
      %v1056 = vadd.f32 0.0, %v1055
      %1057 = vmatmul.f32.gmra.mxu0 %v1027
      %v1058 = vpop.f32.mrf.mxu0
      %v1059 = vadd.f32 0.0, %v1058
      %1060 = vmatmul.f32.gmra.mxu0 %v1030
      %v1061 = vpop.f32.mrf.mxu0
      %v1062 = vadd.f32 0.0, %v1061
      %1063 = vmatmul.f32.gmra.mxu0 %v1033
      %v1064 = vpop.f32.mrf.mxu0
      %v1065 = vadd.f32 0.0, %v1064
      %1066 = vdwg.mxu0
      %v1068 = vsel %vm1019, %v1009, 0
      %v1071 = vsel %vm1019, %v1010, 0
      %v1074 = vsel %vm1019, %v1011, 0
      %v1077 = vsel %vm1019, %v1012, 0
      %v1080 = vsel %vm1019, %v1013, 0
      %1082 = vmatpush.msra.mxu0 0.0
      %1083 = vmatpush.msra.mxu0 0.0
      %1084 = vmatpush.msra.mxu0 0.0
      %1085 = vmatpush.msra.mxu0 0.0
      %1086 = vmatpush.msra.mxu0 0.0
      %1087 = vmatpush.msra.mxu0 0.0
      %1088 = vmatpush.msra.mxu0 0.0
      %1089 = vmatpush.msra.mxu0 0.0
      %1090 = vmatpush.msra.mxu0 %v232
      %1091 = vmatpush.msra.mxu0 %v231
      %1092 = vmatpush.msra.mxu0 %v230
      %1093 = vmatpush.msra.mxu0 %v229
      %1094 = vmatpush.msra.mxu0 %v228
      %1095 = vmatpush.msra.mxu0 %v227
      %1096 = vmatpush.msra.mxu0 %v226
      %1097 = vmatpush.msra.mxu0 %v225
      %1098 = vmatmul.f32.gmra.mxu0 %v1068
      %v1099 = vpop.f32.mrf.mxu0
      %v1100 = vadd.f32 %v1053, %v1099
      %1101 = vmatmul.f32.gmra.mxu0 %v1071
      %v1102 = vpop.f32.mrf.mxu0
      %v1103 = vadd.f32 %v1056, %v1102
      %1104 = vmatmul.f32.gmra.mxu0 %v1074
      %v1105 = vpop.f32.mrf.mxu0
      %v1106 = vadd.f32 %v1059, %v1105
      %1107 = vmatmul.f32.gmra.mxu0 %v1077
      %v1108 = vpop.f32.mrf.mxu0
      %v1109 = vadd.f32 %v1062, %v1108
      %1110 = vmatmul.f32.gmra.mxu0 %v1080
      %v1111 = vpop.f32.mrf.mxu0
      %v1112 = vadd.f32 %v1065, %v1111
      %1113 = vdwg.mxu0
      %v1114 = vld [vmem:[%s2] sm:$0xff]
      %v1115 = vld [vmem:[%s2 + $0x8] sm:$0xff]
      %v1116 = vld [vmem:[%s2 + $0x10] sm:$0xff]
      %v1117 = vld [vmem:[%s2 + $0x18] sm:$0xff]
      %v1118 = vld [vmem:[%s2 + $0x20] sm:$0xff]
      %1120 = vset.pattern.permute.xlu0 0
      %1121 = vperm.xlu0 %1120, %v1114
      %v1122 = vpop.permute.xlu0 %1121
      %1125 = vset.pattern.permute.xlu0 0
      %1126 = vperm.xlu0 %1125, %v1115
      %v1127 = vpop.permute.xlu0 %1126
      %1130 = vset.pattern.permute.xlu0 0
      %1131 = vperm.xlu0 %1130, %v1116
      %v1132 = vpop.permute.xlu0 %1131
      %1135 = vset.pattern.permute.xlu0 0
      %1136 = vperm.xlu0 %1135, %v1117
      %v1137 = vpop.permute.xlu0 %1136
      %1140 = vset.pattern.permute.xlu0 0
      %1141 = vperm.xlu0 %1140, %v1118
      %v1142 = vpop.permute.xlu0 %1141
      %v1144 = vadd.f32 %v1100, %v1122
      %v1145 = vadd.f32 %v1103, %v1127
      %v1146 = vadd.f32 %v1106, %v1132
      %v1147 = vadd.f32 %v1109, %v1137
      %v1148 = vadd.f32 %v1112, %v1142
      %v1149 = vmax.f32 %v1144, 0.0
      %v1150 = vmax.f32 %v1145, 0.0
      %v1151 = vmax.f32 %v1146, 0.0
      %v1152 = vmax.f32 %v1147, 0.0
      %v1153 = vmax.f32 %v1148, 0.0
      %v1154 = vld [vmem:[%s3] sm:$0xff]
      %v1155 = vld [vmem:[%s3 + $0x8] sm:$0xf]
      %1158 = vrot.lane.b32.xlu0 %v1154, 88
      %v1159 = vpop.permute.xlu0 %1158
      %1160 = vrot.lane.b32.xlu0 %v1155, 88
      %v1161 = vpop.permute.xlu0 %1160
      %v1162 = vsel %vm1019, %v1159, 0
      %v1164 = vsel %vm1019, %v1161, 0
      %1166 = vmatpush.msra.mxu0 0.0
      %1167 = vmatpush.msra.mxu0 0.0
      %1168 = vmatpush.msra.mxu0 0.0
      %1169 = vmatpush.msra.mxu0 0.0
      %1170 = vmatpush.msra.mxu0 0.0
      %1171 = vmatpush.msra.mxu0 0.0
      %1172 = vmatpush.msra.mxu0 0.0
      %1173 = vmatpush.msra.mxu0 0.0
      %1174 = vmatpush.msra.mxu0 %v1008
      %1175 = vmatpush.msra.mxu0 %v1007
      %1176 = vmatpush.msra.mxu0 %v1006
      %1177 = vmatpush.msra.mxu0 %v1005
      %1178 = vmatpush.msra.mxu0 %v1004
      %1179 = vmatpush.msra.mxu0 %v1003
      %1180 = vmatpush.msra.mxu0 %v1002
      %1181 = vmatpush.msra.mxu0 %v1001
      %1182 = vmatmul.f32.gmra.mxu0 %v1162
      %v1183 = vpop.f32.mrf.mxu0
      %v1184 = vadd.f32 0.0, %v1183
      %1185 = vmatmul.f32.gmra.mxu0 %v1164
      %v1186 = vpop.f32.mrf.mxu0
      %v1187 = vadd.f32 0.0, %v1186
      %1188 = vdwg.mxu0
      %vm1189 = vcmask 326656
      %v1190 = vsel %vm1189, %v1154, 0
      %v1192 = vsel %vm1189, %v1155, 0
      %1194 = vmatpush.msra.mxu0 0.0
      %1195 = vmatpush.msra.mxu0 0.0
      %1196 = vmatpush.msra.mxu0 0.0
      %1197 = vmatpush.msra.mxu0 0.0
      %1198 = vmatpush.msra.mxu0 0.0
      %1199 = vmatpush.msra.mxu0 0.0
      %1200 = vmatpush.msra.mxu0 0.0
      %1201 = vmatpush.msra.mxu0 0.0
      %1202 = vmatpush.msra.mxu0 0.0
      %1203 = vmatpush.msra.mxu0 0.0
      %1204 = vmatpush.msra.mxu0 0.0
      %1205 = vmatpush.msra.mxu0 %v1153
      %1206 = vmatpush.msra.mxu0 %v1152
      %1207 = vmatpush.msra.mxu0 %v1151
      %1208 = vmatpush.msra.mxu0 %v1150
      %1209 = vmatpush.msra.mxu0 %v1149
      %1210 = vmatmul.f32.gmra.mxu0 %v1190
      %v1211 = vpop.f32.mrf.mxu0
      %v1212 = vadd.f32 %v1184, %v1211
      %1213 = vmatmul.f32.gmra.mxu0 %v1192
      %v1214 = vpop.f32.mrf.mxu0
      %v1215 = vadd.f32 %v1187, %v1214
      %1216 = vdwg.mxu0
      %v1217 = vld [vmem:[%s3 + $0xc] sm:$0xff]
      %v1218 = vld [vmem:[%s3 + $0x14] sm:$0xf]
      %1224 = vrot.lane.b32.xlu0 %v1149, 127
      %v1225 = vpop.permute.xlu0 %1224
      %1226 = vrot.lane.b32.xlu0 %v1150, 127
      %v1227 = vpop.permute.xlu0 %1226
      %1228 = vrot.lane.b32.xlu0 %v1151, 127
      %v1229 = vpop.permute.xlu0 %1228
      %1230 = vrot.lane.b32.xlu0 %v1152, 127
      %v1231 = vpop.permute.xlu0 %1230
      %1232 = vrot.lane.b32.xlu0 %v1153, 127
      %v1233 = vpop.permute.xlu0 %1232
      %v1240 = vsel %vm1189, %v1217, 0
      %v1243 = vsel %vm1189, %v1218, 0
      %1245 = vmatpush.msra.mxu0 0.0
      %1246 = vmatpush.msra.mxu0 0.0
      %1247 = vmatpush.msra.mxu0 0.0
      %1248 = vmatpush.msra.mxu0 0.0
      %1249 = vmatpush.msra.mxu0 0.0
      %1250 = vmatpush.msra.mxu0 0.0
      %1251 = vmatpush.msra.mxu0 0.0
      %1252 = vmatpush.msra.mxu0 0.0
      %1253 = vmatpush.msra.mxu0 0.0
      %1254 = vmatpush.msra.mxu0 0.0
      %1255 = vmatpush.msra.mxu0 0.0
      %1256 = vmatpush.msra.mxu0 %v1233
      %1257 = vmatpush.msra.mxu0 %v1231
      %1258 = vmatpush.msra.mxu0 %v1229
      %1259 = vmatpush.msra.mxu0 %v1227
      %1260 = vmatpush.msra.mxu0 %v1225
      %1261 = vmatmul.f32.gmra.mxu0 %v1240
      %v1262 = vpop.f32.mrf.mxu0
      %v1263 = vadd.f32 0.0, %v1262
      %1264 = vmatmul.f32.gmra.mxu0 %v1243
      %v1265 = vpop.f32.mrf.mxu0
      %v1266 = vadd.f32 0.0, %v1265
      %1267 = vdwg.mxu0
      %v1268 = vadd.f32 %v1212, %v1263
      %v1269 = vadd.f32 %v1215, %v1266
      %1270 = vrot.lane.b32.xlu0 %v1217, 88
      %v1271 = vpop.permute.xlu0 %1270
      %1272 = vrot.lane.b32.xlu0 %v1218, 88
      %v1273 = vpop.permute.xlu0 %1272
      %1282 = vrot.lane.b32.xlu0 %v1001, 127
      %v1283 = vpop.permute.xlu0 %1282
      %1284 = vrot.lane.b32.xlu0 %v1002, 127
      %v1285 = vpop.permute.xlu0 %1284
      %1286 = vrot.lane.b32.xlu0 %v1003, 127
      %v1287 = vpop.permute.xlu0 %1286
      %1288 = vrot.lane.b32.xlu0 %v1004, 127
      %v1289 = vpop.permute.xlu0 %1288
      %1290 = vrot.lane.b32.xlu0 %v1005, 127
      %v1291 = vpop.permute.xlu0 %1290
      %1292 = vrot.lane.b32.xlu0 %v1006, 127
      %v1293 = vpop.permute.xlu0 %1292
      %1294 = vrot.lane.b32.xlu0 %v1007, 127
      %v1295 = vpop.permute.xlu0 %1294
      %1296 = vrot.lane.b32.xlu0 %v1008, 127
      %v1297 = vpop.permute.xlu0 %1296
      %v1306 = vsel %vm1019, %v1271, 0
      %v1308 = vsel %vm1019, %v1273, 0
      %1310 = vmatpush.msra.mxu0 0.0
      %1311 = vmatpush.msra.mxu0 0.0
      %1312 = vmatpush.msra.mxu0 0.0
      %1313 = vmatpush.msra.mxu0 0.0
      %1314 = vmatpush.msra.mxu0 0.0
      %1315 = vmatpush.msra.mxu0 0.0
      %1316 = vmatpush.msra.mxu0 0.0
      %1317 = vmatpush.msra.mxu0 0.0
      %1318 = vmatpush.msra.mxu0 %v1297
      %1319 = vmatpush.msra.mxu0 %v1295
      %1320 = vmatpush.msra.mxu0 %v1293
      %1321 = vmatpush.msra.mxu0 %v1291
      %1322 = vmatpush.msra.mxu0 %v1289
      %1323 = vmatpush.msra.mxu0 %v1287
      %1324 = vmatpush.msra.mxu0 %v1285
      %1325 = vmatpush.msra.mxu0 %v1283
      %1326 = vmatmul.f32.gmra.mxu0 %v1306
      %v1327 = vpop.f32.mrf.mxu0
      %v1328 = vadd.f32 0.0, %v1327
      %1329 = vmatmul.f32.gmra.mxu0 %v1308
      %v1330 = vpop.f32.mrf.mxu0
      %v1331 = vadd.f32 0.0, %v1330
      %1332 = vdwg.mxu0
      %v1333 = vadd.f32 %v1268, %v1328
      %v1334 = vadd.f32 %v1269, %v1331
      %v1335 = vld [vmem:[%s4] sm:$0xff]
      %v1336 = vld [vmem:[%s4 + $0x8] sm:$0xf]
      %1338 = vset.pattern.permute.xlu0 0
      %1339 = vperm.xlu0 %1338, %v1335
      %v1340 = vpop.permute.xlu0 %1339
      %1343 = vset.pattern.permute.xlu0 0
      %1344 = vperm.xlu0 %1343, %v1336
      %v1345 = vpop.permute.xlu0 %1344
      %v1347 = vadd.f32 %v1333, %v1340
      %v1348 = vadd.f32 %v1334, %v1345
      %v1349 = vmax.f32 %v1347, 0.0
      %v1350 = vmax.f32 %v1348, 0.0
      %vm1351 = vcmask 171008
      %1352 = vst.msk [vmem:[%s224] sm:$0xff] %vm1351, %v1349
      %vm1353 = vcmask 166912
      %1354 = vst.msk [vmem:[%s224 + $0x8] sm:$0xf] %vm1353, %v1350
      %p1355 = scmp.lt.s32.totalorder %s16, 1
      %s1356 = scalar_select %p1355, %s16, 1
      %s1357 = smul.addr %s1356, 2
      %s1358 = smul.addr %s1357, 8
      %s1359 = scalar_lea.vmem %s5, %s1358
      // Predicated region
      $region41: #{tln_forward.6} parent=39 // pred_check
        %p1360 = pneg %p144
      $region42: #{tln_forward.6} parent=39 // pred_check_branch
        %1362 = sbr.rel (%p1360) target = $region44
      $region43: #{tln_forward.6} parent=39 // pred_region
        _
      $region44: #{tln_forward.6} parent=39 // pred_fallthru
        _
    $region40: #{tln_forward.6} parent=5 // pred_fallthru
      _
    %p1363 = scmp.le.s32.totalorder 2, %s11
    // Predicated region
    $region45: #{tln_forward.6} parent=5 // pred_check
      %p1364 = pneg %p1363
    $region46: #{tln_forward.6} parent=5 // pred_check_branch
      %1366 = sbr.rel (%p1364) target = $region48
    $region47: #{tln_forward.6} parent=5 // pred_region
      %s1367 = ssub.s32 %s11, 2
      // Predicated region
      $region49: #{tln_forward.6} parent=47 // pred_check
        %p1368 = pneg %p150
      $region50: #{tln_forward.6} parent=47 // pred_check_branch
        %1370 = sbr.rel (%p1368) target = $region52
      $region51: #{tln_forward.6} parent=47 // pred_region
        %p1371 = scmp.lt.s32.totalorder %s17, 1
        %s1372 = scalar_select %p1371, %s17, 1
        %s1373 = smul.addr %s1372, 2
        %s1374 = smul.addr %s1373, 8
        %s1375 = scalar_lea.vmem %s5, %s1374
      $region52: #{tln_forward.6} parent=47 // pred_fallthru
        _
    $region48: #{tln_forward.6} parent=5 // pred_fallthru
      _
  $region6: #{tln_forward.6} parent=0 // loop_footer
    %s15 = sadd.s32 1, %s11
  $region7: #{tln_forward.6} parent=0 // loop_footer_branch
    %10 = sbr.rel target = $region3
  $region8: #{tln_forward.6} parent=0 // loop_exit
    _

// kernel: tln_forward.5
$region0: #{tln_forward.5}
  #allocation0 [shape = 'u32[]', space=smem, size = 0x4, offset = 0x4, fixed_abs, tag = 'smem constant byte address 0x4 - core index']
  #allocation1 [shape = 'u32[72,128]{1,0:T(1,128)}', space=vmem, size = 0x9000, scoped, tag = 'internal scratch']
  %s0 = inlined_call_operand.vmem [shape: f32[2,32,23], index: 0, kind: input, shape index: {}]
  %s1 = inlined_call_operand.vmem [shape: f32[192,32], index: 1, kind: input, shape index: {}]
  %s2 = inlined_call_operand.vmem [shape: f32[64,1], index: 2, kind: input, shape index: {}]
  %s3 = inlined_call_operand.vmem [shape: f32[3,23,23], index: 3, kind: input, shape index: {}]
  %s4 = inlined_call_operand.vmem [shape: f32[21,11], index: 4, kind: input, shape index: {}]
  %s5 = inlined_call_operand.vmem [shape: f32[96,64], index: 5, kind: input, shape index: {}]
  %s6 = inlined_call_operand.vmem [shape: f32[32,1], index: 6, kind: input, shape index: {}]
  %s7 = inlined_call_operand.vmem [shape: f32[3,11,11], index: 7, kind: input, shape index: {}]
  %s8 = inlined_call_operand.vmem [shape: f32[9,5], index: 8, kind: input, shape index: {}]
  %s9 = inlined_call_operand.vmem [shape: f32[5,10], index: 9, kind: input, shape index: {}]
  %s10 = inlined_call_operand.vmem [shape: f32[192,32], index: 10, kind: input, shape index: {}]
  %s11 = inlined_call_operand.vmem [shape: f32[64,1], index: 11, kind: input, shape index: {}]
  %s12 = inlined_call_operand.vmem [shape: f32[3,10,12], index: 12, kind: input, shape index: {}]
  %s13 = inlined_call_operand.vmem [shape: f32[12,24], index: 13, kind: input, shape index: {}]
  %s14 = inlined_call_operand.vmem [shape: f32[96,64], index: 14, kind: input, shape index: {}]
  %s15 = inlined_call_operand.vmem [shape: f32[32,1], index: 15, kind: input, shape index: {}]
  %s16 = inlined_call_operand.vmem [shape: f32[3,24,26], index: 16, kind: input, shape index: {}]
  %s17 = inlined_call_operand.vmem [shape: f32[2,64,47], index: 17, kind: output, shape index: {}]
  %s18 = sld [smem:[#allocation0]]
  $region101: #{tln_forward.5} parent=0
    _
  %s20 = ssub.s32 1, %s18
  %s21 = scalar_select 0, %s20, %s18
  loop: start=0, step=1, limit=4
  $region2: #{tln_forward.5} parent=0 // loop_pre_header
    _
  $region3: #{tln_forward.5} parent=0 // loop_header
    %s23 = sphi 0, %s27
    %p24 = scmp.ge.s32.totalorder %s23, 4
    %s33 = sphi 0, %s35
    %s36 = sphi 0, %s33
    %s37 = sphi 0, %s36
    %s53 = sphi 0, %s37
    %s57 = sphi 0, %s57
    %s59 = sphi 0, %s57
    %s60 = sphi 0, %s59
    %s74 = sphi 0, %s60
    %s78 = sphi 0, %s78
    %s80 = sphi 0, %s78
    %s81 = sphi 0, %s80
    %s95 = sphi 0, %s81
    %s99 = sphi 0, %s99
    %s101 = sphi 0, %s99
    %s102 = sphi 0, %s101
    %s116 = sphi 0, %s102
    %s120 = sphi 0, %s120
    %s122 = sphi 0, %s120
    %s123 = sphi 0, %s122
    %s137 = sphi 0, %s123
    %s141 = sphi 0, %s141
    %s143 = sphi 0, %s141
    %s144 = sphi 0, %s143
    %s158 = sphi 0, %s144
    %s162 = sphi 0, %s162
    %s164 = sphi 0, %s162
    %s165 = sphi 0, %s164
    %s179 = sphi 0, %s165
    %s183 = sphi 0, %s183
    %s185 = sphi 0, %s183
    %s186 = sphi 0, %s185
    %s200 = sphi 0, %s186
    %s204 = sphi 0, %s204
    %s206 = sphi 0, %s204
    %s207 = sphi 0, %s206
    %s221 = sphi 0, %s207
    %s225 = sphi 0, %s225
    %s227 = sphi 0, %s225
    %s228 = sphi 0, %s227
    %s242 = sphi 0, %s228
    %s246 = sphi 0, %s246
    %s248 = sphi 0, %s246
    %s249 = sphi 0, %s248
    %s263 = sphi 0, %s249
    %s267 = sphi 0, %s267
    %s269 = sphi 0, %s267
    %s270 = sphi 0, %s269
    %s284 = sphi 0, %s270
    %s288 = sphi 0, %s288
    %s290 = sphi 0, %s288
    %s291 = sphi 0, %s290
    %s305 = sphi 0, %s291
    %s309 = sphi 0, %s309
    %s311 = sphi 0, %s309
    %s312 = sphi 0, %s311
    %s326 = sphi 0, %s312
    %s330 = sphi 0, %s330
    %s332 = sphi 0, %s330
    %s333 = sphi 0, %s332
    %s347 = sphi 0, %s333
    %s351 = sphi 0, %s351
    %s353 = sphi 0, %s351
    %s354 = sphi 0, %s353
    %s368 = sphi 0, %s354
    %s372 = sphi 0, %s372
    %s374 = sphi 0, %s372
    %s375 = sphi 0, %s374
    %s389 = sphi 0, %s375
    %s395 = sphi 0, %s397
    %s398 = sphi 0, %s395
    %s399 = sphi 0, %s398
    %s415 = sphi 0, %s399
  $region4: #{tln_forward.5} parent=0 // loop_header_branch
    %26 = sbr.rel (%p24) target = $region8
  $region5: #{tln_forward.5} parent=0 // loop_body
    %s28 = ssub.s32 %s23, 1
    %s29 = ssub.s32 %s23, 2
    %s30 = sadd.s32 %s23, 1
    %s31 = ssub.s32 %s23, %s30
    %p32 = scmp.eq.s32.totalorder %s31, 0
    %s34 = sadd.s32 %s33, 1
    %s35 = scalar_select %p32, %s33, %s34
    %p38 = pneg %p32
    %p39 = scmp.eq.s32.totalorder %s23, 1
    %p40 = por %p38, %p39
    %p41 = scmp.ne.s32.totalorder %s33, %s36
    %p42 = scmp.eq.s32.totalorder %s23, 0
    %p43 = por %p41, %p42
    %p44 = scmp.ne.s32.totalorder %s33, %s36
    %p45 = scmp.eq.s32.totalorder %s28, 1
    %p46 = por %p44, %p45
    %p47 = scmp.ne.s32.totalorder %s36, %s37
    %p48 = scmp.eq.s32.totalorder %s28, 0
    %p49 = por %p47, %p48
    %p50 = scmp.ne.s32.totalorder %s36, %s37
    %p51 = scmp.eq.s32.totalorder %s29, 1
    %p52 = por %p50, %p51
    %p54 = scmp.ne.s32.totalorder %s37, %s53
    %p55 = scmp.eq.s32.totalorder %s29, 0
    %p56 = por %p54, %p55
    %s58 = sadd.s32 %s57, 1
    %p61 = scmp.eq.s32.totalorder %s23, 1
    %p62 = scmp.ne.s32.totalorder %s57, %s59
    %p63 = scmp.eq.s32.totalorder %s23, 0
    %p64 = por %p62, %p63
    %p65 = scmp.ne.s32.totalorder %s57, %s59
    %p66 = scmp.eq.s32.totalorder %s28, 1
    %p67 = por %p65, %p66
    %p68 = scmp.ne.s32.totalorder %s59, %s60
    %p69 = scmp.eq.s32.totalorder %s28, 0
    %p70 = por %p68, %p69
    %p71 = scmp.ne.s32.totalorder %s59, %s60
    %p72 = scmp.eq.s32.totalorder %s29, 1
    %p73 = por %p71, %p72
    %p75 = scmp.ne.s32.totalorder %s60, %s74
    %p76 = scmp.eq.s32.totalorder %s29, 0
    %p77 = por %p75, %p76
    %s79 = sadd.s32 %s78, 1
    %p82 = scmp.eq.s32.totalorder %s23, 1
    %p83 = scmp.ne.s32.totalorder %s78, %s80
    %p84 = scmp.eq.s32.totalorder %s23, 0
    %p85 = por %p83, %p84
    %p86 = scmp.ne.s32.totalorder %s78, %s80
    %p87 = scmp.eq.s32.totalorder %s28, 1
    %p88 = por %p86, %p87
    %p89 = scmp.ne.s32.totalorder %s80, %s81
    %p90 = scmp.eq.s32.totalorder %s28, 0
    %p91 = por %p89, %p90
    %p92 = scmp.ne.s32.totalorder %s80, %s81
    %p93 = scmp.eq.s32.totalorder %s29, 1
    %p94 = por %p92, %p93
    %p96 = scmp.ne.s32.totalorder %s81, %s95
    %p97 = scmp.eq.s32.totalorder %s29, 0
    %p98 = por %p96, %p97
    %s100 = sadd.s32 %s99, 1
    %p103 = scmp.eq.s32.totalorder %s23, 1
    %p104 = scmp.ne.s32.totalorder %s99, %s101
    %p105 = scmp.eq.s32.totalorder %s23, 0
    %p106 = por %p104, %p105
    %p107 = scmp.ne.s32.totalorder %s99, %s101
    %p108 = scmp.eq.s32.totalorder %s28, 1
    %p109 = por %p107, %p108
    %p110 = scmp.ne.s32.totalorder %s101, %s102
    %p111 = scmp.eq.s32.totalorder %s28, 0
    %p112 = por %p110, %p111
    %p113 = scmp.ne.s32.totalorder %s101, %s102
    %p114 = scmp.eq.s32.totalorder %s29, 1
    %p115 = por %p113, %p114
    %p117 = scmp.ne.s32.totalorder %s102, %s116
    %p118 = scmp.eq.s32.totalorder %s29, 0
    %p119 = por %p117, %p118
    %s121 = sadd.s32 %s120, 1
    %p124 = scmp.eq.s32.totalorder %s23, 1
    %p125 = scmp.ne.s32.totalorder %s120, %s122
    %p126 = scmp.eq.s32.totalorder %s23, 0
    %p127 = por %p125, %p126
    %p128 = scmp.ne.s32.totalorder %s120, %s122
    %p129 = scmp.eq.s32.totalorder %s28, 1
    %p130 = por %p128, %p129
    %p131 = scmp.ne.s32.totalorder %s122, %s123
    %p132 = scmp.eq.s32.totalorder %s28, 0
    %p133 = por %p131, %p132
    %p134 = scmp.ne.s32.totalorder %s122, %s123
    %p135 = scmp.eq.s32.totalorder %s29, 1
    %p136 = por %p134, %p135
    %p138 = scmp.ne.s32.totalorder %s123, %s137
    %p139 = scmp.eq.s32.totalorder %s29, 0
    %p140 = por %p138, %p139
    %s142 = sadd.s32 %s141, 1
    %p145 = scmp.eq.s32.totalorder %s23, 1
    %p146 = scmp.ne.s32.totalorder %s141, %s143
    %p147 = scmp.eq.s32.totalorder %s23, 0
    %p148 = por %p146, %p147
    %p149 = scmp.ne.s32.totalorder %s141, %s143
    %p150 = scmp.eq.s32.totalorder %s28, 1
    %p151 = por %p149, %p150
    %p152 = scmp.ne.s32.totalorder %s143, %s144
    %p153 = scmp.eq.s32.totalorder %s28, 0
    %p154 = por %p152, %p153
    %p155 = scmp.ne.s32.totalorder %s143, %s144
    %p156 = scmp.eq.s32.totalorder %s29, 1
    %p157 = por %p155, %p156
    %p159 = scmp.ne.s32.totalorder %s144, %s158
    %p160 = scmp.eq.s32.totalorder %s29, 0
    %p161 = por %p159, %p160
    %s163 = sadd.s32 %s162, 1
    %p166 = scmp.eq.s32.totalorder %s23, 1
    %p167 = scmp.ne.s32.totalorder %s162, %s164
    %p168 = scmp.eq.s32.totalorder %s23, 0
    %p169 = por %p167, %p168
    %p170 = scmp.ne.s32.totalorder %s162, %s164
    %p171 = scmp.eq.s32.totalorder %s28, 1
    %p172 = por %p170, %p171
    %p173 = scmp.ne.s32.totalorder %s164, %s165
    %p174 = scmp.eq.s32.totalorder %s28, 0
    %p175 = por %p173, %p174
    %p176 = scmp.ne.s32.totalorder %s164, %s165
    %p177 = scmp.eq.s32.totalorder %s29, 1
    %p178 = por %p176, %p177
    %p180 = scmp.ne.s32.totalorder %s165, %s179
    %p181 = scmp.eq.s32.totalorder %s29, 0
    %p182 = por %p180, %p181
    %s184 = sadd.s32 %s183, 1
    %p187 = scmp.eq.s32.totalorder %s23, 1
    %p188 = scmp.ne.s32.totalorder %s183, %s185
    %p189 = scmp.eq.s32.totalorder %s23, 0
    %p190 = por %p188, %p189
    %p191 = scmp.ne.s32.totalorder %s183, %s185
    %p192 = scmp.eq.s32.totalorder %s28, 1
    %p193 = por %p191, %p192
    %p194 = scmp.ne.s32.totalorder %s185, %s186
    %p195 = scmp.eq.s32.totalorder %s28, 0
    %p196 = por %p194, %p195
    %p197 = scmp.ne.s32.totalorder %s185, %s186
    %p198 = scmp.eq.s32.totalorder %s29, 1
    %p199 = por %p197, %p198
    %p201 = scmp.ne.s32.totalorder %s186, %s200
    %p202 = scmp.eq.s32.totalorder %s29, 0
    %p203 = por %p201, %p202
    %s205 = sadd.s32 %s204, 1
    %p208 = scmp.eq.s32.totalorder %s23, 1
    %p209 = scmp.ne.s32.totalorder %s204, %s206
    %p210 = scmp.eq.s32.totalorder %s23, 0
    %p211 = por %p209, %p210
    %p212 = scmp.ne.s32.totalorder %s204, %s206
    %p213 = scmp.eq.s32.totalorder %s28, 1
    %p214 = por %p212, %p213
    %p215 = scmp.ne.s32.totalorder %s206, %s207
    %p216 = scmp.eq.s32.totalorder %s28, 0
    %p217 = por %p215, %p216
    %p218 = scmp.ne.s32.totalorder %s206, %s207
    %p219 = scmp.eq.s32.totalorder %s29, 1
    %p220 = por %p218, %p219
    %p222 = scmp.ne.s32.totalorder %s207, %s221
    %p223 = scmp.eq.s32.totalorder %s29, 0
    %p224 = por %p222, %p223
    %s226 = sadd.s32 %s225, 1
    %p229 = scmp.eq.s32.totalorder %s23, 1
    %p230 = scmp.ne.s32.totalorder %s225, %s227
    %p231 = scmp.eq.s32.totalorder %s23, 0
    %p232 = por %p230, %p231
    %p233 = scmp.ne.s32.totalorder %s225, %s227
    %p234 = scmp.eq.s32.totalorder %s28, 1
    %p235 = por %p233, %p234
    %p236 = scmp.ne.s32.totalorder %s227, %s228
    %p237 = scmp.eq.s32.totalorder %s28, 0
    %p238 = por %p236, %p237
    %p239 = scmp.ne.s32.totalorder %s227, %s228
    %p240 = scmp.eq.s32.totalorder %s29, 1
    %p241 = por %p239, %p240
    %p243 = scmp.ne.s32.totalorder %s228, %s242
    %p244 = scmp.eq.s32.totalorder %s29, 0
    %p245 = por %p243, %p244
    %s247 = sadd.s32 %s246, 1
    %p250 = scmp.eq.s32.totalorder %s23, 1
    %p251 = scmp.ne.s32.totalorder %s246, %s248
    %p252 = scmp.eq.s32.totalorder %s23, 0
    %p253 = por %p251, %p252
    %p254 = scmp.ne.s32.totalorder %s246, %s248
    %p255 = scmp.eq.s32.totalorder %s28, 1
    %p256 = por %p254, %p255
    %p257 = scmp.ne.s32.totalorder %s248, %s249
    %p258 = scmp.eq.s32.totalorder %s28, 0
    %p259 = por %p257, %p258
    %p260 = scmp.ne.s32.totalorder %s248, %s249
    %p261 = scmp.eq.s32.totalorder %s29, 1
    %p262 = por %p260, %p261
    %p264 = scmp.ne.s32.totalorder %s249, %s263
    %p265 = scmp.eq.s32.totalorder %s29, 0
    %p266 = por %p264, %p265
    %s268 = sadd.s32 %s267, 1
    %p271 = scmp.eq.s32.totalorder %s23, 1
    %p272 = scmp.ne.s32.totalorder %s267, %s269
    %p273 = scmp.eq.s32.totalorder %s23, 0
    %p274 = por %p272, %p273
    %p275 = scmp.ne.s32.totalorder %s267, %s269
    %p276 = scmp.eq.s32.totalorder %s28, 1
    %p277 = por %p275, %p276
    %p278 = scmp.ne.s32.totalorder %s269, %s270
    %p279 = scmp.eq.s32.totalorder %s28, 0
    %p280 = por %p278, %p279
    %p281 = scmp.ne.s32.totalorder %s269, %s270
    %p282 = scmp.eq.s32.totalorder %s29, 1
    %p283 = por %p281, %p282
    %p285 = scmp.ne.s32.totalorder %s270, %s284
    %p286 = scmp.eq.s32.totalorder %s29, 0
    %p287 = por %p285, %p286
    %s289 = sadd.s32 %s288, 1
    %p292 = scmp.eq.s32.totalorder %s23, 1
    %p293 = scmp.ne.s32.totalorder %s288, %s290
    %p294 = scmp.eq.s32.totalorder %s23, 0
    %p295 = por %p293, %p294
    %p296 = scmp.ne.s32.totalorder %s288, %s290
    %p297 = scmp.eq.s32.totalorder %s28, 1
    %p298 = por %p296, %p297
    %p299 = scmp.ne.s32.totalorder %s290, %s291
    %p300 = scmp.eq.s32.totalorder %s28, 0
    %p301 = por %p299, %p300
    %p302 = scmp.ne.s32.totalorder %s290, %s291
    %p303 = scmp.eq.s32.totalorder %s29, 1
    %p304 = por %p302, %p303
    %p306 = scmp.ne.s32.totalorder %s291, %s305
    %p307 = scmp.eq.s32.totalorder %s29, 0
    %p308 = por %p306, %p307
    %s310 = sadd.s32 %s309, 1
    %p313 = scmp.eq.s32.totalorder %s23, 1
    %p314 = scmp.ne.s32.totalorder %s309, %s311
    %p315 = scmp.eq.s32.totalorder %s23, 0
    %p316 = por %p314, %p315
    %p317 = scmp.ne.s32.totalorder %s309, %s311
    %p318 = scmp.eq.s32.totalorder %s28, 1
    %p319 = por %p317, %p318
    %p320 = scmp.ne.s32.totalorder %s311, %s312
    %p321 = scmp.eq.s32.totalorder %s28, 0
    %p322 = por %p320, %p321
    %p323 = scmp.ne.s32.totalorder %s311, %s312
    %p324 = scmp.eq.s32.totalorder %s29, 1
    %p325 = por %p323, %p324
    %p327 = scmp.ne.s32.totalorder %s312, %s326
    %p328 = scmp.eq.s32.totalorder %s29, 0
    %p329 = por %p327, %p328
    %s331 = sadd.s32 %s330, 1
    %p334 = scmp.eq.s32.totalorder %s23, 1
    %p335 = scmp.ne.s32.totalorder %s330, %s332
    %p336 = scmp.eq.s32.totalorder %s23, 0
    %p337 = por %p335, %p336
    %p338 = scmp.ne.s32.totalorder %s330, %s332
    %p339 = scmp.eq.s32.totalorder %s28, 1
    %p340 = por %p338, %p339
    %p341 = scmp.ne.s32.totalorder %s332, %s333
    %p342 = scmp.eq.s32.totalorder %s28, 0
    %p343 = por %p341, %p342
    %p344 = scmp.ne.s32.totalorder %s332, %s333
    %p345 = scmp.eq.s32.totalorder %s29, 1
    %p346 = por %p344, %p345
    %p348 = scmp.ne.s32.totalorder %s333, %s347
    %p349 = scmp.eq.s32.totalorder %s29, 0
    %p350 = por %p348, %p349
    %s352 = sadd.s32 %s351, 1
    %p355 = scmp.eq.s32.totalorder %s23, 1
    %p356 = scmp.ne.s32.totalorder %s351, %s353
    %p357 = scmp.eq.s32.totalorder %s23, 0
    %p358 = por %p356, %p357
    %p359 = scmp.ne.s32.totalorder %s351, %s353
    %p360 = scmp.eq.s32.totalorder %s28, 1
    %p361 = por %p359, %p360
    %p362 = scmp.ne.s32.totalorder %s353, %s354
    %p363 = scmp.eq.s32.totalorder %s28, 0
    %p364 = por %p362, %p363
    %p365 = scmp.ne.s32.totalorder %s353, %s354
    %p366 = scmp.eq.s32.totalorder %s29, 1
    %p367 = por %p365, %p366
    %p369 = scmp.ne.s32.totalorder %s354, %s368
    %p370 = scmp.eq.s32.totalorder %s29, 0
    %p371 = por %p369, %p370
    %s373 = sadd.s32 %s372, 1
    %p376 = scmp.eq.s32.totalorder %s23, 1
    %p377 = scmp.ne.s32.totalorder %s372, %s374
    %p378 = scmp.eq.s32.totalorder %s23, 0
    %p379 = por %p377, %p378
    %p380 = scmp.ne.s32.totalorder %s372, %s374
    %p381 = scmp.eq.s32.totalorder %s28, 1
    %p382 = por %p380, %p381
    %p383 = scmp.ne.s32.totalorder %s374, %s375
    %p384 = scmp.eq.s32.totalorder %s28, 0
    %p385 = por %p383, %p384
    %p386 = scmp.ne.s32.totalorder %s374, %s375
    %p387 = scmp.eq.s32.totalorder %s29, 1
    %p388 = por %p386, %p387
    %p390 = scmp.ne.s32.totalorder %s375, %s389
    %p391 = scmp.eq.s32.totalorder %s29, 0
    %p392 = por %p390, %p391
    %s393 = ssub.s32 %s23, %s30
    %p394 = scmp.eq.s32.totalorder %s393, 0
    %s396 = sadd.s32 %s395, 1
    %s397 = scalar_select %p394, %s395, %s396
    %p400 = pneg %p394
    %p401 = scmp.eq.s32.totalorder %s23, 1
    %p402 = por %p400, %p401
    %p403 = scmp.ne.s32.totalorder %s395, %s398
    %p404 = scmp.eq.s32.totalorder %s23, 0
    %p405 = por %p403, %p404
    %p406 = scmp.ne.s32.totalorder %s395, %s398
    %p407 = scmp.eq.s32.totalorder %s28, 1
    %p408 = por %p406, %p407
    %p409 = scmp.ne.s32.totalorder %s398, %s399
    %p410 = scmp.eq.s32.totalorder %s28, 0
    %p411 = por %p409, %p410
    %p412 = scmp.ne.s32.totalorder %s398, %s399
    %p413 = scmp.eq.s32.totalorder %s29, 1
    %p414 = por %p412, %p413
    %p416 = scmp.ne.s32.totalorder %s399, %s415
    %p417 = scmp.eq.s32.totalorder %s29, 0
    %p418 = por %p416, %p417
    %p419 = scmp.le.s32.totalorder 1, %s23
    %p420 = scmp.lt.s32.totalorder %s23, 3
    %p421 = pnand %p419, %p420
    %p422 = pneg %p421
    // Predicated region
    $region9: #{tln_forward.5} parent=5 // pred_check
      _
    $region10: #{tln_forward.5} parent=5 // pred_check_branch
      %424 = sbr.rel (%p421) target = $region12
    $region11: #{tln_forward.5} parent=5 // pred_region
      %s425 = ssub.s32 %s23, 1
      // Predicated region
      $region13: #{tln_forward.5} parent=11 // pred_check
        %p426 = pneg %p70
      $region14: #{tln_forward.5} parent=11 // pred_check_branch
        %428 = sbr.rel (%p426) target = $region16
      $region15: #{tln_forward.5} parent=11 // pred_region
        _
      $region16: #{tln_forward.5} parent=11 // pred_fallthru
        _
      // Predicated region
      $region17: #{tln_forward.5} parent=11 // pred_check
        %p429 = pneg %p91
      $region18: #{tln_forward.5} parent=11 // pred_check_branch
        %431 = sbr.rel (%p429) target = $region20
      $region19: #{tln_forward.5} parent=11 // pred_region
        _
      $region20: #{tln_forward.5} parent=11 // pred_fallthru
        _
      // Predicated region
      $region21: #{tln_forward.5} parent=11 // pred_check
        %p432 = pneg %p112
      $region22: #{tln_forward.5} parent=11 // pred_check_branch
        %434 = sbr.rel (%p432) target = $region24
      $region23: #{tln_forward.5} parent=11 // pred_region
        _
      $region24: #{tln_forward.5} parent=11 // pred_fallthru
        _
      // Predicated region
      $region25: #{tln_forward.5} parent=11 // pred_check
        %p435 = pneg %p133
      $region26: #{tln_forward.5} parent=11 // pred_check_branch
        %437 = sbr.rel (%p435) target = $region28
      $region27: #{tln_forward.5} parent=11 // pred_region
        _
      $region28: #{tln_forward.5} parent=11 // pred_fallthru
        _
      // Predicated region
      $region29: #{tln_forward.5} parent=11 // pred_check
        %p438 = pneg %p154
      $region30: #{tln_forward.5} parent=11 // pred_check_branch
        %440 = sbr.rel (%p438) target = $region32
      $region31: #{tln_forward.5} parent=11 // pred_region
        _
      $region32: #{tln_forward.5} parent=11 // pred_fallthru
        _
      // Predicated region
      $region33: #{tln_forward.5} parent=11 // pred_check
        %p441 = pneg %p175
      $region34: #{tln_forward.5} parent=11 // pred_check_branch
        %443 = sbr.rel (%p441) target = $region36
      $region35: #{tln_forward.5} parent=11 // pred_region
        _
      $region36: #{tln_forward.5} parent=11 // pred_fallthru
        _
      // Predicated region
      $region37: #{tln_forward.5} parent=11 // pred_check
        %p444 = pneg %p196
      $region38: #{tln_forward.5} parent=11 // pred_check_branch
        %446 = sbr.rel (%p444) target = $region40
      $region39: #{tln_forward.5} parent=11 // pred_region
        _
      $region40: #{tln_forward.5} parent=11 // pred_fallthru
        _
      // Predicated region
      $region41: #{tln_forward.5} parent=11 // pred_check
        %p447 = pneg %p217
      $region42: #{tln_forward.5} parent=11 // pred_check_branch
        %449 = sbr.rel (%p447) target = $region44
      $region43: #{tln_forward.5} parent=11 // pred_region
        _
      $region44: #{tln_forward.5} parent=11 // pred_fallthru
        _
      // Predicated region
      $region45: #{tln_forward.5} parent=11 // pred_check
        %p450 = pneg %p238
      $region46: #{tln_forward.5} parent=11 // pred_check_branch
        %452 = sbr.rel (%p450) target = $region48
      $region47: #{tln_forward.5} parent=11 // pred_region
        _
      $region48: #{tln_forward.5} parent=11 // pred_fallthru
        _
      // Predicated region
      $region49: #{tln_forward.5} parent=11 // pred_check
        %p453 = pneg %p259
      $region50: #{tln_forward.5} parent=11 // pred_check_branch
        %455 = sbr.rel (%p453) target = $region52
      $region51: #{tln_forward.5} parent=11 // pred_region
        _
      $region52: #{tln_forward.5} parent=11 // pred_fallthru
        _
      // Predicated region
      $region53: #{tln_forward.5} parent=11 // pred_check
        %p456 = pneg %p280
      $region54: #{tln_forward.5} parent=11 // pred_check_branch
        %458 = sbr.rel (%p456) target = $region56
      $region55: #{tln_forward.5} parent=11 // pred_region
        _
      $region56: #{tln_forward.5} parent=11 // pred_fallthru
        _
      // Predicated region
      $region57: #{tln_forward.5} parent=11 // pred_check
        %p459 = pneg %p301
      $region58: #{tln_forward.5} parent=11 // pred_check_branch
        %461 = sbr.rel (%p459) target = $region60
      $region59: #{tln_forward.5} parent=11 // pred_region
        _
      $region60: #{tln_forward.5} parent=11 // pred_fallthru
        _
      // Predicated region
      $region61: #{tln_forward.5} parent=11 // pred_check
        %p462 = pneg %p322
      $region62: #{tln_forward.5} parent=11 // pred_check_branch
        %464 = sbr.rel (%p462) target = $region64
      $region63: #{tln_forward.5} parent=11 // pred_region
        _
      $region64: #{tln_forward.5} parent=11 // pred_fallthru
        _
      // Predicated region
      $region65: #{tln_forward.5} parent=11 // pred_check
        %p465 = pneg %p343
      $region66: #{tln_forward.5} parent=11 // pred_check_branch
        %467 = sbr.rel (%p465) target = $region68
      $region67: #{tln_forward.5} parent=11 // pred_region
        _
      $region68: #{tln_forward.5} parent=11 // pred_fallthru
        _
      // Predicated region
      $region69: #{tln_forward.5} parent=11 // pred_check
        %p468 = pneg %p364
      $region70: #{tln_forward.5} parent=11 // pred_check_branch
        %470 = sbr.rel (%p468) target = $region72
      $region71: #{tln_forward.5} parent=11 // pred_region
        _
      $region72: #{tln_forward.5} parent=11 // pred_fallthru
        _
      // Predicated region
      $region73: #{tln_forward.5} parent=11 // pred_check
        %p471 = pneg %p385
      $region74: #{tln_forward.5} parent=11 // pred_check_branch
        %473 = sbr.rel (%p471) target = $region76
      $region75: #{tln_forward.5} parent=11 // pred_region
        _
      $region76: #{tln_forward.5} parent=11 // pred_fallthru
        _
    $region12: #{tln_forward.5} parent=5 // pred_fallthru
      _
    %p474 = scmp.lt.s32.totalorder %s23, 2
    // Predicated region
    $region77: #{tln_forward.5} parent=5 // pred_check
      %p475 = pneg %p474
    $region78: #{tln_forward.5} parent=5 // pred_check_branch
      %477 = sbr.rel (%p475) target = $region80
    $region79: #{tln_forward.5} parent=5 // pred_region
      // Predicated region
      $region81: #{tln_forward.5} parent=79 // pred_check
        %p478 = pneg %p43
      $region82: #{tln_forward.5} parent=79 // pred_check_branch
        %480 = sbr.rel (%p478) target = $region84
      $region83: #{tln_forward.5} parent=79 // pred_region
        %p481 = scmp.lt.s32.totalorder %s23, 1
        %s482 = scalar_select %p481, %s23, 1
        %s483 = smul.addr %s482, 4
        %s484 = smul.addr %s483, 8
        %s485 = scalar_lea.vmem %s0, %s484
      $region84: #{tln_forward.5} parent=79 // pred_fallthru
        _
    $region80: #{tln_forward.5} parent=5 // pred_fallthru
      _
    %p486 = scmp.le.s32.totalorder 1, %s23
    %p487 = scmp.lt.s32.totalorder %s23, 3
    %p488 = pnand %p486, %p487
    %p489 = pneg %p488
    // Predicated region
    $region85: #{tln_forward.5} parent=5 // pred_check
      _
    $region86: #{tln_forward.5} parent=5 // pred_check_branch
      %491 = sbr.rel (%p488) target = $region88
    $region87: #{tln_forward.5} parent=5 // pred_region
      %s492 = ssub.s32 %s23, 1
      %p493 = scmp.lt.s32.totalorder %s28, 1
      %s494 = scalar_select %p493, %s28, 1
      %s495 = smul.addr %s494, 4
      %s496 = smul.addr %s495, 8
      %s497 = scalar_lea.vmem %s0, %s496
      %p498 = pneg %p49
      %p499 = pneg %p46
      %p500 = pneg %p70
      %p501 = pneg %p67
      %p502 = pneg %p91
      %p503 = pneg %p88
      %p504 = pneg %p112
      %p505 = pneg %p109
      %p506 = pneg %p133
      %p507 = pneg %p130
      %p508 = pneg %p154
      %p509 = pneg %p151
      %p510 = pneg %p175
      %p511 = pneg %p172
      %p512 = pneg %p196
      %p513 = pneg %p193
      %p514 = pneg %p217
      %p515 = pneg %p214
      %p516 = pneg %p238
      %p517 = pneg %p235
      %p518 = pneg %p259
      %p519 = pneg %p256
      %p520 = pneg %p280
      %p521 = pneg %p277
      %p522 = pneg %p301
      %p523 = pneg %p298
      %p524 = pneg %p322
      %p525 = pneg %p319
      %p526 = pneg %p343
      %p527 = pneg %p340
      %p528 = pneg %p364
      %p529 = pneg %p361
      %p530 = pneg %p385
      %p531 = pneg %p382
      %p532 = pneg %p411
      %p533 = pneg %p408
      %p534 = scmp.lt.s32.totalorder %s28, 1
      %s535 = scalar_select %p534, %s28, 1
      %s536 = smul.addr %s535, 8
      %s537 = smul.addr %s536, 8
      %s538 = scalar_lea.vmem %s17, %s537
      %p539 = scmp.lt.s32.totalorder %s28, 1
      %s540 = scalar_select %p539, %s28, 1
      %s541 = smul.addr %s540, 4
      %s542 = smul.addr %s541, 8
      %s543 = scalar_lea.vmem %s0, %s542
      %p544 = scmp.lt.s32.totalorder %s28, 1
      %s545 = scalar_select %p544, %s28, 1
      %s546 = smul.addr %s545, 8
      %s547 = smul.addr %s546, 8
      %s548 = scalar_lea.vmem %s17, %s547
      %v549 = vld [vmem:[%s543] sm:$0xff]
      %v550 = vld [vmem:[%s543 + $0x8] sm:$0xff]
      %v551 = vld [vmem:[%s543 + $0x10] sm:$0xff]
      %v552 = vld [vmem:[%s543 + $0x18] sm:$0xff]
      %v553 = vld [vmem:[%s3] sm:$0xff]
      %v554 = vld [vmem:[%s3 + $0x8] sm:$0xff]
      %v555 = vld [vmem:[%s3 + $0x10] sm:$0x7f]
      %vm556 = vcmask 187392
      %v558 = vsel %vm556, %v549, 0
      %v561 = vsel %vm556, %v550, 0
      %v564 = vsel %vm556, %v551, 0
      %v567 = vsel %vm556, %v552, 0
      %vm569 = vcmask 1046528
      %v571 = vsel %vm569, %v555, 0
      %573 = vmatpush.msra.mxu0 0.0
      %574 = vmatpush.msra.mxu0 0.0
      %575 = vmatpush.msra.mxu0 0.0
      %576 = vmatpush.msra.mxu0 0.0
      %577 = vmatpush.msra.mxu0 0.0
      %578 = vmatpush.msra.mxu0 0.0
      %579 = vmatpush.msra.mxu0 0.0
      %580 = vmatpush.msra.mxu0 0.0
      %581 = vmatpush.msra.mxu0 0.0
      %582 = vmatpush.msra.mxu0 0.0
      %583 = vmatpush.msra.mxu0 0.0
      %584 = vmatpush.msra.mxu0 0.0
      %585 = vmatpush.msra.mxu0 0.0
      %586 = vmatpush.msra.mxu0 %v571
      %587 = vmatpush.msra.mxu0 %v554
      %588 = vmatpush.msra.mxu0 %v553
      %589 = vmatmul.f32.gmra.mxu0 %v558
      %v590 = vpop.f32.mrf.mxu0
      %v591 = vadd.f32 0.0, %v590
      %592 = vmatmul.f32.gmra.mxu0 %v561
      %v593 = vpop.f32.mrf.mxu0
      %v594 = vadd.f32 0.0, %v593
      %595 = vmatmul.f32.gmra.mxu0 %v564
      %v596 = vpop.f32.mrf.mxu0
      %v597 = vadd.f32 0.0, %v596
      %598 = vmatmul.f32.gmra.mxu0 %v567
      %v599 = vpop.f32.mrf.mxu0
      %v600 = vadd.f32 0.0, %v599
      %601 = vdwg.mxu0
      %v602 = vld [vmem:[%s1] sm:$0xff]
      %v603 = vld [vmem:[%s1 + $0x8] sm:$0xff]
      %v604 = vld [vmem:[%s1 + $0x10] sm:$0xff]
      %v605 = vld [vmem:[%s1 + $0x18] sm:$0xff]
      %v606 = vld [vmem:[%s1 + $0x20] sm:$0xff]
      %v607 = vld [vmem:[%s1 + $0x28] sm:$0xff]
      %v608 = vld [vmem:[%s1 + $0x30] sm:$0xff]
      %v609 = vld [vmem:[%s1 + $0x38] sm:$0xff]
      %s610 = scalar_lea.vmem %s3, 24
      %v611 = vld [vmem:[%s610] sm:$0xff]
      %v612 = vld [vmem:[%s610 + $0x8] sm:$0xff]
      %v613 = vld [vmem:[%s610 + $0x10] sm:$0x7f]
      %v615 = vsel %vm569, %v613, 0
      %617 = vmatpush.msra.mxu0 0.0
      %618 = vmatpush.msra.mxu0 0.0
      %619 = vmatpush.msra.mxu0 0.0
      %620 = vmatpush.msra.mxu0 0.0
      %621 = vmatpush.msra.mxu0 0.0
      %622 = vmatpush.msra.mxu0 0.0
      %623 = vmatpush.msra.mxu0 0.0
      %624 = vmatpush.msra.mxu0 0.0
      %625 = vmatpush.msra.mxu0 0.0
      %626 = vmatpush.msra.mxu0 0.0
      %627 = vmatpush.msra.mxu0 0.0
      %628 = vmatpush.msra.mxu0 0.0
      %629 = vmatpush.msra.mxu0 0.0
      %630 = vmatpush.msra.mxu0 %v615
      %631 = vmatpush.msra.mxu0 %v612
      %632 = vmatpush.msra.mxu0 %v611
      %633 = vmatmul.f32.gmra.mxu0 %v558
      %v634 = vpop.f32.mrf.mxu0
      %v635 = vadd.f32 0.0, %v634
      %636 = vmatmul.f32.gmra.mxu0 %v561
      %v637 = vpop.f32.mrf.mxu0
      %v638 = vadd.f32 0.0, %v637
      %639 = vmatmul.f32.gmra.mxu0 %v564
      %v640 = vpop.f32.mrf.mxu0
      %v641 = vadd.f32 0.0, %v640
      %642 = vmatmul.f32.gmra.mxu0 %v567
      %v643 = vpop.f32.mrf.mxu0
      %v644 = vadd.f32 0.0, %v643
      %645 = vdwg.mxu0
      %v646 = vld [vmem:[%s1 + $0x40] sm:$0xff]
      %v647 = vld [vmem:[%s1 + $0x48] sm:$0xff]
      %v648 = vld [vmem:[%s1 + $0x50] sm:$0xff]
      %v649 = vld [vmem:[%s1 + $0x58] sm:$0xff]
      %v650 = vld [vmem:[%s1 + $0x60] sm:$0xff]
      %v651 = vld [vmem:[%s1 + $0x68] sm:$0xff]
      %v652 = vld [vmem:[%s1 + $0x70] sm:$0xff]
      %v653 = vld [vmem:[%s1 + $0x78] sm:$0xff]
      %vm654 = vcmask 261120
      %v656 = vsel %vm654, %v646, 0
      %v659 = vsel %vm654, %v647, 0
      %v662 = vsel %vm654, %v648, 0
      %v665 = vsel %vm654, %v649, 0
      %v668 = vsel %vm654, %v650, 0
      %v671 = vsel %vm654, %v651, 0
      %v674 = vsel %vm654, %v652, 0
      %v677 = vsel %vm654, %v653, 0
      %679 = vmatpush.msra.mxu0 0.0
      %680 = vmatpush.msra.mxu0 0.0
      %681 = vmatpush.msra.mxu0 0.0
      %682 = vmatpush.msra.mxu0 0.0
      %683 = vmatpush.msra.mxu0 0.0
      %684 = vmatpush.msra.mxu0 0.0
      %685 = vmatpush.msra.mxu0 0.0
      %686 = vmatpush.msra.mxu0 0.0
      %687 = vmatpush.msra.mxu0 0.0
      %688 = vmatpush.msra.mxu0 0.0
      %689 = vmatpush.msra.mxu0 0.0
      %690 = vmatpush.msra.mxu0 0.0
      %691 = vmatpush.msra.mxu0 %v644
      %692 = vmatpush.msra.mxu0 %v641
      %693 = vmatpush.msra.mxu0 %v638
      %694 = vmatpush.msra.mxu0 %v635
      %695 = vmatmul.f32.gmra.mxu0 %v656
      %v696 = vpop.f32.mrf.mxu0
      %v697 = vadd.f32 0.0, %v696
      %698 = vmatmul.f32.gmra.mxu0 %v659
      %v699 = vpop.f32.mrf.mxu0
      %v700 = vadd.f32 0.0, %v699
      %701 = vmatmul.f32.gmra.mxu0 %v662
      %v702 = vpop.f32.mrf.mxu0
      %v703 = vadd.f32 0.0, %v702
      %704 = vmatmul.f32.gmra.mxu0 %v665
      %v705 = vpop.f32.mrf.mxu0
      %v706 = vadd.f32 0.0, %v705
      %707 = vmatmul.f32.gmra.mxu0 %v668
      %v708 = vpop.f32.mrf.mxu0
      %v709 = vadd.f32 0.0, %v708
      %710 = vmatmul.f32.gmra.mxu0 %v671
      %v711 = vpop.f32.mrf.mxu0
      %v712 = vadd.f32 0.0, %v711
      %713 = vmatmul.f32.gmra.mxu0 %v674
      %v714 = vpop.f32.mrf.mxu0
      %v715 = vadd.f32 0.0, %v714
      %716 = vmatmul.f32.gmra.mxu0 %v677
      %v717 = vpop.f32.mrf.mxu0
      %v718 = vadd.f32 0.0, %v717
      %719 = vdwg.mxu0
      %v721 = vsel %vm654, %v602, 0
      %v724 = vsel %vm654, %v603, 0
      %v727 = vsel %vm654, %v604, 0
      %v730 = vsel %vm654, %v605, 0
      %v733 = vsel %vm654, %v606, 0
      %v736 = vsel %vm654, %v607, 0
      %v739 = vsel %vm654, %v608, 0
      %v742 = vsel %vm654, %v609, 0
      %744 = vmatpush.msra.mxu0 0.0
      %745 = vmatpush.msra.mxu0 0.0
      %746 = vmatpush.msra.mxu0 0.0
      %747 = vmatpush.msra.mxu0 0.0
      %748 = vmatpush.msra.mxu0 0.0
      %749 = vmatpush.msra.mxu0 0.0
      %750 = vmatpush.msra.mxu0 0.0
      %751 = vmatpush.msra.mxu0 0.0
      %752 = vmatpush.msra.mxu0 0.0
      %753 = vmatpush.msra.mxu0 0.0
      %754 = vmatpush.msra.mxu0 0.0
      %755 = vmatpush.msra.mxu0 0.0
      %756 = vmatpush.msra.mxu0 %v600
      %757 = vmatpush.msra.mxu0 %v597
      %758 = vmatpush.msra.mxu0 %v594
      %759 = vmatpush.msra.mxu0 %v591
      %760 = vmatmul.f32.gmra.mxu0 %v721
      %v761 = vpop.f32.mrf.mxu0
      %v762 = vadd.f32 %v697, %v761
      %763 = vmatmul.f32.gmra.mxu0 %v724
      %v764 = vpop.f32.mrf.mxu0
      %v765 = vadd.f32 %v700, %v764
      %766 = vmatmul.f32.gmra.mxu0 %v727
      %v767 = vpop.f32.mrf.mxu0
      %v768 = vadd.f32 %v703, %v767
      %769 = vmatmul.f32.gmra.mxu0 %v730
      %v770 = vpop.f32.mrf.mxu0
      %v771 = vadd.f32 %v706, %v770
      %772 = vmatmul.f32.gmra.mxu0 %v733
      %v773 = vpop.f32.mrf.mxu0
      %v774 = vadd.f32 %v709, %v773
      %775 = vmatmul.f32.gmra.mxu0 %v736
      %v776 = vpop.f32.mrf.mxu0
      %v777 = vadd.f32 %v712, %v776
      %778 = vmatmul.f32.gmra.mxu0 %v739
      %v779 = vpop.f32.mrf.mxu0
      %v780 = vadd.f32 %v715, %v779
      %781 = vmatmul.f32.gmra.mxu0 %v742
      %v782 = vpop.f32.mrf.mxu0
      %v783 = vadd.f32 %v718, %v782
      %784 = vdwg.mxu0
      %s785 = scalar_lea.vmem %s3, 48
      %v786 = vld [vmem:[%s785] sm:$0xff]
      %v787 = vld [vmem:[%s785 + $0x8] sm:$0xff]
      %v788 = vld [vmem:[%s785 + $0x10] sm:$0x7f]
      %v790 = vsel %vm569, %v788, 0
      %792 = vmatpush.msra.mxu0 0.0
      %793 = vmatpush.msra.mxu0 0.0
      %794 = vmatpush.msra.mxu0 0.0
      %795 = vmatpush.msra.mxu0 0.0
      %796 = vmatpush.msra.mxu0 0.0
      %797 = vmatpush.msra.mxu0 0.0
      %798 = vmatpush.msra.mxu0 0.0
      %799 = vmatpush.msra.mxu0 0.0
      %800 = vmatpush.msra.mxu0 0.0
      %801 = vmatpush.msra.mxu0 0.0
      %802 = vmatpush.msra.mxu0 0.0
      %803 = vmatpush.msra.mxu0 0.0
      %804 = vmatpush.msra.mxu0 0.0
      %805 = vmatpush.msra.mxu0 %v790
      %806 = vmatpush.msra.mxu0 %v787
      %807 = vmatpush.msra.mxu0 %v786
      %808 = vmatmul.f32.gmra.mxu0 %v558
      %v809 = vpop.f32.mrf.mxu0
      %v810 = vadd.f32 0.0, %v809
      %811 = vmatmul.f32.gmra.mxu0 %v561
      %v812 = vpop.f32.mrf.mxu0
      %v813 = vadd.f32 0.0, %v812
      %814 = vmatmul.f32.gmra.mxu0 %v564
      %v815 = vpop.f32.mrf.mxu0
      %v816 = vadd.f32 0.0, %v815
      %817 = vmatmul.f32.gmra.mxu0 %v567
      %v818 = vpop.f32.mrf.mxu0
      %v819 = vadd.f32 0.0, %v818
      %820 = vdwg.mxu0
      %v821 = vld [vmem:[%s1 + $0x80] sm:$0xff]
      %v822 = vld [vmem:[%s1 + $0x88] sm:$0xff]
      %v823 = vld [vmem:[%s1 + $0x90] sm:$0xff]
      %v824 = vld [vmem:[%s1 + $0x98] sm:$0xff]
      %v825 = vld [vmem:[%s1 + $0xa0] sm:$0xff]
      %v826 = vld [vmem:[%s1 + $0xa8] sm:$0xff]
      %v827 = vld [vmem:[%s1 + $0xb0] sm:$0xff]
      %v828 = vld [vmem:[%s1 + $0xb8] sm:$0xff]
      %v830 = vsel %vm654, %v821, 0
      %v833 = vsel %vm654, %v822, 0
      %v836 = vsel %vm654, %v823, 0
      %v839 = vsel %vm654, %v824, 0
      %v842 = vsel %vm654, %v825, 0
      %v845 = vsel %vm654, %v826, 0
      %v848 = vsel %vm654, %v827, 0
      %v851 = vsel %vm654, %v828, 0
      %853 = vmatpush.msra.mxu0 0.0
      %854 = vmatpush.msra.mxu0 0.0
      %855 = vmatpush.msra.mxu0 0.0
      %856 = vmatpush.msra.mxu0 0.0
      %857 = vmatpush.msra.mxu0 0.0
      %858 = vmatpush.msra.mxu0 0.0
      %859 = vmatpush.msra.mxu0 0.0
      %860 = vmatpush.msra.mxu0 0.0
      %861 = vmatpush.msra.mxu0 0.0
      %862 = vmatpush.msra.mxu0 0.0
      %863 = vmatpush.msra.mxu0 0.0
      %864 = vmatpush.msra.mxu0 0.0
      %865 = vmatpush.msra.mxu0 %v819
      %866 = vmatpush.msra.mxu0 %v816
      %867 = vmatpush.msra.mxu0 %v813
      %868 = vmatpush.msra.mxu0 %v810
      %869 = vmatmul.f32.gmra.mxu0 %v830
      %v870 = vpop.f32.mrf.mxu0
      %v871 = vadd.f32 0.0, %v870
      %872 = vmatmul.f32.gmra.mxu0 %v833
      %v873 = vpop.f32.mrf.mxu0
      %v874 = vadd.f32 0.0, %v873
      %875 = vmatmul.f32.gmra.mxu0 %v836
      %v876 = vpop.f32.mrf.mxu0
      %v877 = vadd.f32 0.0, %v876
      %878 = vmatmul.f32.gmra.mxu0 %v839
      %v879 = vpop.f32.mrf.mxu0
      %v880 = vadd.f32 0.0, %v879
      %881 = vmatmul.f32.gmra.mxu0 %v842
      %v882 = vpop.f32.mrf.mxu0
      %v883 = vadd.f32 0.0, %v882
      %884 = vmatmul.f32.gmra.mxu0 %v845
      %v885 = vpop.f32.mrf.mxu0
      %v886 = vadd.f32 0.0, %v885
      %887 = vmatmul.f32.gmra.mxu0 %v848
      %v888 = vpop.f32.mrf.mxu0
      %v889 = vadd.f32 0.0, %v888
      %890 = vmatmul.f32.gmra.mxu0 %v851
      %v891 = vpop.f32.mrf.mxu0
      %v892 = vadd.f32 0.0, %v891
      %893 = vdwg.mxu0
      %v894 = vadd.f32 %v762, %v871
      %v895 = vadd.f32 %v765, %v874
      %v896 = vadd.f32 %v768, %v877
      %v897 = vadd.f32 %v771, %v880
      %v898 = vadd.f32 %v774, %v883
      %v899 = vadd.f32 %v777, %v886
      %v900 = vadd.f32 %v780, %v889
      %v901 = vadd.f32 %v783, %v892
      %v902 = vld [vmem:[%s2] sm:$0xff]
      %v903 = vld [vmem:[%s2 + $0x8] sm:$0xff]
      %v904 = vld [vmem:[%s2 + $0x10] sm:$0xff]
      %v905 = vld [vmem:[%s2 + $0x18] sm:$0xff]
      %v906 = vld [vmem:[%s2 + $0x20] sm:$0xff]
      %v907 = vld [vmem:[%s2 + $0x28] sm:$0xff]
      %v908 = vld [vmem:[%s2 + $0x30] sm:$0xff]
      %v909 = vld [vmem:[%s2 + $0x38] sm:$0xff]
      %911 = vset.pattern.permute.xlu0 0
      %912 = vperm.xlu0 %911, %v902
      %v913 = vpop.permute.xlu0 %912
      %916 = vset.pattern.permute.xlu0 0
      %917 = vperm.xlu0 %916, %v903
      %v918 = vpop.permute.xlu0 %917
      %921 = vset.pattern.permute.xlu0 0
      %922 = vperm.xlu0 %921, %v904
      %v923 = vpop.permute.xlu0 %922
      %926 = vset.pattern.permute.xlu0 0
      %927 = vperm.xlu0 %926, %v905
      %v928 = vpop.permute.xlu0 %927
      %931 = vset.pattern.permute.xlu0 0
      %932 = vperm.xlu0 %931, %v906
      %v933 = vpop.permute.xlu0 %932
      %936 = vset.pattern.permute.xlu0 0
      %937 = vperm.xlu0 %936, %v907
      %v938 = vpop.permute.xlu0 %937
      %941 = vset.pattern.permute.xlu0 0
      %942 = vperm.xlu0 %941, %v908
      %v943 = vpop.permute.xlu0 %942
      %946 = vset.pattern.permute.xlu0 0
      %947 = vperm.xlu0 %946, %v909
      %v948 = vpop.permute.xlu0 %947
      %v950 = vadd.f32 %v894, %v913
      %v951 = vadd.f32 %v895, %v918
      %v952 = vadd.f32 %v896, %v923
      %v953 = vadd.f32 %v897, %v928
      %v954 = vadd.f32 %v898, %v933
      %v955 = vadd.f32 %v899, %v938
      %v956 = vadd.f32 %v900, %v943
      %v957 = vadd.f32 %v901, %v948
      %v958 = vtanh.pop %v950
      %v959 = vtanh.pop %v951
      %v960 = vtanh.pop %v952
      %v961 = vtanh.pop %v953
      %v962 = vtanh.pop %v954
      %v963 = vtanh.pop %v955
      %v964 = vtanh.pop %v956
      %v965 = vtanh.pop %v957
      %974 = vrot.lane.b32.xlu0 %v958, 127
      %v975 = vpop.permute.xlu0 %974
      %976 = vrot.lane.b32.xlu0 %v959, 127
      %v977 = vpop.permute.xlu0 %976
      %978 = vrot.lane.b32.xlu0 %v960, 127
      %v979 = vpop.permute.xlu0 %978
      %980 = vrot.lane.b32.xlu0 %v961, 127
      %v981 = vpop.permute.xlu0 %980
      %982 = vrot.lane.b32.xlu0 %v962, 127
      %v983 = vpop.permute.xlu0 %982
      %984 = vrot.lane.b32.xlu0 %v963, 127
      %v985 = vpop.permute.xlu0 %984
      %986 = vrot.lane.b32.xlu0 %v964, 127
      %v987 = vpop.permute.xlu0 %986
      %988 = vrot.lane.b32.xlu0 %v965, 127
      %v989 = vpop.permute.xlu0 %988
      %v998 = vmax.f32 %v958, %v975
      %v999 = vmax.f32 %v959, %v977
      %v1000 = vmax.f32 %v960, %v979
      %v1001 = vmax.f32 %v961, %v981
      %v1002 = vmax.f32 %v962, %v983
      %v1003 = vmax.f32 %v963, %v985
      %v1004 = vmax.f32 %v964, %v987
      %v1005 = vmax.f32 %v965, %v989
      %1006 = vrot.lane.b32.xlu0 %v958, 126
      %v1007 = vpop.permute.xlu0 %1006
      %1008 = vrot.lane.b32.xlu0 %v959, 126
      %v1009 = vpop.permute.xlu0 %1008
      %1010 = vrot.lane.b32.xlu0 %v960, 126
      %v1011 = vpop.permute.xlu0 %1010
      %1012 = vrot.lane.b32.xlu0 %v961, 126
      %v1013 = vpop.permute.xlu0 %1012
      %1014 = vrot.lane.b32.xlu0 %v962, 126
      %v1015 = vpop.permute.xlu0 %1014
      %1016 = vrot.lane.b32.xlu0 %v963, 126
      %v1017 = vpop.permute.xlu0 %1016
      %1018 = vrot.lane.b32.xlu0 %v964, 126
      %v1019 = vpop.permute.xlu0 %1018
      %1020 = vrot.lane.b32.xlu0 %v965, 126
      %v1021 = vpop.permute.xlu0 %1020
      %v1030 = vmax.f32 %v998, %v1007
      %v1031 = vmax.f32 %v999, %v1009
      %v1032 = vmax.f32 %v1000, %v1011
      %v1033 = vmax.f32 %v1001, %v1013
      %v1034 = vmax.f32 %v1002, %v1015
      %v1035 = vmax.f32 %v1003, %v1017
      %v1036 = vmax.f32 %v1004, %v1019
      %v1037 = vmax.f32 %v1005, %v1021
      %v1038 = vld [vmem:[%s4] sm:$0xff]
      %v1039 = vld [vmem:[%s4 + $0x8] sm:$0xff]
      %v1040 = vld [vmem:[%s4 + $0x10] sm:$0x1f]
      %vm1041 = vcmask 171008
      %v1043 = vsel %vm1041, %v1030, 0
      %v1046 = vsel %vm1041, %v1031, 0
      %v1049 = vsel %vm1041, %v1032, 0
      %v1052 = vsel %vm1041, %v1033, 0
      %v1055 = vsel %vm1041, %v1034, 0
      %v1058 = vsel %vm1041, %v1035, 0
      %v1061 = vsel %vm1041, %v1036, 0
      %v1064 = vsel %vm1041, %v1037, 0
      %vm1066 = vcmask 1044480
      %v1068 = vsel %vm1066, %v1040, 0
      %1070 = vmatpush.msra.mxu0 0.0
      %1071 = vmatpush.msra.mxu0 0.0
      %1072 = vmatpush.msra.mxu0 0.0
      %1073 = vmatpush.msra.mxu0 0.0
      %1074 = vmatpush.msra.mxu0 0.0
      %1075 = vmatpush.msra.mxu0 0.0
      %1076 = vmatpush.msra.mxu0 0.0
      %1077 = vmatpush.msra.mxu0 0.0
      %1078 = vmatpush.msra.mxu0 0.0
      %1079 = vmatpush.msra.mxu0 0.0
      %1080 = vmatpush.msra.mxu0 0.0
      %1081 = vmatpush.msra.mxu0 0.0
      %1082 = vmatpush.msra.mxu0 0.0
      %1083 = vmatpush.msra.mxu0 %v1068
      %1084 = vmatpush.msra.mxu0 %v1039
      %1085 = vmatpush.msra.mxu0 %v1038
      %1086 = vmatmul.f32.gmra.mxu0 %v1043
      %v1087 = vpop.f32.mrf.mxu0
      %v1088 = vadd.f32 0.0, %v1087
      %1089 = vmatmul.f32.gmra.mxu0 %v1046
      %v1090 = vpop.f32.mrf.mxu0
      %v1091 = vadd.f32 0.0, %v1090
      %1092 = vmatmul.f32.gmra.mxu0 %v1049
      %v1093 = vpop.f32.mrf.mxu0
      %v1094 = vadd.f32 0.0, %v1093
      %1095 = vmatmul.f32.gmra.mxu0 %v1052
      %v1096 = vpop.f32.mrf.mxu0
      %v1097 = vadd.f32 0.0, %v1096
      %1098 = vmatmul.f32.gmra.mxu0 %v1055
      %v1099 = vpop.f32.mrf.mxu0
      %v1100 = vadd.f32 0.0, %v1099
      %1101 = vmatmul.f32.gmra.mxu0 %v1058
      %v1102 = vpop.f32.mrf.mxu0
      %v1103 = vadd.f32 0.0, %v1102
      %1104 = vmatmul.f32.gmra.mxu0 %v1061
      %v1105 = vpop.f32.mrf.mxu0
      %v1106 = vadd.f32 0.0, %v1105
      %1107 = vmatmul.f32.gmra.mxu0 %v1064
      %v1108 = vpop.f32.mrf.mxu0
      %v1109 = vadd.f32 0.0, %v1108
      %1110 = vdwg.mxu0
      %v1111 = vld [vmem:[%s7] sm:$0xff]
      %v1112 = vld [vmem:[%s7 + $0x8] sm:$0x7]
      %vm1113 = vcmask 89088
      %v1115 = vsel %vm1113, %v1088, 0
      %v1118 = vsel %vm1113, %v1091, 0
      %v1121 = vsel %vm1113, %v1094, 0
      %v1124 = vsel %vm1113, %v1097, 0
      %v1127 = vsel %vm1113, %v1100, 0
      %v1130 = vsel %vm1113, %v1103, 0
      %v1133 = vsel %vm1113, %v1106, 0
      %v1136 = vsel %vm1113, %v1109, 0
      %vm1138 = vcmask 1042432
      %v1140 = vsel %vm1138, %v1112, 0
      %1142 = vmatpush.msra.mxu0 0.0
      %1143 = vmatpush.msra.mxu0 0.0
      %1144 = vmatpush.msra.mxu0 0.0
      %1145 = vmatpush.msra.mxu0 0.0
      %1146 = vmatpush.msra.mxu0 0.0
      %1147 = vmatpush.msra.mxu0 0.0
      %1148 = vmatpush.msra.mxu0 0.0
      %1149 = vmatpush.msra.mxu0 0.0
      %1150 = vmatpush.msra.mxu0 0.0
      %1151 = vmatpush.msra.mxu0 0.0
      %1152 = vmatpush.msra.mxu0 0.0
      %1153 = vmatpush.msra.mxu0 0.0
      %1154 = vmatpush.msra.mxu0 0.0
      %1155 = vmatpush.msra.mxu0 0.0
      %1156 = vmatpush.msra.mxu0 %v1140
      %1157 = vmatpush.msra.mxu0 %v1111
      %1158 = vmatmul.f32.gmra.mxu0 %v1115
      %v1159 = vpop.f32.mrf.mxu0
      %v1160 = vadd.f32 0.0, %v1159
      %1161 = vmatmul.f32.gmra.mxu0 %v1118
      %v1162 = vpop.f32.mrf.mxu0
      %v1163 = vadd.f32 0.0, %v1162
      %1164 = vmatmul.f32.gmra.mxu0 %v1121
      %v1165 = vpop.f32.mrf.mxu0
      %v1166 = vadd.f32 0.0, %v1165
      %1167 = vmatmul.f32.gmra.mxu0 %v1124
      %v1168 = vpop.f32.mrf.mxu0
      %v1169 = vadd.f32 0.0, %v1168
      %1170 = vmatmul.f32.gmra.mxu0 %v1127
      %v1171 = vpop.f32.mrf.mxu0
      %v1172 = vadd.f32 0.0, %v1171
      %1173 = vmatmul.f32.gmra.mxu0 %v1130
      %v1174 = vpop.f32.mrf.mxu0
      %v1175 = vadd.f32 0.0, %v1174
      %1176 = vmatmul.f32.gmra.mxu0 %v1133
      %v1177 = vpop.f32.mrf.mxu0
      %v1178 = vadd.f32 0.0, %v1177
      %1179 = vmatmul.f32.gmra.mxu0 %v1136
      %v1180 = vpop.f32.mrf.mxu0
      %v1181 = vadd.f32 0.0, %v1180
      %1182 = vdwg.mxu0
      %v1183 = vld [vmem:[%s5] sm:$0xff]
      %v1184 = vld [vmem:[%s5 + $0x8] sm:$0xff]
      %v1185 = vld [vmem:[%s5 + $0x10] sm:$0xff]
      %v1186 = vld [vmem:[%s5 + $0x18] sm:$0xff]
      %s1187 = scalar_lea.vmem %s7, 16
      %v1188 = vld [vmem:[%s1187] sm:$0xff]
      %v1189 = vld [vmem:[%s1187 + $0x8] sm:$0x7]
      %v1191 = vsel %vm1138, %v1189, 0
      %1193 = vmatpush.msra.mxu0 0.0
      %1194 = vmatpush.msra.mxu0 0.0
      %1195 = vmatpush.msra.mxu0 0.0
      %1196 = vmatpush.msra.mxu0 0.0
      %1197 = vmatpush.msra.mxu0 0.0
      %1198 = vmatpush.msra.mxu0 0.0
      %1199 = vmatpush.msra.mxu0 0.0
      %1200 = vmatpush.msra.mxu0 0.0
      %1201 = vmatpush.msra.mxu0 0.0
      %1202 = vmatpush.msra.mxu0 0.0
      %1203 = vmatpush.msra.mxu0 0.0
      %1204 = vmatpush.msra.mxu0 0.0
      %1205 = vmatpush.msra.mxu0 0.0
      %1206 = vmatpush.msra.mxu0 0.0
      %1207 = vmatpush.msra.mxu0 %v1191
      %1208 = vmatpush.msra.mxu0 %v1188
      %1209 = vmatmul.f32.gmra.mxu0 %v1115
      %v1210 = vpop.f32.mrf.mxu0
      %v1211 = vadd.f32 0.0, %v1210
      %1212 = vmatmul.f32.gmra.mxu0 %v1118
      %v1213 = vpop.f32.mrf.mxu0
      %v1214 = vadd.f32 0.0, %v1213
      %1215 = vmatmul.f32.gmra.mxu0 %v1121
      %v1216 = vpop.f32.mrf.mxu0
      %v1217 = vadd.f32 0.0, %v1216
      %1218 = vmatmul.f32.gmra.mxu0 %v1124
      %v1219 = vpop.f32.mrf.mxu0
      %v1220 = vadd.f32 0.0, %v1219
      %1221 = vmatmul.f32.gmra.mxu0 %v1127
      %v1222 = vpop.f32.mrf.mxu0
      %v1223 = vadd.f32 0.0, %v1222
      %1224 = vmatmul.f32.gmra.mxu0 %v1130
      %v1225 = vpop.f32.mrf.mxu0
      %v1226 = vadd.f32 0.0, %v1225
      %1227 = vmatmul.f32.gmra.mxu0 %v1133
      %v1228 = vpop.f32.mrf.mxu0
      %v1229 = vadd.f32 0.0, %v1228
      %1230 = vmatmul.f32.gmra.mxu0 %v1136
      %v1231 = vpop.f32.mrf.mxu0
      %v1232 = vadd.f32 0.0, %v1231
      %1233 = vdwg.mxu0
      %v1234 = vld [vmem:[%s5 + $0x20] sm:$0xff]
      %v1235 = vld [vmem:[%s5 + $0x28] sm:$0xff]
      %v1236 = vld [vmem:[%s5 + $0x30] sm:$0xff]
      %v1237 = vld [vmem:[%s5 + $0x38] sm:$0xff]
      %vm1238 = vcmask 523264
      %v1240 = vsel %vm1238, %v1234, 0
      %v1243 = vsel %vm1238, %v1235, 0
      %v1246 = vsel %vm1238, %v1236, 0
      %v1249 = vsel %vm1238, %v1237, 0
      %1251 = vmatpush.msra.mxu0 0.0
      %1252 = vmatpush.msra.mxu0 0.0
      %1253 = vmatpush.msra.mxu0 0.0
      %1254 = vmatpush.msra.mxu0 0.0
      %1255 = vmatpush.msra.mxu0 0.0
      %1256 = vmatpush.msra.mxu0 0.0
      %1257 = vmatpush.msra.mxu0 0.0
      %1258 = vmatpush.msra.mxu0 0.0
      %1259 = vmatpush.msra.mxu0 %v1232
      %1260 = vmatpush.msra.mxu0 %v1229
      %1261 = vmatpush.msra.mxu0 %v1226
      %1262 = vmatpush.msra.mxu0 %v1223
      %1263 = vmatpush.msra.mxu0 %v1220
      %1264 = vmatpush.msra.mxu0 %v1217
      %1265 = vmatpush.msra.mxu0 %v1214
      %1266 = vmatpush.msra.mxu0 %v1211
      %1267 = vmatmul.f32.gmra.mxu0 %v1240
      %v1268 = vpop.f32.mrf.mxu0
      %v1269 = vadd.f32 0.0, %v1268
      %1270 = vmatmul.f32.gmra.mxu0 %v1243
      %v1271 = vpop.f32.mrf.mxu0
      %v1272 = vadd.f32 0.0, %v1271
      %1273 = vmatmul.f32.gmra.mxu0 %v1246
      %v1274 = vpop.f32.mrf.mxu0
      %v1275 = vadd.f32 0.0, %v1274
      %1276 = vmatmul.f32.gmra.mxu0 %v1249
      %v1277 = vpop.f32.mrf.mxu0
      %v1278 = vadd.f32 0.0, %v1277
      %1279 = vdwg.mxu0
      %v1281 = vsel %vm1238, %v1183, 0
      %v1284 = vsel %vm1238, %v1184, 0
      %v1287 = vsel %vm1238, %v1185, 0
      %v1290 = vsel %vm1238, %v1186, 0
      %1292 = vmatpush.msra.mxu0 0.0
      %1293 = vmatpush.msra.mxu0 0.0
      %1294 = vmatpush.msra.mxu0 0.0
      %1295 = vmatpush.msra.mxu0 0.0
      %1296 = vmatpush.msra.mxu0 0.0
      %1297 = vmatpush.msra.mxu0 0.0
      %1298 = vmatpush.msra.mxu0 0.0
      %1299 = vmatpush.msra.mxu0 0.0
      %1300 = vmatpush.msra.mxu0 %v1181
      %1301 = vmatpush.msra.mxu0 %v1178
      %1302 = vmatpush.msra.mxu0 %v1175
      %1303 = vmatpush.msra.mxu0 %v1172
      %1304 = vmatpush.msra.mxu0 %v1169
      %1305 = vmatpush.msra.mxu0 %v1166
      %1306 = vmatpush.msra.mxu0 %v1163
      %1307 = vmatpush.msra.mxu0 %v1160
      %1308 = vmatmul.f32.gmra.mxu0 %v1281
      %v1309 = vpop.f32.mrf.mxu0
      %v1310 = vadd.f32 %v1269, %v1309
      %1311 = vmatmul.f32.gmra.mxu0 %v1284
      %v1312 = vpop.f32.mrf.mxu0
      %v1313 = vadd.f32 %v1272, %v1312
      %1314 = vmatmul.f32.gmra.mxu0 %v1287
      %v1315 = vpop.f32.mrf.mxu0
      %v1316 = vadd.f32 %v1275, %v1315
      %1317 = vmatmul.f32.gmra.mxu0 %v1290
      %v1318 = vpop.f32.mrf.mxu0
      %v1319 = vadd.f32 %v1278, %v1318
      %1320 = vdwg.mxu0
      %s1321 = scalar_lea.vmem %s7, 32
      %v1322 = vld [vmem:[%s1321] sm:$0xff]
      %v1323 = vld [vmem:[%s1321 + $0x8] sm:$0x7]
      %v1325 = vsel %vm1138, %v1323, 0
      %1327 = vmatpush.msra.mxu0 0.0
      %1328 = vmatpush.msra.mxu0 0.0
      %1329 = vmatpush.msra.mxu0 0.0
      %1330 = vmatpush.msra.mxu0 0.0
      %1331 = vmatpush.msra.mxu0 0.0
      %1332 = vmatpush.msra.mxu0 0.0
      %1333 = vmatpush.msra.mxu0 0.0
      %1334 = vmatpush.msra.mxu0 0.0
      %1335 = vmatpush.msra.mxu0 0.0
      %1336 = vmatpush.msra.mxu0 0.0
      %1337 = vmatpush.msra.mxu0 0.0
      %1338 = vmatpush.msra.mxu0 0.0
      %1339 = vmatpush.msra.mxu0 0.0
      %1340 = vmatpush.msra.mxu0 0.0
      %1341 = vmatpush.msra.mxu0 %v1325
      %1342 = vmatpush.msra.mxu0 %v1322
      %1343 = vmatmul.f32.gmra.mxu0 %v1115
      %v1344 = vpop.f32.mrf.mxu0
      %v1345 = vadd.f32 0.0, %v1344
      %1346 = vmatmul.f32.gmra.mxu0 %v1118
      %v1347 = vpop.f32.mrf.mxu0
      %v1348 = vadd.f32 0.0, %v1347
      %1349 = vmatmul.f32.gmra.mxu0 %v1121
      %v1350 = vpop.f32.mrf.mxu0
      %v1351 = vadd.f32 0.0, %v1350
      %1352 = vmatmul.f32.gmra.mxu0 %v1124
      %v1353 = vpop.f32.mrf.mxu0
      %v1354 = vadd.f32 0.0, %v1353
      %1355 = vmatmul.f32.gmra.mxu0 %v1127
      %v1356 = vpop.f32.mrf.mxu0
      %v1357 = vadd.f32 0.0, %v1356
      %1358 = vmatmul.f32.gmra.mxu0 %v1130
      %v1359 = vpop.f32.mrf.mxu0
      %v1360 = vadd.f32 0.0, %v1359
      %1361 = vmatmul.f32.gmra.mxu0 %v1133
      %v1362 = vpop.f32.mrf.mxu0
      %v1363 = vadd.f32 0.0, %v1362
      %1364 = vmatmul.f32.gmra.mxu0 %v1136
      %v1365 = vpop.f32.mrf.mxu0
      %v1366 = vadd.f32 0.0, %v1365
      %1367 = vdwg.mxu0
      %v1368 = vld [vmem:[%s5 + $0x40] sm:$0xff]
      %v1369 = vld [vmem:[%s5 + $0x48] sm:$0xff]
      %v1370 = vld [vmem:[%s5 + $0x50] sm:$0xff]
      %v1371 = vld [vmem:[%s5 + $0x58] sm:$0xff]
      %v1373 = vsel %vm1238, %v1368, 0
      %v1376 = vsel %vm1238, %v1369, 0
      %v1379 = vsel %vm1238, %v1370, 0
      %v1382 = vsel %vm1238, %v1371, 0
      %1384 = vmatpush.msra.mxu0 0.0
      %1385 = vmatpush.msra.mxu0 0.0
      %1386 = vmatpush.msra.mxu0 0.0
      %1387 = vmatpush.msra.mxu0 0.0
      %1388 = vmatpush.msra.mxu0 0.0
      %1389 = vmatpush.msra.mxu0 0.0
      %1390 = vmatpush.msra.mxu0 0.0
      %1391 = vmatpush.msra.mxu0 0.0
      %1392 = vmatpush.msra.mxu0 %v1366
      %1393 = vmatpush.msra.mxu0 %v1363
      %1394 = vmatpush.msra.mxu0 %v1360
      %1395 = vmatpush.msra.mxu0 %v1357
      %1396 = vmatpush.msra.mxu0 %v1354
      %1397 = vmatpush.msra.mxu0 %v1351
      %1398 = vmatpush.msra.mxu0 %v1348
      %1399 = vmatpush.msra.mxu0 %v1345
      %1400 = vmatmul.f32.gmra.mxu0 %v1373
      %v1401 = vpop.f32.mrf.mxu0
      %v1402 = vadd.f32 0.0, %v1401
      %1403 = vmatmul.f32.gmra.mxu0 %v1376
      %v1404 = vpop.f32.mrf.mxu0
      %v1405 = vadd.f32 0.0, %v1404
      %1406 = vmatmul.f32.gmra.mxu0 %v1379
      %v1407 = vpop.f32.mrf.mxu0
      %v1408 = vadd.f32 0.0, %v1407
      %1409 = vmatmul.f32.gmra.mxu0 %v1382
      %v1410 = vpop.f32.mrf.mxu0
      %v1411 = vadd.f32 0.0, %v1410
      %1412 = vdwg.mxu0
      %v1413 = vadd.f32 %v1310, %v1402
      %v1414 = vadd.f32 %v1313, %v1405
      %v1415 = vadd.f32 %v1316, %v1408
      %v1416 = vadd.f32 %v1319, %v1411
      %v1417 = vld [vmem:[%s6] sm:$0xff]
      %v1418 = vld [vmem:[%s6 + $0x8] sm:$0xff]
      %v1419 = vld [vmem:[%s6 + $0x10] sm:$0xff]
      %v1420 = vld [vmem:[%s6 + $0x18] sm:$0xff]
      %1422 = vset.pattern.permute.xlu0 0
      %1423 = vperm.xlu0 %1422, %v1417
      %v1424 = vpop.permute.xlu0 %1423
      %1427 = vset.pattern.permute.xlu0 0
      %1428 = vperm.xlu0 %1427, %v1418
      %v1429 = vpop.permute.xlu0 %1428
      %1432 = vset.pattern.permute.xlu0 0
      %1433 = vperm.xlu0 %1432, %v1419
      %v1434 = vpop.permute.xlu0 %1433
      %1437 = vset.pattern.permute.xlu0 0
      %1438 = vperm.xlu0 %1437, %v1420
      %v1439 = vpop.permute.xlu0 %1438
      %v1441 = vadd.f32 %v1413, %v1424
      %v1442 = vadd.f32 %v1414, %v1429
      %v1443 = vadd.f32 %v1415, %v1434
      %v1444 = vadd.f32 %v1416, %v1439
      %v1445 = vmax.f32 %v1441, 0.0
      %v1446 = vmax.f32 %v1442, 0.0
      %v1447 = vmax.f32 %v1443, 0.0
      %v1448 = vmax.f32 %v1444, 0.0
      %1453 = vrot.lane.b32.xlu0 %v1445, 127
      %v1454 = vpop.permute.xlu0 %1453
      %1455 = vrot.lane.b32.xlu0 %v1446, 127
      %v1456 = vpop.permute.xlu0 %1455
      %1457 = vrot.lane.b32.xlu0 %v1447, 127
      %v1458 = vpop.permute.xlu0 %1457
      %1459 = vrot.lane.b32.xlu0 %v1448, 127
      %v1460 = vpop.permute.xlu0 %1459
      %v1465 = vmax.f32 %v1445, %v1454
      %v1466 = vmax.f32 %v1446, %v1456
      %v1467 = vmax.f32 %v1447, %v1458
      %v1468 = vmax.f32 %v1448, %v1460
      %1469 = vrot.lane.b32.xlu0 %v1445, 126
      %v1470 = vpop.permute.xlu0 %1469
      %1471 = vrot.lane.b32.xlu0 %v1446, 126
      %v1472 = vpop.permute.xlu0 %1471
      %1473 = vrot.lane.b32.xlu0 %v1447, 126
      %v1474 = vpop.permute.xlu0 %1473
      %1475 = vrot.lane.b32.xlu0 %v1448, 126
      %v1476 = vpop.permute.xlu0 %1475
      %v1481 = vmax.f32 %v1465, %v1470
      %v1482 = vmax.f32 %v1466, %v1472
      %v1483 = vmax.f32 %v1467, %v1474
      %v1484 = vmax.f32 %v1468, %v1476
      %v1485 = vld [vmem:[%s8] sm:$0xff]
      %v1486 = vld [vmem:[%s8 + $0x8] sm:$0x1]
      %vm1487 = vcmask 72704
      %v1489 = vsel %vm1487, %v1481, 0
      %v1492 = vsel %vm1487, %v1482, 0
      %v1495 = vsel %vm1487, %v1483, 0
      %v1498 = vsel %vm1487, %v1484, 0
      %vm1500 = vcmask 1040384
      %v1502 = vsel %vm1500, %v1486, 0
      %1504 = vmatpush.msra.mxu0 0.0
      %1505 = vmatpush.msra.mxu0 0.0
      %1506 = vmatpush.msra.mxu0 0.0
      %1507 = vmatpush.msra.mxu0 0.0
      %1508 = vmatpush.msra.mxu0 0.0
      %1509 = vmatpush.msra.mxu0 0.0
      %1510 = vmatpush.msra.mxu0 0.0
      %1511 = vmatpush.msra.mxu0 0.0
      %1512 = vmatpush.msra.mxu0 0.0
      %1513 = vmatpush.msra.mxu0 0.0
      %1514 = vmatpush.msra.mxu0 0.0
      %1515 = vmatpush.msra.mxu0 0.0
      %1516 = vmatpush.msra.mxu0 0.0
      %1517 = vmatpush.msra.mxu0 0.0
      %1518 = vmatpush.msra.mxu0 %v1502
      %1519 = vmatpush.msra.mxu0 %v1485
      %1520 = vmatmul.f32.gmra.mxu0 %v1489
      %v1521 = vpop.f32.mrf.mxu0
      %v1522 = vadd.f32 0.0, %v1521
      %1523 = vmatmul.f32.gmra.mxu0 %v1492
      %v1524 = vpop.f32.mrf.mxu0
      %v1525 = vadd.f32 0.0, %v1524
      %1526 = vmatmul.f32.gmra.mxu0 %v1495
      %v1527 = vpop.f32.mrf.mxu0
      %v1528 = vadd.f32 0.0, %v1527
      %1529 = vmatmul.f32.gmra.mxu0 %v1498
      %v1530 = vpop.f32.mrf.mxu0
      %v1531 = vadd.f32 0.0, %v1530
      %1532 = vdwg.mxu0
      %v1533 = vld [vmem:[%s9] sm:$0x1f]
      %vm1534 = vcmask 39936
      %v1536 = vsel %vm1534, %v1522, 0
      %v1539 = vsel %vm1534, %v1525, 0
      %v1542 = vsel %vm1534, %v1528, 0
      %v1545 = vsel %vm1534, %v1531, 0
      %v1548 = vsel %vm1066, %v1533, 0
      %1550 = vmatpush.msra.mxu0 0.0
      %1551 = vmatpush.msra.mxu0 0.0
      %1552 = vmatpush.msra.mxu0 0.0
      %1553 = vmatpush.msra.mxu0 0.0
      %1554 = vmatpush.msra.mxu0 0.0
      %1555 = vmatpush.msra.mxu0 0.0
      %1556 = vmatpush.msra.mxu0 0.0
      %1557 = vmatpush.msra.mxu0 0.0
      %1558 = vmatpush.msra.mxu0 0.0
      %1559 = vmatpush.msra.mxu0 0.0
      %1560 = vmatpush.msra.mxu0 0.0
      %1561 = vmatpush.msra.mxu0 0.0
      %1562 = vmatpush.msra.mxu0 0.0
      %1563 = vmatpush.msra.mxu0 0.0
      %1564 = vmatpush.msra.mxu0 0.0
      %1565 = vmatpush.msra.mxu0 %v1548
      %1566 = vmatmul.f32.gmra.mxu0 %v1536
      %v1567 = vpop.f32.mrf.mxu0
      %v1568 = vadd.f32 0.0, %v1567
      %1569 = vmatmul.f32.gmra.mxu0 %v1539
      %v1570 = vpop.f32.mrf.mxu0
      %v1571 = vadd.f32 0.0, %v1570
      %1572 = vmatmul.f32.gmra.mxu0 %v1542
      %v1573 = vpop.f32.mrf.mxu0
      %v1574 = vadd.f32 0.0, %v1573
      %1575 = vmatmul.f32.gmra.mxu0 %v1545
      %v1576 = vpop.f32.mrf.mxu0
      %v1577 = vadd.f32 0.0, %v1576
      %1578 = vdwg.mxu0
      %v1579 = vld [vmem:[%s12] sm:$0xff]
      %v1580 = vld [vmem:[%s12 + $0x8] sm:$0x3]
      %vm1581 = vcmask 80896
      %v1583 = vsel %vm1581, %v1568, 0
      %v1586 = vsel %vm1581, %v1571, 0
      %v1589 = vsel %vm1581, %v1574, 0
      %v1592 = vsel %vm1581, %v1577, 0
      %vm1594 = vcmask 1041408
      %v1596 = vsel %vm1594, %v1580, 0
      %1598 = vmatpush.msra.mxu0 0.0
      %1599 = vmatpush.msra.mxu0 0.0
      %1600 = vmatpush.msra.mxu0 0.0
      %1601 = vmatpush.msra.mxu0 0.0
      %1602 = vmatpush.msra.mxu0 0.0
      %1603 = vmatpush.msra.mxu0 0.0
      %1604 = vmatpush.msra.mxu0 0.0
      %1605 = vmatpush.msra.mxu0 0.0
      %1606 = vmatpush.msra.mxu0 0.0
      %1607 = vmatpush.msra.mxu0 0.0
      %1608 = vmatpush.msra.mxu0 0.0
      %1609 = vmatpush.msra.mxu0 0.0
      %1610 = vmatpush.msra.mxu0 0.0
      %1611 = vmatpush.msra.mxu0 0.0
      %1612 = vmatpush.msra.mxu0 %v1596
      %1613 = vmatpush.msra.mxu0 %v1579
      %1614 = vmatmul.f32.gmra.mxu0 %v1583
      %v1615 = vpop.f32.mrf.mxu0
      %v1616 = vadd.f32 0.0, %v1615
      %1617 = vmatmul.f32.gmra.mxu0 %v1586
      %v1618 = vpop.f32.mrf.mxu0
      %v1619 = vadd.f32 0.0, %v1618
      %1620 = vmatmul.f32.gmra.mxu0 %v1589
      %v1621 = vpop.f32.mrf.mxu0
      %v1622 = vadd.f32 0.0, %v1621
      %1623 = vmatmul.f32.gmra.mxu0 %v1592
      %v1624 = vpop.f32.mrf.mxu0
      %v1625 = vadd.f32 0.0, %v1624
      %1626 = vdwg.mxu0
      %v1627 = vld [vmem:[%s10] sm:$0xff]
      %v1628 = vld [vmem:[%s10 + $0x8] sm:$0xff]
      %v1629 = vld [vmem:[%s10 + $0x10] sm:$0xff]
      %v1630 = vld [vmem:[%s10 + $0x18] sm:$0xff]
      %v1631 = vld [vmem:[%s10 + $0x20] sm:$0xff]
      %v1632 = vld [vmem:[%s10 + $0x28] sm:$0xff]
      %v1633 = vld [vmem:[%s10 + $0x30] sm:$0xff]
      %v1634 = vld [vmem:[%s10 + $0x38] sm:$0xff]
      %s1635 = scalar_lea.vmem %s12, 16
      %v1636 = vld [vmem:[%s1635] sm:$0xff]
      %v1637 = vld [vmem:[%s1635 + $0x8] sm:$0x3]
      %v1639 = vsel %vm1594, %v1637, 0
      %1641 = vmatpush.msra.mxu0 0.0
      %1642 = vmatpush.msra.mxu0 0.0
      %1643 = vmatpush.msra.mxu0 0.0
      %1644 = vmatpush.msra.mxu0 0.0
      %1645 = vmatpush.msra.mxu0 0.0
      %1646 = vmatpush.msra.mxu0 0.0
      %1647 = vmatpush.msra.mxu0 0.0
      %1648 = vmatpush.msra.mxu0 0.0
      %1649 = vmatpush.msra.mxu0 0.0
      %1650 = vmatpush.msra.mxu0 0.0
      %1651 = vmatpush.msra.mxu0 0.0
      %1652 = vmatpush.msra.mxu0 0.0
      %1653 = vmatpush.msra.mxu0 0.0
      %1654 = vmatpush.msra.mxu0 0.0
      %1655 = vmatpush.msra.mxu0 %v1639
      %1656 = vmatpush.msra.mxu0 %v1636
      %1657 = vmatmul.f32.gmra.mxu0 %v1583
      %v1658 = vpop.f32.mrf.mxu0
      %v1659 = vadd.f32 0.0, %v1658
      %1660 = vmatmul.f32.gmra.mxu0 %v1586
      %v1661 = vpop.f32.mrf.mxu0
      %v1662 = vadd.f32 0.0, %v1661
      %1663 = vmatmul.f32.gmra.mxu0 %v1589
      %v1664 = vpop.f32.mrf.mxu0
      %v1665 = vadd.f32 0.0, %v1664
      %1666 = vmatmul.f32.gmra.mxu0 %v1592
      %v1667 = vpop.f32.mrf.mxu0
      %v1668 = vadd.f32 0.0, %v1667
      %1669 = vdwg.mxu0
      %v1670 = vld [vmem:[%s10 + $0x40] sm:$0xff]
      %v1671 = vld [vmem:[%s10 + $0x48] sm:$0xff]
      %v1672 = vld [vmem:[%s10 + $0x50] sm:$0xff]
      %v1673 = vld [vmem:[%s10 + $0x58] sm:$0xff]
      %v1674 = vld [vmem:[%s10 + $0x60] sm:$0xff]
      %v1675 = vld [vmem:[%s10 + $0x68] sm:$0xff]
      %v1676 = vld [vmem:[%s10 + $0x70] sm:$0xff]
      %v1677 = vld [vmem:[%s10 + $0x78] sm:$0xff]
      %v1679 = vsel %vm654, %v1670, 0
      %v1682 = vsel %vm654, %v1671, 0
      %v1685 = vsel %vm654, %v1672, 0
      %v1688 = vsel %vm654, %v1673, 0
      %v1691 = vsel %vm654, %v1674, 0
      %v1694 = vsel %vm654, %v1675, 0
      %v1697 = vsel %vm654, %v1676, 0
      %v1700 = vsel %vm654, %v1677, 0
      %1702 = vmatpush.msra.mxu0 0.0
      %1703 = vmatpush.msra.mxu0 0.0
      %1704 = vmatpush.msra.mxu0 0.0
      %1705 = vmatpush.msra.mxu0 0.0
      %1706 = vmatpush.msra.mxu0 0.0
      %1707 = vmatpush.msra.mxu0 0.0
      %1708 = vmatpush.msra.mxu0 0.0
      %1709 = vmatpush.msra.mxu0 0.0
      %1710 = vmatpush.msra.mxu0 0.0
      %1711 = vmatpush.msra.mxu0 0.0
      %1712 = vmatpush.msra.mxu0 0.0
      %1713 = vmatpush.msra.mxu0 0.0
      %1714 = vmatpush.msra.mxu0 %v1668
      %1715 = vmatpush.msra.mxu0 %v1665
      %1716 = vmatpush.msra.mxu0 %v1662
      %1717 = vmatpush.msra.mxu0 %v1659
      %1718 = vmatmul.f32.gmra.mxu0 %v1679
      %v1719 = vpop.f32.mrf.mxu0
      %v1720 = vadd.f32 0.0, %v1719
      %1721 = vmatmul.f32.gmra.mxu0 %v1682
      %v1722 = vpop.f32.mrf.mxu0
      %v1723 = vadd.f32 0.0, %v1722
      %1724 = vmatmul.f32.gmra.mxu0 %v1685
      %v1725 = vpop.f32.mrf.mxu0
      %v1726 = vadd.f32 0.0, %v1725
      %1727 = vmatmul.f32.gmra.mxu0 %v1688
      %v1728 = vpop.f32.mrf.mxu0
      %v1729 = vadd.f32 0.0, %v1728
      %1730 = vmatmul.f32.gmra.mxu0 %v1691
      %v1731 = vpop.f32.mrf.mxu0
      %v1732 = vadd.f32 0.0, %v1731
      %1733 = vmatmul.f32.gmra.mxu0 %v1694
      %v1734 = vpop.f32.mrf.mxu0
      %v1735 = vadd.f32 0.0, %v1734
      %1736 = vmatmul.f32.gmra.mxu0 %v1697
      %v1737 = vpop.f32.mrf.mxu0
      %v1738 = vadd.f32 0.0, %v1737
      %1739 = vmatmul.f32.gmra.mxu0 %v1700
      %v1740 = vpop.f32.mrf.mxu0
      %v1741 = vadd.f32 0.0, %v1740
      %1742 = vdwg.mxu0
      %v1744 = vsel %vm654, %v1627, 0
      %v1747 = vsel %vm654, %v1628, 0
      %v1750 = vsel %vm654, %v1629, 0
      %v1753 = vsel %vm654, %v1630, 0
      %v1756 = vsel %vm654, %v1631, 0
      %v1759 = vsel %vm654, %v1632, 0
      %v1762 = vsel %vm654, %v1633, 0
      %v1765 = vsel %vm654, %v1634, 0
      %1767 = vmatpush.msra.mxu0 0.0
      %1768 = vmatpush.msra.mxu0 0.0
      %1769 = vmatpush.msra.mxu0 0.0
      %1770 = vmatpush.msra.mxu0 0.0
      %1771 = vmatpush.msra.mxu0 0.0
      %1772 = vmatpush.msra.mxu0 0.0
      %1773 = vmatpush.msra.mxu0 0.0
      %1774 = vmatpush.msra.mxu0 0.0
      %1775 = vmatpush.msra.mxu0 0.0
      %1776 = vmatpush.msra.mxu0 0.0
      %1777 = vmatpush.msra.mxu0 0.0
      %1778 = vmatpush.msra.mxu0 0.0
      %1779 = vmatpush.msra.mxu0 %v1625
      %1780 = vmatpush.msra.mxu0 %v1622
      %1781 = vmatpush.msra.mxu0 %v1619
      %1782 = vmatpush.msra.mxu0 %v1616
      %1783 = vmatmul.f32.gmra.mxu0 %v1744
      %v1784 = vpop.f32.mrf.mxu0
      %v1785 = vadd.f32 %v1720, %v1784
      %1786 = vmatmul.f32.gmra.mxu0 %v1747
      %v1787 = vpop.f32.mrf.mxu0
      %v1788 = vadd.f32 %v1723, %v1787
      %1789 = vmatmul.f32.gmra.mxu0 %v1750
      %v1790 = vpop.f32.mrf.mxu0
      %v1791 = vadd.f32 %v1726, %v1790
      %1792 = vmatmul.f32.gmra.mxu0 %v1753
      %v1793 = vpop.f32.mrf.mxu0
      %v1794 = vadd.f32 %v1729, %v1793
      %1795 = vmatmul.f32.gmra.mxu0 %v1756
      %v1796 = vpop.f32.mrf.mxu0
      %v1797 = vadd.f32 %v1732, %v1796
      %1798 = vmatmul.f32.gmra.mxu0 %v1759
      %v1799 = vpop.f32.mrf.mxu0
      %v1800 = vadd.f32 %v1735, %v1799
      %1801 = vmatmul.f32.gmra.mxu0 %v1762
      %v1802 = vpop.f32.mrf.mxu0
      %v1803 = vadd.f32 %v1738, %v1802
      %1804 = vmatmul.f32.gmra.mxu0 %v1765
      %v1805 = vpop.f32.mrf.mxu0
      %v1806 = vadd.f32 %v1741, %v1805
      %1807 = vdwg.mxu0
      %s1808 = scalar_lea.vmem %s12, 32
      %v1809 = vld [vmem:[%s1808] sm:$0xff]
      %v1810 = vld [vmem:[%s1808 + $0x8] sm:$0x3]
      %v1812 = vsel %vm1594, %v1810, 0
      %1814 = vmatpush.msra.mxu0 0.0
      %1815 = vmatpush.msra.mxu0 0.0
      %1816 = vmatpush.msra.mxu0 0.0
      %1817 = vmatpush.msra.mxu0 0.0
      %1818 = vmatpush.msra.mxu0 0.0
      %1819 = vmatpush.msra.mxu0 0.0
      %1820 = vmatpush.msra.mxu0 0.0
      %1821 = vmatpush.msra.mxu0 0.0
      %1822 = vmatpush.msra.mxu0 0.0
      %1823 = vmatpush.msra.mxu0 0.0
      %1824 = vmatpush.msra.mxu0 0.0
      %1825 = vmatpush.msra.mxu0 0.0
      %1826 = vmatpush.msra.mxu0 0.0
      %1827 = vmatpush.msra.mxu0 0.0
      %1828 = vmatpush.msra.mxu0 %v1812
      %1829 = vmatpush.msra.mxu0 %v1809
      %1830 = vmatmul.f32.gmra.mxu0 %v1583
      %v1831 = vpop.f32.mrf.mxu0
      %v1832 = vadd.f32 0.0, %v1831
      %1833 = vmatmul.f32.gmra.mxu0 %v1586
      %v1834 = vpop.f32.mrf.mxu0
      %v1835 = vadd.f32 0.0, %v1834
      %1836 = vmatmul.f32.gmra.mxu0 %v1589
      %v1837 = vpop.f32.mrf.mxu0
      %v1838 = vadd.f32 0.0, %v1837
      %1839 = vmatmul.f32.gmra.mxu0 %v1592
      %v1840 = vpop.f32.mrf.mxu0
      %v1841 = vadd.f32 0.0, %v1840
      %1842 = vdwg.mxu0
      %v1843 = vld [vmem:[%s10 + $0x80] sm:$0xff]
      %v1844 = vld [vmem:[%s10 + $0x88] sm:$0xff]
      %v1845 = vld [vmem:[%s10 + $0x90] sm:$0xff]
      %v1846 = vld [vmem:[%s10 + $0x98] sm:$0xff]
      %v1847 = vld [vmem:[%s10 + $0xa0] sm:$0xff]
      %v1848 = vld [vmem:[%s10 + $0xa8] sm:$0xff]
      %v1849 = vld [vmem:[%s10 + $0xb0] sm:$0xff]
      %v1850 = vld [vmem:[%s10 + $0xb8] sm:$0xff]
      %v1852 = vsel %vm654, %v1843, 0
      %v1855 = vsel %vm654, %v1844, 0
      %v1858 = vsel %vm654, %v1845, 0
      %v1861 = vsel %vm654, %v1846, 0
      %v1864 = vsel %vm654, %v1847, 0
      %v1867 = vsel %vm654, %v1848, 0
      %v1870 = vsel %vm654, %v1849, 0
      %v1873 = vsel %vm654, %v1850, 0
      %1875 = vmatpush.msra.mxu0 0.0
      %1876 = vmatpush.msra.mxu0 0.0
      %1877 = vmatpush.msra.mxu0 0.0
      %1878 = vmatpush.msra.mxu0 0.0
      %1879 = vmatpush.msra.mxu0 0.0
      %1880 = vmatpush.msra.mxu0 0.0
      %1881 = vmatpush.msra.mxu0 0.0
      %1882 = vmatpush.msra.mxu0 0.0
      %1883 = vmatpush.msra.mxu0 0.0
      %1884 = vmatpush.msra.mxu0 0.0
      %1885 = vmatpush.msra.mxu0 0.0
      %1886 = vmatpush.msra.mxu0 0.0
      %1887 = vmatpush.msra.mxu0 %v1841
      %1888 = vmatpush.msra.mxu0 %v1838
      %1889 = vmatpush.msra.mxu0 %v1835
      %1890 = vmatpush.msra.mxu0 %v1832
      %1891 = vmatmul.f32.gmra.mxu0 %v1852
      %v1892 = vpop.f32.mrf.mxu0
      %v1893 = vadd.f32 0.0, %v1892
      %1894 = vmatmul.f32.gmra.mxu0 %v1855
      %v1895 = vpop.f32.mrf.mxu0
      %v1896 = vadd.f32 0.0, %v1895
      %1897 = vmatmul.f32.gmra.mxu0 %v1858
      %v1898 = vpop.f32.mrf.mxu0
      %v1899 = vadd.f32 0.0, %v1898
      %1900 = vmatmul.f32.gmra.mxu0 %v1861
      %v1901 = vpop.f32.mrf.mxu0
      %v1902 = vadd.f32 0.0, %v1901
      %1903 = vmatmul.f32.gmra.mxu0 %v1864
      %v1904 = vpop.f32.mrf.mxu0
      %v1905 = vadd.f32 0.0, %v1904
      %1906 = vmatmul.f32.gmra.mxu0 %v1867
      %v1907 = vpop.f32.mrf.mxu0
      %v1908 = vadd.f32 0.0, %v1907
      %1909 = vmatmul.f32.gmra.mxu0 %v1870
      %v1910 = vpop.f32.mrf.mxu0
      %v1911 = vadd.f32 0.0, %v1910
      %1912 = vmatmul.f32.gmra.mxu0 %v1873
      %v1913 = vpop.f32.mrf.mxu0
      %v1914 = vadd.f32 0.0, %v1913
      %1915 = vdwg.mxu0
      %v1916 = vadd.f32 %v1785, %v1893
      %v1917 = vadd.f32 %v1788, %v1896
      %v1918 = vadd.f32 %v1791, %v1899
      %v1919 = vadd.f32 %v1794, %v1902
      %v1920 = vadd.f32 %v1797, %v1905
      %v1921 = vadd.f32 %v1800, %v1908
      %v1922 = vadd.f32 %v1803, %v1911
      %v1923 = vadd.f32 %v1806, %v1914
      %v1924 = vld [vmem:[%s11] sm:$0xff]
      %v1925 = vld [vmem:[%s11 + $0x8] sm:$0xff]
      %v1926 = vld [vmem:[%s11 + $0x10] sm:$0xff]
      %v1927 = vld [vmem:[%s11 + $0x18] sm:$0xff]
      %v1928 = vld [vmem:[%s11 + $0x20] sm:$0xff]
      %v1929 = vld [vmem:[%s11 + $0x28] sm:$0xff]
      %v1930 = vld [vmem:[%s11 + $0x30] sm:$0xff]
      %v1931 = vld [vmem:[%s11 + $0x38] sm:$0xff]
      %1933 = vset.pattern.permute.xlu0 0
      %1934 = vperm.xlu0 %1933, %v1924
      %v1935 = vpop.permute.xlu0 %1934
      %1938 = vset.pattern.permute.xlu0 0
      %1939 = vperm.xlu0 %1938, %v1925
      %v1940 = vpop.permute.xlu0 %1939
      %1943 = vset.pattern.permute.xlu0 0
      %1944 = vperm.xlu0 %1943, %v1926
      %v1945 = vpop.permute.xlu0 %1944
      %1948 = vset.pattern.permute.xlu0 0
      %1949 = vperm.xlu0 %1948, %v1927
      %v1950 = vpop.permute.xlu0 %1949
      %1953 = vset.pattern.permute.xlu0 0
      %1954 = vperm.xlu0 %1953, %v1928
      %v1955 = vpop.permute.xlu0 %1954
      %1958 = vset.pattern.permute.xlu0 0
      %1959 = vperm.xlu0 %1958, %v1929
      %v1960 = vpop.permute.xlu0 %1959
      %1963 = vset.pattern.permute.xlu0 0
      %1964 = vperm.xlu0 %1963, %v1930
      %v1965 = vpop.permute.xlu0 %1964
      %1968 = vset.pattern.permute.xlu0 0
      %1969 = vperm.xlu0 %1968, %v1931
      %v1970 = vpop.permute.xlu0 %1969
      %v1972 = vadd.f32 %v1916, %v1935
      %v1973 = vadd.f32 %v1917, %v1940
      %v1974 = vadd.f32 %v1918, %v1945
      %v1975 = vadd.f32 %v1919, %v1950
      %v1976 = vadd.f32 %v1920, %v1955
      %v1977 = vadd.f32 %v1921, %v1960
      %v1978 = vadd.f32 %v1922, %v1965
      %v1979 = vadd.f32 %v1923, %v1970
      %v1980 = vtanh.pop %v1972
      %v1981 = vtanh.pop %v1973
      %v1982 = vtanh.pop %v1974
      %v1983 = vtanh.pop %v1975
      %v1984 = vtanh.pop %v1976
      %v1985 = vtanh.pop %v1977
      %v1986 = vtanh.pop %v1978
      %v1987 = vtanh.pop %v1979
      %v1988 = vld [vmem:[%s13] sm:$0xff]
      %v1989 = vld [vmem:[%s13 + $0x8] sm:$0xf]
      %vm1990 = vcmask 97280
      %v1992 = vsel %vm1990, %v1980, 0
      %v1995 = vsel %vm1990, %v1981, 0
      %v1998 = vsel %vm1990, %v1982, 0
      %v2001 = vsel %vm1990, %v1983, 0
      %v2004 = vsel %vm1990, %v1984, 0
      %v2007 = vsel %vm1990, %v1985, 0
      %v2010 = vsel %vm1990, %v1986, 0
      %v2013 = vsel %vm1990, %v1987, 0
      %vm2015 = vcmask 1043456
      %v2017 = vsel %vm2015, %v1989, 0
      %2019 = vmatpush.msra.mxu0 0.0
      %2020 = vmatpush.msra.mxu0 0.0
      %2021 = vmatpush.msra.mxu0 0.0
      %2022 = vmatpush.msra.mxu0 0.0
      %2023 = vmatpush.msra.mxu0 0.0
      %2024 = vmatpush.msra.mxu0 0.0
      %2025 = vmatpush.msra.mxu0 0.0
      %2026 = vmatpush.msra.mxu0 0.0
      %2027 = vmatpush.msra.mxu0 0.0
      %2028 = vmatpush.msra.mxu0 0.0
      %2029 = vmatpush.msra.mxu0 0.0
      %2030 = vmatpush.msra.mxu0 0.0
      %2031 = vmatpush.msra.mxu0 0.0
      %2032 = vmatpush.msra.mxu0 0.0
      %2033 = vmatpush.msra.mxu0 %v2017
      %2034 = vmatpush.msra.mxu0 %v1988
      %2035 = vmatmul.f32.gmra.mxu0 %v1992
      %v2036 = vpop.f32.mrf.mxu0
      %v2037 = vadd.f32 0.0, %v2036
      %2038 = vmatmul.f32.gmra.mxu0 %v1995
      %v2039 = vpop.f32.mrf.mxu0
      %v2040 = vadd.f32 0.0, %v2039
      %2041 = vmatmul.f32.gmra.mxu0 %v1998
      %v2042 = vpop.f32.mrf.mxu0
      %v2043 = vadd.f32 0.0, %v2042
      %2044 = vmatmul.f32.gmra.mxu0 %v2001
      %v2045 = vpop.f32.mrf.mxu0
      %v2046 = vadd.f32 0.0, %v2045
      %2047 = vmatmul.f32.gmra.mxu0 %v2004
      %v2048 = vpop.f32.mrf.mxu0
      %v2049 = vadd.f32 0.0, %v2048
      %2050 = vmatmul.f32.gmra.mxu0 %v2007
      %v2051 = vpop.f32.mrf.mxu0
      %v2052 = vadd.f32 0.0, %v2051
      %2053 = vmatmul.f32.gmra.mxu0 %v2010
      %v2054 = vpop.f32.mrf.mxu0
      %v2055 = vadd.f32 0.0, %v2054
      %2056 = vmatmul.f32.gmra.mxu0 %v2013
      %v2057 = vpop.f32.mrf.mxu0
      %v2058 = vadd.f32 0.0, %v2057
      %2059 = vdwg.mxu0
      %v2060 = vld [vmem:[%s16] sm:$0xff]
      %v2061 = vld [vmem:[%s16 + $0x8] sm:$0xff]
      %v2062 = vld [vmem:[%s16 + $0x10] sm:$0xff]
      %vm2063 = vcmask 195584
      %v2065 = vsel %vm2063, %v2037, 0
      %v2068 = vsel %vm2063, %v2040, 0
      %v2071 = vsel %vm2063, %v2043, 0
      %v2074 = vsel %vm2063, %v2046, 0
      %v2077 = vsel %vm2063, %v2049, 0
      %v2080 = vsel %vm2063, %v2052, 0
      %v2083 = vsel %vm2063, %v2055, 0
      %v2086 = vsel %vm2063, %v2058, 0
      %2088 = vmatpush.msra.mxu0 0.0
      %2089 = vmatpush.msra.mxu0 0.0
      %2090 = vmatpush.msra.mxu0 0.0
      %2091 = vmatpush.msra.mxu0 0.0
      %2092 = vmatpush.msra.mxu0 0.0
      %2093 = vmatpush.msra.mxu0 0.0
      %2094 = vmatpush.msra.mxu0 0.0
      %2095 = vmatpush.msra.mxu0 0.0
      %2096 = vmatpush.msra.mxu0 0.0
      %2097 = vmatpush.msra.mxu0 0.0
      %2098 = vmatpush.msra.mxu0 0.0
      %2099 = vmatpush.msra.mxu0 0.0
      %2100 = vmatpush.msra.mxu0 0.0
      %2101 = vmatpush.msra.mxu0 %v2062
      %2102 = vmatpush.msra.mxu0 %v2061
      %2103 = vmatpush.msra.mxu0 %v2060
      %2104 = vmatmul.f32.gmra.mxu0 %v2065
      %v2105 = vpop.f32.mrf.mxu0
      %v2106 = vadd.f32 0.0, %v2105
      %2107 = vmatmul.f32.gmra.mxu0 %v2068
      %v2108 = vpop.f32.mrf.mxu0
      %v2109 = vadd.f32 0.0, %v2108
      %2110 = vmatmul.f32.gmra.mxu0 %v2071
      %v2111 = vpop.f32.mrf.mxu0
      %v2112 = vadd.f32 0.0, %v2111
      %2113 = vmatmul.f32.gmra.mxu0 %v2074
      %v2114 = vpop.f32.mrf.mxu0
      %v2115 = vadd.f32 0.0, %v2114
      %2116 = vmatmul.f32.gmra.mxu0 %v2077
      %v2117 = vpop.f32.mrf.mxu0
      %v2118 = vadd.f32 0.0, %v2117
      %2119 = vmatmul.f32.gmra.mxu0 %v2080
      %v2120 = vpop.f32.mrf.mxu0
      %v2121 = vadd.f32 0.0, %v2120
      %2122 = vmatmul.f32.gmra.mxu0 %v2083
      %v2123 = vpop.f32.mrf.mxu0
      %v2124 = vadd.f32 0.0, %v2123
      %2125 = vmatmul.f32.gmra.mxu0 %v2086
      %v2126 = vpop.f32.mrf.mxu0
      %v2127 = vadd.f32 0.0, %v2126
      %2128 = vdwg.mxu0
      %v2129 = vld [vmem:[%s14] sm:$0xff]
      %v2130 = vld [vmem:[%s14 + $0x8] sm:$0xff]
      %v2131 = vld [vmem:[%s14 + $0x10] sm:$0xff]
      %v2132 = vld [vmem:[%s14 + $0x18] sm:$0xff]
      %s2133 = scalar_lea.vmem %s16, 24
      %v2134 = vld [vmem:[%s2133] sm:$0xff]
      %v2135 = vld [vmem:[%s2133 + $0x8] sm:$0xff]
      %v2136 = vld [vmem:[%s2133 + $0x10] sm:$0xff]
      %2137 = vmatpush.msra.mxu0 0.0
      %2138 = vmatpush.msra.mxu0 0.0
      %2139 = vmatpush.msra.mxu0 0.0
      %2140 = vmatpush.msra.mxu0 0.0
      %2141 = vmatpush.msra.mxu0 0.0
      %2142 = vmatpush.msra.mxu0 0.0
      %2143 = vmatpush.msra.mxu0 0.0
      %2144 = vmatpush.msra.mxu0 0.0
      %2145 = vmatpush.msra.mxu0 0.0
      %2146 = vmatpush.msra.mxu0 0.0
      %2147 = vmatpush.msra.mxu0 0.0
      %2148 = vmatpush.msra.mxu0 0.0
      %2149 = vmatpush.msra.mxu0 0.0
      %2150 = vmatpush.msra.mxu0 %v2136
      %2151 = vmatpush.msra.mxu0 %v2135
      %2152 = vmatpush.msra.mxu0 %v2134
      %2153 = vmatmul.f32.gmra.mxu0 %v2065
      %v2154 = vpop.f32.mrf.mxu0
      %v2155 = vadd.f32 0.0, %v2154
      %2156 = vmatmul.f32.gmra.mxu0 %v2068
      %v2157 = vpop.f32.mrf.mxu0
      %v2158 = vadd.f32 0.0, %v2157
      %2159 = vmatmul.f32.gmra.mxu0 %v2071
      %v2160 = vpop.f32.mrf.mxu0
      %v2161 = vadd.f32 0.0, %v2160
      %2162 = vmatmul.f32.gmra.mxu0 %v2074
      %v2163 = vpop.f32.mrf.mxu0
      %v2164 = vadd.f32 0.0, %v2163
      %2165 = vmatmul.f32.gmra.mxu0 %v2077
      %v2166 = vpop.f32.mrf.mxu0
      %v2167 = vadd.f32 0.0, %v2166
      %2168 = vmatmul.f32.gmra.mxu0 %v2080
      %v2169 = vpop.f32.mrf.mxu0
      %v2170 = vadd.f32 0.0, %v2169
      %2171 = vmatmul.f32.gmra.mxu0 %v2083
      %v2172 = vpop.f32.mrf.mxu0
      %v2173 = vadd.f32 0.0, %v2172
      %2174 = vmatmul.f32.gmra.mxu0 %v2086
      %v2175 = vpop.f32.mrf.mxu0
      %v2176 = vadd.f32 0.0, %v2175
      %2177 = vdwg.mxu0
      %v2178 = vld [vmem:[%s14 + $0x20] sm:$0xff]
      %v2179 = vld [vmem:[%s14 + $0x28] sm:$0xff]
      %v2180 = vld [vmem:[%s14 + $0x30] sm:$0xff]
      %v2181 = vld [vmem:[%s14 + $0x38] sm:$0xff]
      %v2183 = vsel %vm1238, %v2178, 0
      %v2186 = vsel %vm1238, %v2179, 0
      %v2189 = vsel %vm1238, %v2180, 0
      %v2192 = vsel %vm1238, %v2181, 0
      %2194 = vmatpush.msra.mxu0 0.0
      %2195 = vmatpush.msra.mxu0 0.0
      %2196 = vmatpush.msra.mxu0 0.0
      %2197 = vmatpush.msra.mxu0 0.0
      %2198 = vmatpush.msra.mxu0 0.0
      %2199 = vmatpush.msra.mxu0 0.0
      %2200 = vmatpush.msra.mxu0 0.0
      %2201 = vmatpush.msra.mxu0 0.0
      %2202 = vmatpush.msra.mxu0 %v2176
      %2203 = vmatpush.msra.mxu0 %v2173
      %2204 = vmatpush.msra.mxu0 %v2170
      %2205 = vmatpush.msra.mxu0 %v2167
      %2206 = vmatpush.msra.mxu0 %v2164
      %2207 = vmatpush.msra.mxu0 %v2161
      %2208 = vmatpush.msra.mxu0 %v2158
      %2209 = vmatpush.msra.mxu0 %v2155
      %2210 = vmatmul.f32.gmra.mxu0 %v2183
      %v2211 = vpop.f32.mrf.mxu0
      %v2212 = vadd.f32 0.0, %v2211
      %2213 = vmatmul.f32.gmra.mxu0 %v2186
      %v2214 = vpop.f32.mrf.mxu0
      %v2215 = vadd.f32 0.0, %v2214
      %2216 = vmatmul.f32.gmra.mxu0 %v2189
      %v2217 = vpop.f32.mrf.mxu0
      %v2218 = vadd.f32 0.0, %v2217
      %2219 = vmatmul.f32.gmra.mxu0 %v2192
      %v2220 = vpop.f32.mrf.mxu0
      %v2221 = vadd.f32 0.0, %v2220
      %2222 = vdwg.mxu0
      %v2224 = vsel %vm1238, %v2129, 0
      %v2227 = vsel %vm1238, %v2130, 0
      %v2230 = vsel %vm1238, %v2131, 0
      %v2233 = vsel %vm1238, %v2132, 0
      %2235 = vmatpush.msra.mxu0 0.0
      %2236 = vmatpush.msra.mxu0 0.0
      %2237 = vmatpush.msra.mxu0 0.0
      %2238 = vmatpush.msra.mxu0 0.0
      %2239 = vmatpush.msra.mxu0 0.0
      %2240 = vmatpush.msra.mxu0 0.0
      %2241 = vmatpush.msra.mxu0 0.0
      %2242 = vmatpush.msra.mxu0 0.0
      %2243 = vmatpush.msra.mxu0 %v2127
      %2244 = vmatpush.msra.mxu0 %v2124
      %2245 = vmatpush.msra.mxu0 %v2121
      %2246 = vmatpush.msra.mxu0 %v2118
      %2247 = vmatpush.msra.mxu0 %v2115
      %2248 = vmatpush.msra.mxu0 %v2112
      %2249 = vmatpush.msra.mxu0 %v2109
      %2250 = vmatpush.msra.mxu0 %v2106
      %2251 = vmatmul.f32.gmra.mxu0 %v2224
      %v2252 = vpop.f32.mrf.mxu0
      %v2253 = vadd.f32 %v2212, %v2252
      %2254 = vmatmul.f32.gmra.mxu0 %v2227
      %v2255 = vpop.f32.mrf.mxu0
      %v2256 = vadd.f32 %v2215, %v2255
      %2257 = vmatmul.f32.gmra.mxu0 %v2230
      %v2258 = vpop.f32.mrf.mxu0
      %v2259 = vadd.f32 %v2218, %v2258
      %2260 = vmatmul.f32.gmra.mxu0 %v2233
      %v2261 = vpop.f32.mrf.mxu0
      %v2262 = vadd.f32 %v2221, %v2261
      %2263 = vdwg.mxu0
      %s2264 = scalar_lea.vmem %s16, 48
      %v2265 = vld [vmem:[%s2264] sm:$0xff]
      %v2266 = vld [vmem:[%s2264 + $0x8] sm:$0xff]
      %v2267 = vld [vmem:[%s2264 + $0x10] sm:$0xff]
      %2268 = vmatpush.msra.mxu0 0.0
      %2269 = vmatpush.msra.mxu0 0.0
      %2270 = vmatpush.msra.mxu0 0.0
      %2271 = vmatpush.msra.mxu0 0.0
      %2272 = vmatpush.msra.mxu0 0.0
      %2273 = vmatpush.msra.mxu0 0.0
      %2274 = vmatpush.msra.mxu0 0.0
      %2275 = vmatpush.msra.mxu0 0.0
      %2276 = vmatpush.msra.mxu0 0.0
      %2277 = vmatpush.msra.mxu0 0.0
      %2278 = vmatpush.msra.mxu0 0.0
      %2279 = vmatpush.msra.mxu0 0.0
      %2280 = vmatpush.msra.mxu0 0.0
      %2281 = vmatpush.msra.mxu0 %v2267
      %2282 = vmatpush.msra.mxu0 %v2266
      %2283 = vmatpush.msra.mxu0 %v2265
      %2284 = vmatmul.f32.gmra.mxu0 %v2065
      %v2285 = vpop.f32.mrf.mxu0
      %v2286 = vadd.f32 0.0, %v2285
      %2287 = vmatmul.f32.gmra.mxu0 %v2068
      %v2288 = vpop.f32.mrf.mxu0
      %v2289 = vadd.f32 0.0, %v2288
      %2290 = vmatmul.f32.gmra.mxu0 %v2071
      %v2291 = vpop.f32.mrf.mxu0
      %v2292 = vadd.f32 0.0, %v2291
      %2293 = vmatmul.f32.gmra.mxu0 %v2074
      %v2294 = vpop.f32.mrf.mxu0
      %v2295 = vadd.f32 0.0, %v2294
      %2296 = vmatmul.f32.gmra.mxu0 %v2077
      %v2297 = vpop.f32.mrf.mxu0
      %v2298 = vadd.f32 0.0, %v2297
      %2299 = vmatmul.f32.gmra.mxu0 %v2080
      %v2300 = vpop.f32.mrf.mxu0
      %v2301 = vadd.f32 0.0, %v2300
      %2302 = vmatmul.f32.gmra.mxu0 %v2083
      %v2303 = vpop.f32.mrf.mxu0
      %v2304 = vadd.f32 0.0, %v2303
      %2305 = vmatmul.f32.gmra.mxu0 %v2086
      %v2306 = vpop.f32.mrf.mxu0
      %v2307 = vadd.f32 0.0, %v2306
      %2308 = vdwg.mxu0
      %v2309 = vld [vmem:[%s14 + $0x40] sm:$0xff]
      %v2310 = vld [vmem:[%s14 + $0x48] sm:$0xff]
      %v2311 = vld [vmem:[%s14 + $0x50] sm:$0xff]
      %v2312 = vld [vmem:[%s14 + $0x58] sm:$0xff]
      %v2314 = vsel %vm1238, %v2309, 0
      %v2317 = vsel %vm1238, %v2310, 0
      %v2320 = vsel %vm1238, %v2311, 0
      %v2323 = vsel %vm1238, %v2312, 0
      %2325 = vmatpush.msra.mxu0 0.0
      %2326 = vmatpush.msra.mxu0 0.0
      %2327 = vmatpush.msra.mxu0 0.0
      %2328 = vmatpush.msra.mxu0 0.0
      %2329 = vmatpush.msra.mxu0 0.0
      %2330 = vmatpush.msra.mxu0 0.0
      %2331 = vmatpush.msra.mxu0 0.0
      %2332 = vmatpush.msra.mxu0 0.0
      %2333 = vmatpush.msra.mxu0 %v2307
      %2334 = vmatpush.msra.mxu0 %v2304
      %2335 = vmatpush.msra.mxu0 %v2301
      %2336 = vmatpush.msra.mxu0 %v2298
      %2337 = vmatpush.msra.mxu0 %v2295
      %2338 = vmatpush.msra.mxu0 %v2292
      %2339 = vmatpush.msra.mxu0 %v2289
      %2340 = vmatpush.msra.mxu0 %v2286
      %2341 = vmatmul.f32.gmra.mxu0 %v2314
      %v2342 = vpop.f32.mrf.mxu0
      %v2343 = vadd.f32 0.0, %v2342
      %2344 = vmatmul.f32.gmra.mxu0 %v2317
      %v2345 = vpop.f32.mrf.mxu0
      %v2346 = vadd.f32 0.0, %v2345
      %2347 = vmatmul.f32.gmra.mxu0 %v2320
      %v2348 = vpop.f32.mrf.mxu0
      %v2349 = vadd.f32 0.0, %v2348
      %2350 = vmatmul.f32.gmra.mxu0 %v2323
      %v2351 = vpop.f32.mrf.mxu0
      %v2352 = vadd.f32 0.0, %v2351
      %2353 = vdwg.mxu0
      %v2354 = vadd.f32 %v2253, %v2343
      %v2355 = vadd.f32 %v2256, %v2346
      %v2356 = vadd.f32 %v2259, %v2349
      %v2357 = vadd.f32 %v2262, %v2352
      %v2358 = vld [vmem:[%s15] sm:$0xff]
      %v2359 = vld [vmem:[%s15 + $0x8] sm:$0xff]
      %v2360 = vld [vmem:[%s15 + $0x10] sm:$0xff]
      %v2361 = vld [vmem:[%s15 + $0x18] sm:$0xff]
      %2363 = vset.pattern.permute.xlu0 0
      %2364 = vperm.xlu0 %2363, %v2358
      %v2365 = vpop.permute.xlu0 %2364
      %2368 = vset.pattern.permute.xlu0 0
      %2369 = vperm.xlu0 %2368, %v2359
      %v2370 = vpop.permute.xlu0 %2369
      %2373 = vset.pattern.permute.xlu0 0
      %2374 = vperm.xlu0 %2373, %v2360
      %v2375 = vpop.permute.xlu0 %2374
      %2378 = vset.pattern.permute.xlu0 0
      %2379 = vperm.xlu0 %2378, %v2361
      %v2380 = vpop.permute.xlu0 %2379
      %v2382 = vadd.f32 %v2354, %v2365
      %v2383 = vadd.f32 %v2355, %v2370
      %v2384 = vadd.f32 %v2356, %v2375
      %v2385 = vadd.f32 %v2357, %v2380
      %v2386 = vxor.u32 %v2382, 2147483648
      %v2387 = vxor.u32 %v2383, 2147483648
      %v2388 = vxor.u32 %v2384, 2147483648
      %v2389 = vxor.u32 %v2385, 2147483648
      %v2390 = vmul.f32 %v2386, 1.442695
      %v2391 = vpow.pop %v2390
      %v2392 = vmul.f32 %v2387, 1.442695
      %v2393 = vpow.pop %v2392
      %v2394 = vmul.f32 %v2388, 1.442695
      %v2395 = vpow.pop %v2394
      %v2396 = vmul.f32 %v2389, 1.442695
      %v2397 = vpow.pop %v2396
      %v2398 = vadd.f32 %v2391, 1.0
      %v2399 = vadd.f32 %v2393, 1.0
      %v2400 = vadd.f32 %v2395, 1.0
      %v2401 = vadd.f32 %v2397, 1.0
      %v2402 = vrcp.pop %v2398
      %v2403 = vmul.f32 %v2398, %v2402
      %v2404 = vsub.f32 1.0, %v2403
      %v2405 = vmul.f32 %v2402, %v2404
      %v2406 = vadd.f32 %v2402, %v2405
      %vm2407 = vweird.f32 %v2398
      %vm2408 = vweird.f32 %v2402
      %vm2409 = vmor %vm2407, %vm2408
      %v2410 = vsel %vm2409, %v2402, %v2406
      %v2411 = vand.u32 2147483647, %v2398
      %vm2412 = vcmp.eq.f32.partialorder %v2411, 8.507059e+37
      %v2413 = vand.u32 %v2398, 2147483648
      %v2414 = vor.u32 1.1754944e-38, %v2413
      %v2415 = vsel %vm2412, %v2414, %v2410
      %v2416 = vmul.f32 1.0, %v2415
      %v2417 = vrcp.pop %v2399
      %v2418 = vmul.f32 %v2399, %v2417
      %v2419 = vsub.f32 1.0, %v2418
      %v2420 = vmul.f32 %v2417, %v2419
      %v2421 = vadd.f32 %v2417, %v2420
      %vm2422 = vweird.f32 %v2399
      %vm2423 = vweird.f32 %v2417
      %vm2424 = vmor %vm2422, %vm2423
      %v2425 = vsel %vm2424, %v2417, %v2421
      %v2426 = vand.u32 2147483647, %v2399
      %vm2427 = vcmp.eq.f32.partialorder %v2426, 8.507059e+37
      %v2428 = vand.u32 %v2399, 2147483648
      %v2429 = vor.u32 1.1754944e-38, %v2428
      %v2430 = vsel %vm2427, %v2429, %v2425
      %v2431 = vmul.f32 1.0, %v2430
      %v2432 = vrcp.pop %v2400
      %v2433 = vmul.f32 %v2400, %v2432
      %v2434 = vsub.f32 1.0, %v2433
      %v2435 = vmul.f32 %v2432, %v2434
      %v2436 = vadd.f32 %v2432, %v2435
      %vm2437 = vweird.f32 %v2400
      %vm2438 = vweird.f32 %v2432
      %vm2439 = vmor %vm2437, %vm2438
      %v2440 = vsel %vm2439, %v2432, %v2436
      %v2441 = vand.u32 2147483647, %v2400
      %vm2442 = vcmp.eq.f32.partialorder %v2441, 8.507059e+37
      %v2443 = vand.u32 %v2400, 2147483648
      %v2444 = vor.u32 1.1754944e-38, %v2443
      %v2445 = vsel %vm2442, %v2444, %v2440
      %v2446 = vmul.f32 1.0, %v2445
      %v2447 = vrcp.pop %v2401
      %v2448 = vmul.f32 %v2401, %v2447
      %v2449 = vsub.f32 1.0, %v2448
      %v2450 = vmul.f32 %v2447, %v2449
      %v2451 = vadd.f32 %v2447, %v2450
      %vm2452 = vweird.f32 %v2401
      %vm2453 = vweird.f32 %v2447
      %vm2454 = vmor %vm2452, %vm2453
      %v2455 = vsel %vm2454, %v2447, %v2451
      %v2456 = vand.u32 2147483647, %v2401
      %vm2457 = vcmp.eq.f32.partialorder %v2456, 8.507059e+37
      %v2458 = vand.u32 %v2401, 2147483648
      %v2459 = vor.u32 1.1754944e-38, %v2458
      %v2460 = vsel %vm2457, %v2459, %v2455
      %v2461 = vmul.f32 1.0, %v2460
      %2466 = vrot.lane.b32.xlu0 %v2416, 127
      %v2467 = vpop.permute.xlu0 %2466
      %2468 = vrot.lane.b32.xlu0 %v2431, 127
      %v2469 = vpop.permute.xlu0 %2468
      %2470 = vrot.lane.b32.xlu0 %v2446, 127
      %v2471 = vpop.permute.xlu0 %2470
      %2472 = vrot.lane.b32.xlu0 %v2461, 127
      %v2473 = vpop.permute.xlu0 %2472
      %v2478 = vmax.f32 %v2416, %v2467
      %v2479 = vmax.f32 %v2431, %v2469
      %v2480 = vmax.f32 %v2446, %v2471
      %v2481 = vmax.f32 %v2461, %v2473
      %2482 = vrot.lane.b32.xlu0 %v2416, 126
      %v2483 = vpop.permute.xlu0 %2482
      %2484 = vrot.lane.b32.xlu0 %v2431, 126
      %v2485 = vpop.permute.xlu0 %2484
      %2486 = vrot.lane.b32.xlu0 %v2446, 126
      %v2487 = vpop.permute.xlu0 %2486
      %2488 = vrot.lane.b32.xlu0 %v2461, 126
      %v2489 = vpop.permute.xlu0 %2488
      %v2494 = vmax.f32 %v2478, %v2483
      %v2495 = vmax.f32 %v2479, %v2485
      %v2496 = vmax.f32 %v2480, %v2487
      %v2497 = vmax.f32 %v2481, %v2489
      %2498 = vrot.lane.b32.xlu0 %v2416, 125
      %v2499 = vpop.permute.xlu0 %2498
      %2500 = vrot.lane.b32.xlu0 %v2431, 125
      %v2501 = vpop.permute.xlu0 %2500
      %2502 = vrot.lane.b32.xlu0 %v2446, 125
      %v2503 = vpop.permute.xlu0 %2502
      %2504 = vrot.lane.b32.xlu0 %v2461, 125
      %v2505 = vpop.permute.xlu0 %2504
      %v2510 = vmax.f32 %v2494, %v2499
      %v2511 = vmax.f32 %v2495, %v2501
      %v2512 = vmax.f32 %v2496, %v2503
      %v2513 = vmax.f32 %v2497, %v2505
      %v2514 = vmul.f32 %v2510, %v549
      %v2515 = vmul.f32 %v2511, %v550
      %v2516 = vmul.f32 %v2512, %v551
      %v2517 = vmul.f32 %v2513, %v552
      %v2518 = vlaneseq
      %v2519 = vand.u32 %v2518, 127
      %vm2520 = vcmp.ge.s32.totalorder %v2519, 0
      %vm2521 = vcmp.lt.s32.totalorder %v2519, 11
      %vm2522 = vmand %vm2520, %vm2521
      %v2523 = vsel %vm2522, %v2514, 0.0
      %v2524 = vsel %vm2522, %v2515, 0.0
      %v2525 = vsel %vm2522, %v2516, 0.0
      %v2526 = vsel %vm2522, %v2517, 0.0
      %2527 = vst.msk [vmem:[%s548] sm:$0xff] %vm556, %v2523
      %2528 = vst.msk [vmem:[%s548 + $0x8] sm:$0xff] %vm556, %v2524
      %2529 = vst.msk [vmem:[%s548 + $0x10] sm:$0xff] %vm556, %v2525
      %2530 = vst.msk [vmem:[%s548 + $0x18] sm:$0xff] %vm556, %v2526
      %vm2531 = vcmp.ge.s32.totalorder %v2519, 11
      %vm2532 = vcmp.lt.s32.totalorder %v2519, 23
      %vm2533 = vmand %vm2531, %vm2532
      %v2534 = vsel %vm2533, %v2514, 0.0
      %v2535 = vsel %vm2533, %v2515, 0.0
      %v2536 = vsel %vm2533, %v2516, 0.0
      %v2537 = vsel %vm2533, %v2517, 0.0
      %2538 = vst.msk [vmem:[%s548 + $0x20] sm:$0xff] %vm556, %v2534
      %2539 = vst.msk [vmem:[%s548 + $0x28] sm:$0xff] %vm556, %v2535
      %2540 = vst.msk [vmem:[%s548 + $0x30] sm:$0xff] %vm556, %v2536
      %2541 = vst.msk [vmem:[%s548 + $0x38] sm:$0xff] %vm556, %v2537
      %vm2542 = vcmask 384184
      %2543 = vst.msk [vmem:[%s548] sm:$0xff] %vm2542, -1e+30
      %2544 = vst.msk [vmem:[%s548 + $0x8] sm:$0xff] %vm2542, -1e+30
      %2545 = vst.msk [vmem:[%s548 + $0x10] sm:$0xff] %vm2542, -1e+30
      %2546 = vst.msk [vmem:[%s548 + $0x18] sm:$0xff] %vm2542, -1e+30
      %2547 = vst.msk [vmem:[%s548 + $0x20] sm:$0xff] %vm2542, -1e+30
      %2548 = vst.msk [vmem:[%s548 + $0x28] sm:$0xff] %vm2542, -1e+30
      %2549 = vst.msk [vmem:[%s548 + $0x30] sm:$0xff] %vm2542, -1e+30
      %2550 = vst.msk [vmem:[%s548 + $0x38] sm:$0xff] %vm2542, -1e+30
      %p2551 = scmp.lt.s32.totalorder %s28, 1
      %s2552 = scalar_select %p2551, %s28, 1
      %s2553 = smul.addr %s2552, 8
      %s2554 = smul.addr %s2553, 8
      %s2555 = scalar_lea.vmem %s17, %s2554
      // Predicated region
      $region89: #{tln_forward.5} parent=87 // pred_check
        %p2556 = pneg %p408
      $region90: #{tln_forward.5} parent=87 // pred_check_branch
        %2558 = sbr.rel (%p2556) target = $region92
      $region91: #{tln_forward.5} parent=87 // pred_region
        _
      $region92: #{tln_forward.5} parent=87 // pred_fallthru
        _
    $region88: #{tln_forward.5} parent=5 // pred_fallthru
      _
    %p2559 = scmp.le.s32.totalorder 2, %s23
    // Predicated region
    $region93: #{tln_forward.5} parent=5 // pred_check
      %p2560 = pneg %p2559
    $region94: #{tln_forward.5} parent=5 // pred_check_branch
      %2562 = sbr.rel (%p2560) target = $region96
    $region95: #{tln_forward.5} parent=5 // pred_region
      %s2563 = ssub.s32 %s23, 2
      // Predicated region
      $region97: #{tln_forward.5} parent=95 // pred_check
        %p2564 = pneg %p414
      $region98: #{tln_forward.5} parent=95 // pred_check_branch
        %2566 = sbr.rel (%p2564) target = $region100
      $region99: #{tln_forward.5} parent=95 // pred_region
        %p2567 = scmp.lt.s32.totalorder %s29, 1
        %s2568 = scalar_select %p2567, %s29, 1
        %s2569 = smul.addr %s2568, 8
        %s2570 = smul.addr %s2569, 8
        %s2571 = scalar_lea.vmem %s17, %s2570
      $region100: #{tln_forward.5} parent=95 // pred_fallthru
        _
    $region96: #{tln_forward.5} parent=5 // pred_fallthru
      _
  $region6: #{tln_forward.5} parent=0 // loop_footer
    %s27 = sadd.s32 1, %s23
  $region7: #{tln_forward.5} parent=0 // loop_footer_branch
    %22 = sbr.rel target = $region3
  $region8: #{tln_forward.5} parent=0 // loop_exit
    _

// kernel: tln_forward.7
$region0: #{tln_forward.7}
  #allocation0 [shape = 'u32[]', space=smem, size = 0x4, offset = 0x4, fixed_abs, tag = 'smem constant byte address 0x4 - core index']
  #allocation1 [shape = 'u32[72,128]{1,0:T(1,128)}', space=vmem, size = 0x9000, scoped, tag = 'internal scratch']
  %s0 = inlined_call_operand.vmem [shape: f32[24,21], index: 0, kind: input, shape index: {}]
  %s1 = inlined_call_operand.vmem [shape: bf16[21,1024], index: 1, kind: input, shape index: {}]
  %s2 = inlined_call_operand.vmem [shape: f32[1,1024], index: 2, kind: input, shape index: {}]
  %s3 = inlined_call_operand.hbm [shape: bf16[1024,256], index: 3, kind: input, shape index: {}]
  %s4 = inlined_call_operand.vmem [shape: f32[1,256], index: 4, kind: input, shape index: {}]
  %s5 = inlined_call_operand.vmem [shape: bf16[256,10], index: 5, kind: input, shape index: {}]
  %s6 = inlined_call_operand.vmem [shape: f32[1,10], index: 6, kind: input, shape index: {}]
  %s7 = inlined_call_operand.vmem [shape: f32[24,10], index: 7, kind: output, shape index: {}]
  %s8 = sld [smem:[#allocation0]]
  $region42: #{tln_forward.7} parent=0
    _
  %s10 = ssub.s32 1, %s8
  %s11 = scalar_select 0, %s10, %s8
  $region1: #{tln_forward.7} parent=0
    #allocation2 [shape = 'u8[524288]{0}', space=vmem, size = 0x80000, scoped, tag = 'input window, operand 3, single buffered']
    #allocation3 [shape = 's32[1]{0}', space=sflag, size = 0x4, scoped, tag = 'scoped memory for tln_forward.7']
    %12 = vsyncpa [#allocation3], 0
    // Predicated region
    $region2: #{tln_forward.7} parent=1 // pred_check
      _
    $region3: #{tln_forward.7} parent=1 // pred_check_branch
      %14 = sbr.rel (0) target = $region5
    $region4: #{tln_forward.7} parent=1 // pred_region
      _
    $region5: #{tln_forward.7} parent=1 // pred_fallthru
      _
    // Predicated region
    $region6: #{tln_forward.7} parent=1 // pred_check
      _
    $region7: #{tln_forward.7} parent=1 // pred_check_branch
      %16 = sbr.rel (0) target = $region9
    $region8: #{tln_forward.7} parent=1 // pred_region
      _
    $region9: #{tln_forward.7} parent=1 // pred_fallthru
      _
    // Predicated region
    $region10: #{tln_forward.7} parent=1 // pred_check
      _
    $region11: #{tln_forward.7} parent=1 // pred_check_branch
      %18 = sbr.rel (0) target = $region13
    $region12: #{tln_forward.7} parent=1 // pred_region
      _
    $region13: #{tln_forward.7} parent=1 // pred_fallthru
      _
    // Predicated region
    $region14: #{tln_forward.7} parent=1 // pred_check
      _
    $region15: #{tln_forward.7} parent=1 // pred_check_branch
      %20 = sbr.rel (0) target = $region17
    $region16: #{tln_forward.7} parent=1 // pred_region
      %22 = vsyncadd [#allocation3], 0
      %s23 = sshll.u32 %s3, 4
      %s24 = int_to_ptr.hbm [resolvable:$true] %s23
      %s25 = sshll.u32 [#allocation2], 4
      %s26 = int_to_ptr.vmem [resolvable:$true] %s25
      %31 = dma.hbm_to_vmem [thread:$0]  %s24, 16384, %s26, [#allocation3], 128, 128, 8
    $region17: #{tln_forward.7} parent=1 // pred_fallthru
      _
    // Predicated region
    $region18: #{tln_forward.7} parent=1 // pred_check
      _
    $region19: #{tln_forward.7} parent=1 // pred_check_branch
      %33 = sbr.rel (0) target = $region21
    $region20: #{tln_forward.7} parent=1 // pred_region
      _
    $region21: #{tln_forward.7} parent=1 // pred_fallthru
      _
    // Predicated region
    $region22: #{tln_forward.7} parent=1 // pred_check
      _
    $region23: #{tln_forward.7} parent=1 // pred_check_branch
      %35 = sbr.rel (0) target = $region25
    $region24: #{tln_forward.7} parent=1 // pred_region
      _
    $region25: #{tln_forward.7} parent=1 // pred_fallthru
      _
    // Predicated region
    $region26: #{tln_forward.7} parent=1 // pred_check
      _
    $region27: #{tln_forward.7} parent=1 // pred_check_branch
      %37 = sbr.rel (0) target = $region29
    $region28: #{tln_forward.7} parent=1 // pred_region
      _
    $region29: #{tln_forward.7} parent=1 // pred_fallthru
      _
    // Predicated region
    $region30: #{tln_forward.7} parent=1 // pred_check
      _
    $region31: #{tln_forward.7} parent=1 // pred_check_branch
      %39 = sbr.rel (0) target = $region33
    $region32: #{tln_forward.7} parent=1 // pred_region
      %41 = dma.done [#allocation3], 16384
    $region33: #{tln_forward.7} parent=1 // pred_fallthru
      _
    %v43 = vld [vmem:[%s0] sm:$0xff]
    %v44 = vld [vmem:[%s0 + $0x8] sm:$0xff]
    %v45 = vld [vmem:[%s0 + $0x10] sm:$0xff]
    %v46 = vpack.c.bf16 %v44, %v43
    %v47 = vpack.c.bf16 %v45, %v45
    %v48 = vld [vmem:[%s1] sm:$0xff]
    %v49 = vld [vmem:[%s1 + $0x8] sm:$0xff]
    %v50 = vld [vmem:[%s1 + $0x10] sm:$0xff]
    %v51 = vld [vmem:[%s1 + $0x18] sm:$0xff]
    %v52 = vld [vmem:[%s1 + $0x20] sm:$0xff]
    %v53 = vld [vmem:[%s1 + $0x28] sm:$0xff]
    %v54 = vld [vmem:[%s1 + $0x30] sm:$0xff]
    %v55 = vld [vmem:[%s1 + $0x38] sm:$0xff]
    %v56 = vld [vmem:[%s1 + $0x40] sm:$0x77]
    %v57 = vld [vmem:[%s1 + $0x48] sm:$0x77]
    %v58 = vld [vmem:[%s1 + $0x50] sm:$0x77]
    %v59 = vld [vmem:[%s1 + $0x58] sm:$0x77]
    %v60 = vld [vmem:[%s2] sm:$0xff]
    %v62 = vperm.slane %v60, 0
    %v63 = vperm.slane %v60, 1
    %v64 = vperm.slane %v60, 2
    %v65 = vperm.slane %v60, 3
    %v66 = vperm.slane %v60, 4
    %v67 = vperm.slane %v60, 5
    %v68 = vperm.slane %v60, 6
    %v69 = vperm.slane %v60, 7
    %v90 = vunpack.c.l.b16 %v48
    %v91 = vunpack.c.h.b16 %v48
    %v92 = vunpack.c.l.b16 %v49
    %v93 = vunpack.c.h.b16 %v49
    %v94 = vunpack.c.l.b16 %v50
    %v95 = vunpack.c.h.b16 %v50
    %v96 = vunpack.c.l.b16 %v51
    %v97 = vunpack.c.h.b16 %v51
    %v98 = vunpack.c.l.b16 %v52
    %v99 = vunpack.c.h.b16 %v52
    %v100 = vunpack.c.l.b16 %v53
    %v101 = vunpack.c.h.b16 %v53
    %v102 = vunpack.c.l.b16 %v54
    %v103 = vunpack.c.h.b16 %v54
    %v104 = vunpack.c.l.b16 %v55
    %v105 = vunpack.c.h.b16 %v55
    %v106 = vunpack.c.l.b16 %v56
    %v107 = vunpack.c.h.b16 %v56
    %v108 = vunpack.c.l.b16 %v57
    %v109 = vunpack.c.h.b16 %v57
    %v110 = vunpack.c.l.b16 %v58
    %v111 = vunpack.c.h.b16 %v58
    %v112 = vunpack.c.l.b16 %v59
    %v113 = vunpack.c.h.b16 %v59
    %v114 = vpack.c.b16 %v98, %v90
    %v115 = vpack.c.b16 %v99, %v91
    %v116 = vpack.c.b16 %v100, %v92
    %v117 = vpack.c.b16 %v101, %v93
    %v118 = vpack.c.b16 %v102, %v94
    %v119 = vpack.c.b16 %v103, %v95
    %v120 = vpack.c.b16 %v104, %v96
    %v121 = vpack.c.b16 %v105, %v97
    %v122 = vpack.c.b16 %v106, %v106
    %v123 = vpack.c.b16 %v107, %v107
    %v124 = vpack.c.b16 %v108, %v108
    %v125 = vpack.c.b16 %v109, %v109
    %v126 = vpack.c.b16 %v110, %v110
    %v127 = vpack.c.b16 %v111, %v111
    %v128 = vpack.c.b16 %v112, %v112
    %v129 = vpack.c.b16 %v113, %v113
    %vm138 = vcmask 171008
    %v140 = vsel %vm138, %v46, 0
    %v143 = vsel %vm138, %v47, 0
    %vm145 = vcmask 1041408
    %vm146 = vcmask 1042432
    %v147 = vsel %vm145, 4294967295, 65535
    %v148 = vsel %vm146, %v147, 0
    %v150 = vand.u32 %v122, %v148
    %v153 = vand.u32 %v123, %v148
    %v156 = vand.u32 %v124, %v148
    %v159 = vand.u32 %v125, %v148
    %v162 = vand.u32 %v126, %v148
    %v165 = vand.u32 %v127, %v148
    %v168 = vand.u32 %v128, %v148
    %v171 = vand.u32 %v129, %v148
    %173 = vmatpush.bf16.msra.mxu0 0
    %174 = vmatpush.bf16.msra.mxu0 0
    %175 = vmatpush.bf16.msra.mxu0 0
    %176 = vmatpush.bf16.msra.mxu0 0
    %177 = vmatpush.bf16.msra.mxu0 0
    %178 = vmatpush.bf16.msra.mxu0 0
    %179 = vmatpush.bf16.msra.mxu0 %v150
    %180 = vmatpush.bf16.msra.mxu0 %v114
    %181 = vmatmul.bf16.gmra.mxu0 %v140
    %v182 = vpop.f32.mrf.mxu0
    %v183 = vadd.f32 %v62, %v182
    %v184 = vpop.f32.mrf.mxu0
    %v185 = vadd.f32 %v62, %v184
    %186 = vmatmul.bf16.gmra.mxu0 %v143
    %v187 = vpop.f32.mrf.mxu0
    %v188 = vadd.f32 %v62, %v187
    %v189 = vpop.f32.mrf.mxu0
    %190 = vdwg.mxu0
    %191 = vmatpush.bf16.msra.mxu0 0
    %192 = vmatpush.bf16.msra.mxu0 0
    %193 = vmatpush.bf16.msra.mxu0 0
    %194 = vmatpush.bf16.msra.mxu0 0
    %195 = vmatpush.bf16.msra.mxu0 0
    %196 = vmatpush.bf16.msra.mxu0 0
    %197 = vmatpush.bf16.msra.mxu0 %v153
    %198 = vmatpush.bf16.msra.mxu0 %v115
    %199 = vmatmul.bf16.gmra.mxu0 %v140
    %v200 = vpop.f32.mrf.mxu0
    %v201 = vadd.f32 %v63, %v200
    %v202 = vpop.f32.mrf.mxu0
    %v203 = vadd.f32 %v63, %v202
    %204 = vmatmul.bf16.gmra.mxu0 %v143
    %v205 = vpop.f32.mrf.mxu0
    %v206 = vadd.f32 %v63, %v205
    %v207 = vpop.f32.mrf.mxu0
    %208 = vdwg.mxu0
    %209 = vmatpush.bf16.msra.mxu0 0
    %210 = vmatpush.bf16.msra.mxu0 0
    %211 = vmatpush.bf16.msra.mxu0 0
    %212 = vmatpush.bf16.msra.mxu0 0
    %213 = vmatpush.bf16.msra.mxu0 0
    %214 = vmatpush.bf16.msra.mxu0 0
    %215 = vmatpush.bf16.msra.mxu0 %v156
    %216 = vmatpush.bf16.msra.mxu0 %v116
    %217 = vmatmul.bf16.gmra.mxu0 %v140
    %v218 = vpop.f32.mrf.mxu0
    %v219 = vadd.f32 %v64, %v218
    %v220 = vpop.f32.mrf.mxu0
    %v221 = vadd.f32 %v64, %v220
    %222 = vmatmul.bf16.gmra.mxu0 %v143
    %v223 = vpop.f32.mrf.mxu0
    %v224 = vadd.f32 %v64, %v223
    %v225 = vpop.f32.mrf.mxu0
    %226 = vdwg.mxu0
    %227 = vmatpush.bf16.msra.mxu0 0
    %228 = vmatpush.bf16.msra.mxu0 0
    %229 = vmatpush.bf16.msra.mxu0 0
    %230 = vmatpush.bf16.msra.mxu0 0
    %231 = vmatpush.bf16.msra.mxu0 0
    %232 = vmatpush.bf16.msra.mxu0 0
    %233 = vmatpush.bf16.msra.mxu0 %v159
    %234 = vmatpush.bf16.msra.mxu0 %v117
    %235 = vmatmul.bf16.gmra.mxu0 %v140
    %v236 = vpop.f32.mrf.mxu0
    %v237 = vadd.f32 %v65, %v236
    %v238 = vpop.f32.mrf.mxu0
    %v239 = vadd.f32 %v65, %v238
    %240 = vmatmul.bf16.gmra.mxu0 %v143
    %v241 = vpop.f32.mrf.mxu0
    %v242 = vadd.f32 %v65, %v241
    %v243 = vpop.f32.mrf.mxu0
    %244 = vdwg.mxu0
    %245 = vmatpush.bf16.msra.mxu0 0
    %246 = vmatpush.bf16.msra.mxu0 0
    %247 = vmatpush.bf16.msra.mxu0 0
    %248 = vmatpush.bf16.msra.mxu0 0
    %249 = vmatpush.bf16.msra.mxu0 0
    %250 = vmatpush.bf16.msra.mxu0 0
    %251 = vmatpush.bf16.msra.mxu0 %v162
    %252 = vmatpush.bf16.msra.mxu0 %v118
    %253 = vmatmul.bf16.gmra.mxu0 %v140
    %v254 = vpop.f32.mrf.mxu0
    %v255 = vadd.f32 %v66, %v254
    %v256 = vpop.f32.mrf.mxu0
    %v257 = vadd.f32 %v66, %v256
    %258 = vmatmul.bf16.gmra.mxu0 %v143
    %v259 = vpop.f32.mrf.mxu0
    %v260 = vadd.f32 %v66, %v259
    %v261 = vpop.f32.mrf.mxu0
    %262 = vdwg.mxu0
    %263 = vmatpush.bf16.msra.mxu0 0
    %264 = vmatpush.bf16.msra.mxu0 0
    %265 = vmatpush.bf16.msra.mxu0 0
    %266 = vmatpush.bf16.msra.mxu0 0
    %267 = vmatpush.bf16.msra.mxu0 0
    %268 = vmatpush.bf16.msra.mxu0 0
    %269 = vmatpush.bf16.msra.mxu0 %v165
    %270 = vmatpush.bf16.msra.mxu0 %v119
    %271 = vmatmul.bf16.gmra.mxu0 %v140
    %v272 = vpop.f32.mrf.mxu0
    %v273 = vadd.f32 %v67, %v272
    %v274 = vpop.f32.mrf.mxu0
    %v275 = vadd.f32 %v67, %v274
    %276 = vmatmul.bf16.gmra.mxu0 %v143
    %v277 = vpop.f32.mrf.mxu0
    %v278 = vadd.f32 %v67, %v277
    %v279 = vpop.f32.mrf.mxu0
    %280 = vdwg.mxu0
    %281 = vmatpush.bf16.msra.mxu0 0
    %282 = vmatpush.bf16.msra.mxu0 0
    %283 = vmatpush.bf16.msra.mxu0 0
    %284 = vmatpush.bf16.msra.mxu0 0
    %285 = vmatpush.bf16.msra.mxu0 0
    %286 = vmatpush.bf16.msra.mxu0 0
    %287 = vmatpush.bf16.msra.mxu0 %v168
    %288 = vmatpush.bf16.msra.mxu0 %v120
    %289 = vmatmul.bf16.gmra.mxu0 %v140
    %v290 = vpop.f32.mrf.mxu0
    %v291 = vadd.f32 %v68, %v290
    %v292 = vpop.f32.mrf.mxu0
    %v293 = vadd.f32 %v68, %v292
    %294 = vmatmul.bf16.gmra.mxu0 %v143
    %v295 = vpop.f32.mrf.mxu0
    %v296 = vadd.f32 %v68, %v295
    %v297 = vpop.f32.mrf.mxu0
    %298 = vdwg.mxu0
    %299 = vmatpush.bf16.msra.mxu0 0
    %300 = vmatpush.bf16.msra.mxu0 0
    %301 = vmatpush.bf16.msra.mxu0 0
    %302 = vmatpush.bf16.msra.mxu0 0
    %303 = vmatpush.bf16.msra.mxu0 0
    %304 = vmatpush.bf16.msra.mxu0 0
    %305 = vmatpush.bf16.msra.mxu0 %v171
    %306 = vmatpush.bf16.msra.mxu0 %v121
    %307 = vmatmul.bf16.gmra.mxu0 %v140
    %v308 = vpop.f32.mrf.mxu0
    %v309 = vadd.f32 %v69, %v308
    %v310 = vpop.f32.mrf.mxu0
    %v311 = vadd.f32 %v69, %v310
    %312 = vmatmul.bf16.gmra.mxu0 %v143
    %v313 = vpop.f32.mrf.mxu0
    %v314 = vadd.f32 %v69, %v313
    %v315 = vpop.f32.mrf.mxu0
    %316 = vdwg.mxu0
    %v317 = vmax.f32 %v183, 0.0
    %v318 = vmax.f32 %v201, 0.0
    %v319 = vmax.f32 %v219, 0.0
    %v320 = vmax.f32 %v237, 0.0
    %v321 = vmax.f32 %v255, 0.0
    %v322 = vmax.f32 %v273, 0.0
    %v323 = vmax.f32 %v291, 0.0
    %v324 = vmax.f32 %v309, 0.0
    %v325 = vmax.f32 %v185, 0.0
    %v326 = vmax.f32 %v203, 0.0
    %v327 = vmax.f32 %v221, 0.0
    %v328 = vmax.f32 %v239, 0.0
    %v329 = vmax.f32 %v257, 0.0
    %v330 = vmax.f32 %v275, 0.0
    %v331 = vmax.f32 %v293, 0.0
    %v332 = vmax.f32 %v311, 0.0
    %v333 = vmax.f32 %v188, 0.0
    %v334 = vmax.f32 %v206, 0.0
    %v335 = vmax.f32 %v224, 0.0
    %v336 = vmax.f32 %v242, 0.0
    %v337 = vmax.f32 %v260, 0.0
    %v338 = vmax.f32 %v278, 0.0
    %v339 = vmax.f32 %v296, 0.0
    %v340 = vmax.f32 %v314, 0.0
    %v341 = vpack.c.bf16 %v325, %v317
    %v342 = vpack.c.bf16 %v326, %v318
    %v343 = vpack.c.bf16 %v327, %v319
    %v344 = vpack.c.bf16 %v328, %v320
    %v345 = vpack.c.bf16 %v329, %v321
    %v346 = vpack.c.bf16 %v330, %v322
    %v347 = vpack.c.bf16 %v331, %v323
    %v348 = vpack.c.bf16 %v332, %v324
    %v349 = vpack.c.bf16 %v333, %v333
    %v350 = vpack.c.bf16 %v334, %v334
    %v351 = vpack.c.bf16 %v335, %v335
    %v352 = vpack.c.bf16 %v336, %v336
    %v353 = vpack.c.bf16 %v337, %v337
    %v354 = vpack.c.bf16 %v338, %v338
    %v355 = vpack.c.bf16 %v339, %v339
    %v356 = vpack.c.bf16 %v340, %v340
    %v357 = vld [vmem:[#allocation2] sm:$0xff]
    %v358 = vld [vmem:[#allocation2 + $0x8] sm:$0xff]
    %v359 = vld [vmem:[#allocation2 + $0x10] sm:$0xff]
    %v360 = vld [vmem:[#allocation2 + $0x18] sm:$0xff]
    %v361 = vld [vmem:[#allocation2 + $0x20] sm:$0xff]
    %v362 = vld [vmem:[#allocation2 + $0x28] sm:$0xff]
    %v363 = vld [vmem:[#allocation2 + $0x30] sm:$0xff]
    %v364 = vld [vmem:[#allocation2 + $0x38] sm:$0xff]
    %v365 = vld [vmem:[#allocation2 + $0x40] sm:$0xff]
    %v366 = vld [vmem:[#allocation2 + $0x48] sm:$0xff]
    %v367 = vld [vmem:[#allocation2 + $0x50] sm:$0xff]
    %v368 = vld [vmem:[#allocation2 + $0x58] sm:$0xff]
    %v369 = vld [vmem:[#allocation2 + $0x60] sm:$0xff]
    %v370 = vld [vmem:[#allocation2 + $0x68] sm:$0xff]
    %v371 = vld [vmem:[#allocation2 + $0x70] sm:$0xff]
    %v372 = vld [vmem:[#allocation2 + $0x78] sm:$0xff]
    %v373 = vld [vmem:[#allocation2 + $0x80] sm:$0xff]
    %v374 = vld [vmem:[#allocation2 + $0x88] sm:$0xff]
    %v375 = vld [vmem:[#allocation2 + $0x90] sm:$0xff]
    %v376 = vld [vmem:[#allocation2 + $0x98] sm:$0xff]
    %v377 = vld [vmem:[#allocation2 + $0xa0] sm:$0xff]
    %v378 = vld [vmem:[#allocation2 + $0xa8] sm:$0xff]
    %v379 = vld [vmem:[#allocation2 + $0xb0] sm:$0xff]
    %v380 = vld [vmem:[#allocation2 + $0xb8] sm:$0xff]
    %v381 = vld [vmem:[#allocation2 + $0xc0] sm:$0xff]
    %v382 = vld [vmem:[#allocation2 + $0xc8] sm:$0xff]
    %v383 = vld [vmem:[#allocation2 + $0xd0] sm:$0xff]
    %v384 = vld [vmem:[#allocation2 + $0xd8] sm:$0xff]
    %v385 = vld [vmem:[#allocation2 + $0xe0] sm:$0xff]
    %v386 = vld [vmem:[#allocation2 + $0xe8] sm:$0xff]
    %v387 = vld [vmem:[#allocation2 + $0xf0] sm:$0xff]
    %v388 = vld [vmem:[#allocation2 + $0xf8] sm:$0xff]
    %v389 = vld [vmem:[#allocation2 + $0x100] sm:$0xff]
    %v390 = vld [vmem:[#allocation2 + $0x108] sm:$0xff]
    %v391 = vld [vmem:[#allocation2 + $0x110] sm:$0xff]
    %v392 = vld [vmem:[#allocation2 + $0x118] sm:$0xff]
    %v393 = vld [vmem:[#allocation2 + $0x120] sm:$0xff]
    %v394 = vld [vmem:[#allocation2 + $0x128] sm:$0xff]
    %v395 = vld [vmem:[#allocation2 + $0x130] sm:$0xff]
    %v396 = vld [vmem:[#allocation2 + $0x138] sm:$0xff]
    %v397 = vld [vmem:[#allocation2 + $0x140] sm:$0xff]
    %v398 = vld [vmem:[#allocation2 + $0x148] sm:$0xff]
    %v399 = vld [vmem:[#allocation2 + $0x150] sm:$0xff]
    %v400 = vld [vmem:[#allocation2 + $0x158] sm:$0xff]
    %v401 = vld [vmem:[#allocation2 + $0x160] sm:$0xff]
    %v402 = vld [vmem:[#allocation2 + $0x168] sm:$0xff]
    %v403 = vld [vmem:[#allocation2 + $0x170] sm:$0xff]
    %v404 = vld [vmem:[#allocation2 + $0x178] sm:$0xff]
    %v405 = vld [vmem:[#allocation2 + $0x180] sm:$0xff]
    %v406 = vld [vmem:[#allocation2 + $0x188] sm:$0xff]
    %v407 = vld [vmem:[#allocation2 + $0x190] sm:$0xff]
    %v408 = vld [vmem:[#allocation2 + $0x198] sm:$0xff]
    %v409 = vld [vmem:[#allocation2 + $0x1a0] sm:$0xff]
    %v410 = vld [vmem:[#allocation2 + $0x1a8] sm:$0xff]
    %v411 = vld [vmem:[#allocation2 + $0x1b0] sm:$0xff]
    %v412 = vld [vmem:[#allocation2 + $0x1b8] sm:$0xff]
    %v413 = vld [vmem:[#allocation2 + $0x1c0] sm:$0xff]
    %v414 = vld [vmem:[#allocation2 + $0x1c8] sm:$0xff]
    %v415 = vld [vmem:[#allocation2 + $0x1d0] sm:$0xff]
    %v416 = vld [vmem:[#allocation2 + $0x1d8] sm:$0xff]
    %v417 = vld [vmem:[#allocation2 + $0x1e0] sm:$0xff]
    %v418 = vld [vmem:[#allocation2 + $0x1e8] sm:$0xff]
    %v419 = vld [vmem:[#allocation2 + $0x1f0] sm:$0xff]
    %v420 = vld [vmem:[#allocation2 + $0x1f8] sm:$0xff]
    %v421 = vld [vmem:[#allocation2 + $0x200] sm:$0xff]
    %v422 = vld [vmem:[#allocation2 + $0x208] sm:$0xff]
    %v423 = vld [vmem:[#allocation2 + $0x210] sm:$0xff]
    %v424 = vld [vmem:[#allocation2 + $0x218] sm:$0xff]
    %v425 = vld [vmem:[#allocation2 + $0x220] sm:$0xff]
    %v426 = vld [vmem:[#allocation2 + $0x228] sm:$0xff]
    %v427 = vld [vmem:[#allocation2 + $0x230] sm:$0xff]
    %v428 = vld [vmem:[#allocation2 + $0x238] sm:$0xff]
    %v429 = vld [vmem:[#allocation2 + $0x240] sm:$0xff]
    %v430 = vld [vmem:[#allocation2 + $0x248] sm:$0xff]
    %v431 = vld [vmem:[#allocation2 + $0x250] sm:$0xff]
    %v432 = vld [vmem:[#allocation2 + $0x258] sm:$0xff]
    %v433 = vld [vmem:[#allocation2 + $0x260] sm:$0xff]
    %v434 = vld [vmem:[#allocation2 + $0x268] sm:$0xff]
    %v435 = vld [vmem:[#allocation2 + $0x270] sm:$0xff]
    %v436 = vld [vmem:[#allocation2 + $0x278] sm:$0xff]
    %v437 = vld [vmem:[#allocation2 + $0x280] sm:$0xff]
    %v438 = vld [vmem:[#allocation2 + $0x288] sm:$0xff]
    %v439 = vld [vmem:[#allocation2 + $0x290] sm:$0xff]
    %v440 = vld [vmem:[#allocation2 + $0x298] sm:$0xff]
    %v441 = vld [vmem:[#allocation2 + $0x2a0] sm:$0xff]
    %v442 = vld [vmem:[#allocation2 + $0x2a8] sm:$0xff]
    %v443 = vld [vmem:[#allocation2 + $0x2b0] sm:$0xff]
    %v444 = vld [vmem:[#allocation2 + $0x2b8] sm:$0xff]
    %v445 = vld [vmem:[#allocation2 + $0x2c0] sm:$0xff]
    %v446 = vld [vmem:[#allocation2 + $0x2c8] sm:$0xff]
    %v447 = vld [vmem:[#allocation2 + $0x2d0] sm:$0xff]
    %v448 = vld [vmem:[#allocation2 + $0x2d8] sm:$0xff]
    %v449 = vld [vmem:[#allocation2 + $0x2e0] sm:$0xff]
    %v450 = vld [vmem:[#allocation2 + $0x2e8] sm:$0xff]
    %v451 = vld [vmem:[#allocation2 + $0x2f0] sm:$0xff]
    %v452 = vld [vmem:[#allocation2 + $0x2f8] sm:$0xff]
    %v453 = vld [vmem:[#allocation2 + $0x300] sm:$0xff]
    %v454 = vld [vmem:[#allocation2 + $0x308] sm:$0xff]
    %v455 = vld [vmem:[#allocation2 + $0x310] sm:$0xff]
    %v456 = vld [vmem:[#allocation2 + $0x318] sm:$0xff]
    %v457 = vld [vmem:[#allocation2 + $0x320] sm:$0xff]
    %v458 = vld [vmem:[#allocation2 + $0x328] sm:$0xff]
    %v459 = vld [vmem:[#allocation2 + $0x330] sm:$0xff]
    %v460 = vld [vmem:[#allocation2 + $0x338] sm:$0xff]
    %v461 = vld [vmem:[#allocation2 + $0x340] sm:$0xff]
    %v462 = vld [vmem:[#allocation2 + $0x348] sm:$0xff]
    %v463 = vld [vmem:[#allocation2 + $0x350] sm:$0xff]
    %v464 = vld [vmem:[#allocation2 + $0x358] sm:$0xff]
    %v465 = vld [vmem:[#allocation2 + $0x360] sm:$0xff]
    %v466 = vld [vmem:[#allocation2 + $0x368] sm:$0xff]
    %v467 = vld [vmem:[#allocation2 + $0x370] sm:$0xff]
    %v468 = vld [vmem:[#allocation2 + $0x378] sm:$0xff]
    %v469 = vld [vmem:[#allocation2 + $0x380] sm:$0xff]
    %v470 = vld [vmem:[#allocation2 + $0x388] sm:$0xff]
    %v471 = vld [vmem:[#allocation2 + $0x390] sm:$0xff]
    %v472 = vld [vmem:[#allocation2 + $0x398] sm:$0xff]
    %v473 = vld [vmem:[#allocation2 + $0x3a0] sm:$0xff]
    %v474 = vld [vmem:[#allocation2 + $0x3a8] sm:$0xff]
    %v475 = vld [vmem:[#allocation2 + $0x3b0] sm:$0xff]
    %v476 = vld [vmem:[#allocation2 + $0x3b8] sm:$0xff]
    %v477 = vld [vmem:[#allocation2 + $0x3c0] sm:$0xff]
    %v478 = vld [vmem:[#allocation2 + $0x3c8] sm:$0xff]
    %v479 = vld [vmem:[#allocation2 + $0x3d0] sm:$0xff]
    %v480 = vld [vmem:[#allocation2 + $0x3d8] sm:$0xff]
    %v481 = vld [vmem:[#allocation2 + $0x3e0] sm:$0xff]
    %v482 = vld [vmem:[#allocation2 + $0x3e8] sm:$0xff]
    %v483 = vld [vmem:[#allocation2 + $0x3f0] sm:$0xff]
    %v484 = vld [vmem:[#allocation2 + $0x3f8] sm:$0xff]
    %v485 = vld [vmem:[%s4] sm:$0x3]
    %v487 = vperm.slane %v485, 0
    %v488 = vperm.slane %v485, 1
    %v619 = vunpack.c.l.b16 %v357
    %v620 = vunpack.c.h.b16 %v357
    %v621 = vunpack.c.l.b16 %v358
    %v622 = vunpack.c.h.b16 %v358
    %v623 = vunpack.c.l.b16 %v359
    %v624 = vunpack.c.h.b16 %v359
    %v625 = vunpack.c.l.b16 %v360
    %v626 = vunpack.c.h.b16 %v360
    %v627 = vunpack.c.l.b16 %v361
    %v628 = vunpack.c.h.b16 %v361
    %v629 = vunpack.c.l.b16 %v362
    %v630 = vunpack.c.h.b16 %v362
    %v631 = vunpack.c.l.b16 %v363
    %v632 = vunpack.c.h.b16 %v363
    %v633 = vunpack.c.l.b16 %v364
    %v634 = vunpack.c.h.b16 %v364
    %v635 = vunpack.c.l.b16 %v365
    %v636 = vunpack.c.h.b16 %v365
    %v637 = vunpack.c.l.b16 %v366
    %v638 = vunpack.c.h.b16 %v366
    %v639 = vunpack.c.l.b16 %v367
    %v640 = vunpack.c.h.b16 %v367
    %v641 = vunpack.c.l.b16 %v368
    %v642 = vunpack.c.h.b16 %v368
    %v643 = vunpack.c.l.b16 %v369
    %v644 = vunpack.c.h.b16 %v369
    %v645 = vunpack.c.l.b16 %v370
    %v646 = vunpack.c.h.b16 %v370
    %v647 = vunpack.c.l.b16 %v371
    %v648 = vunpack.c.h.b16 %v371
    %v649 = vunpack.c.l.b16 %v372
    %v650 = vunpack.c.h.b16 %v372
    %v651 = vunpack.c.l.b16 %v373
    %v652 = vunpack.c.h.b16 %v373
    %v653 = vunpack.c.l.b16 %v374
    %v654 = vunpack.c.h.b16 %v374
    %v655 = vunpack.c.l.b16 %v375
    %v656 = vunpack.c.h.b16 %v375
    %v657 = vunpack.c.l.b16 %v376
    %v658 = vunpack.c.h.b16 %v376
    %v659 = vunpack.c.l.b16 %v377
    %v660 = vunpack.c.h.b16 %v377
    %v661 = vunpack.c.l.b16 %v378
    %v662 = vunpack.c.h.b16 %v378
    %v663 = vunpack.c.l.b16 %v379
    %v664 = vunpack.c.h.b16 %v379
    %v665 = vunpack.c.l.b16 %v380
    %v666 = vunpack.c.h.b16 %v380
    %v667 = vunpack.c.l.b16 %v381
    %v668 = vunpack.c.h.b16 %v381
    %v669 = vunpack.c.l.b16 %v382
    %v670 = vunpack.c.h.b16 %v382
    %v671 = vunpack.c.l.b16 %v383
    %v672 = vunpack.c.h.b16 %v383
    %v673 = vunpack.c.l.b16 %v384
    %v674 = vunpack.c.h.b16 %v384
    %v675 = vunpack.c.l.b16 %v385
    %v676 = vunpack.c.h.b16 %v385
    %v677 = vunpack.c.l.b16 %v386
    %v678 = vunpack.c.h.b16 %v386
    %v679 = vunpack.c.l.b16 %v387
    %v680 = vunpack.c.h.b16 %v387
    %v681 = vunpack.c.l.b16 %v388
    %v682 = vunpack.c.h.b16 %v388
    %v683 = vunpack.c.l.b16 %v389
    %v684 = vunpack.c.h.b16 %v389
    %v685 = vunpack.c.l.b16 %v390
    %v686 = vunpack.c.h.b16 %v390
    %v687 = vunpack.c.l.b16 %v391
    %v688 = vunpack.c.h.b16 %v391
    %v689 = vunpack.c.l.b16 %v392
    %v690 = vunpack.c.h.b16 %v392
    %v691 = vunpack.c.l.b16 %v393
    %v692 = vunpack.c.h.b16 %v393
    %v693 = vunpack.c.l.b16 %v394
    %v694 = vunpack.c.h.b16 %v394
    %v695 = vunpack.c.l.b16 %v395
    %v696 = vunpack.c.h.b16 %v395
    %v697 = vunpack.c.l.b16 %v396
    %v698 = vunpack.c.h.b16 %v396
    %v699 = vunpack.c.l.b16 %v397
    %v700 = vunpack.c.h.b16 %v397
    %v701 = vunpack.c.l.b16 %v398
    %v702 = vunpack.c.h.b16 %v398
    %v703 = vunpack.c.l.b16 %v399
    %v704 = vunpack.c.h.b16 %v399
    %v705 = vunpack.c.l.b16 %v400
    %v706 = vunpack.c.h.b16 %v400
    %v707 = vunpack.c.l.b16 %v401
    %v708 = vunpack.c.h.b16 %v401
    %v709 = vunpack.c.l.b16 %v402
    %v710 = vunpack.c.h.b16 %v402
    %v711 = vunpack.c.l.b16 %v403
    %v712 = vunpack.c.h.b16 %v403
    %v713 = vunpack.c.l.b16 %v404
    %v714 = vunpack.c.h.b16 %v404
    %v715 = vunpack.c.l.b16 %v405
    %v716 = vunpack.c.h.b16 %v405
    %v717 = vunpack.c.l.b16 %v406
    %v718 = vunpack.c.h.b16 %v406
    %v719 = vunpack.c.l.b16 %v407
    %v720 = vunpack.c.h.b16 %v407
    %v721 = vunpack.c.l.b16 %v408
    %v722 = vunpack.c.h.b16 %v408
    %v723 = vunpack.c.l.b16 %v409
    %v724 = vunpack.c.h.b16 %v409
    %v725 = vunpack.c.l.b16 %v410
    %v726 = vunpack.c.h.b16 %v410
    %v727 = vunpack.c.l.b16 %v411
    %v728 = vunpack.c.h.b16 %v411
    %v729 = vunpack.c.l.b16 %v412
    %v730 = vunpack.c.h.b16 %v412
    %v731 = vunpack.c.l.b16 %v413
    %v732 = vunpack.c.h.b16 %v413
    %v733 = vunpack.c.l.b16 %v414
    %v734 = vunpack.c.h.b16 %v414
    %v735 = vunpack.c.l.b16 %v415
    %v736 = vunpack.c.h.b16 %v415
    %v737 = vunpack.c.l.b16 %v416
    %v738 = vunpack.c.h.b16 %v416
    %v739 = vunpack.c.l.b16 %v417
    %v740 = vunpack.c.h.b16 %v417
    %v741 = vunpack.c.l.b16 %v418
    %v742 = vunpack.c.h.b16 %v418
    %v743 = vunpack.c.l.b16 %v419
    %v744 = vunpack.c.h.b16 %v419
    %v745 = vunpack.c.l.b16 %v420
    %v746 = vunpack.c.h.b16 %v420
    %v747 = vunpack.c.l.b16 %v421
    %v748 = vunpack.c.h.b16 %v421
    %v749 = vunpack.c.l.b16 %v422
    %v750 = vunpack.c.h.b16 %v422
    %v751 = vunpack.c.l.b16 %v423
    %v752 = vunpack.c.h.b16 %v423
    %v753 = vunpack.c.l.b16 %v424
    %v754 = vunpack.c.h.b16 %v424
    %v755 = vunpack.c.l.b16 %v425
    %v756 = vunpack.c.h.b16 %v425
    %v757 = vunpack.c.l.b16 %v426
    %v758 = vunpack.c.h.b16 %v426
    %v759 = vunpack.c.l.b16 %v427
    %v760 = vunpack.c.h.b16 %v427
    %v761 = vunpack.c.l.b16 %v428
    %v762 = vunpack.c.h.b16 %v428
    %v763 = vunpack.c.l.b16 %v429
    %v764 = vunpack.c.h.b16 %v429
    %v765 = vunpack.c.l.b16 %v430
    %v766 = vunpack.c.h.b16 %v430
    %v767 = vunpack.c.l.b16 %v431
    %v768 = vunpack.c.h.b16 %v431
    %v769 = vunpack.c.l.b16 %v432
    %v770 = vunpack.c.h.b16 %v432
    %v771 = vunpack.c.l.b16 %v433
    %v772 = vunpack.c.h.b16 %v433
    %v773 = vunpack.c.l.b16 %v434
    %v774 = vunpack.c.h.b16 %v434
    %v775 = vunpack.c.l.b16 %v435
    %v776 = vunpack.c.h.b16 %v435
    %v777 = vunpack.c.l.b16 %v436
    %v778 = vunpack.c.h.b16 %v436
    %v779 = vunpack.c.l.b16 %v437
    %v780 = vunpack.c.h.b16 %v437
    %v781 = vunpack.c.l.b16 %v438
    %v782 = vunpack.c.h.b16 %v438
    %v783 = vunpack.c.l.b16 %v439
    %v784 = vunpack.c.h.b16 %v439
    %v785 = vunpack.c.l.b16 %v440
    %v786 = vunpack.c.h.b16 %v440
    %v787 = vunpack.c.l.b16 %v441
    %v788 = vunpack.c.h.b16 %v441
    %v789 = vunpack.c.l.b16 %v442
    %v790 = vunpack.c.h.b16 %v442
    %v791 = vunpack.c.l.b16 %v443
    %v792 = vunpack.c.h.b16 %v443
    %v793 = vunpack.c.l.b16 %v444
    %v794 = vunpack.c.h.b16 %v444
    %v795 = vunpack.c.l.b16 %v445
    %v796 = vunpack.c.h.b16 %v445
    %v797 = vunpack.c.l.b16 %v446
    %v798 = vunpack.c.h.b16 %v446
    %v799 = vunpack.c.l.b16 %v447
    %v800 = vunpack.c.h.b16 %v447
    %v801 = vunpack.c.l.b16 %v448
    %v802 = vunpack.c.h.b16 %v448
    %v803 = vunpack.c.l.b16 %v449
    %v804 = vunpack.c.h.b16 %v449
    %v805 = vunpack.c.l.b16 %v450
    %v806 = vunpack.c.h.b16 %v450
    %v807 = vunpack.c.l.b16 %v451
    %v808 = vunpack.c.h.b16 %v451
    %v809 = vunpack.c.l.b16 %v452
    %v810 = vunpack.c.h.b16 %v452
    %v811 = vunpack.c.l.b16 %v453
    %v812 = vunpack.c.h.b16 %v453
    %v813 = vunpack.c.l.b16 %v454
    %v814 = vunpack.c.h.b16 %v454
    %v815 = vunpack.c.l.b16 %v455
    %v816 = vunpack.c.h.b16 %v455
    %v817 = vunpack.c.l.b16 %v456
    %v818 = vunpack.c.h.b16 %v456
    %v819 = vunpack.c.l.b16 %v457
    %v820 = vunpack.c.h.b16 %v457
    %v821 = vunpack.c.l.b16 %v458
    %v822 = vunpack.c.h.b16 %v458
    %v823 = vunpack.c.l.b16 %v459
    %v824 = vunpack.c.h.b16 %v459
    %v825 = vunpack.c.l.b16 %v460
    %v826 = vunpack.c.h.b16 %v460
    %v827 = vunpack.c.l.b16 %v461
    %v828 = vunpack.c.h.b16 %v461
    %v829 = vunpack.c.l.b16 %v462
    %v830 = vunpack.c.h.b16 %v462
    %v831 = vunpack.c.l.b16 %v463
    %v832 = vunpack.c.h.b16 %v463
    %v833 = vunpack.c.l.b16 %v464
    %v834 = vunpack.c.h.b16 %v464
    %v835 = vunpack.c.l.b16 %v465
    %v836 = vunpack.c.h.b16 %v465
    %v837 = vunpack.c.l.b16 %v466
    %v838 = vunpack.c.h.b16 %v466
    %v839 = vunpack.c.l.b16 %v467
    %v840 = vunpack.c.h.b16 %v467
    %v841 = vunpack.c.l.b16 %v468
    %v842 = vunpack.c.h.b16 %v468
    %v843 = vunpack.c.l.b16 %v469
    %v844 = vunpack.c.h.b16 %v469
    %v845 = vunpack.c.l.b16 %v470
    %v846 = vunpack.c.h.b16 %v470
    %v847 = vunpack.c.l.b16 %v471
    %v848 = vunpack.c.h.b16 %v471
    %v849 = vunpack.c.l.b16 %v472
    %v850 = vunpack.c.h.b16 %v472
    %v851 = vunpack.c.l.b16 %v473
    %v852 = vunpack.c.h.b16 %v473
    %v853 = vunpack.c.l.b16 %v474
    %v854 = vunpack.c.h.b16 %v474
    %v855 = vunpack.c.l.b16 %v475
    %v856 = vunpack.c.h.b16 %v475
    %v857 = vunpack.c.l.b16 %v476
    %v858 = vunpack.c.h.b16 %v476
    %v859 = vunpack.c.l.b16 %v477
    %v860 = vunpack.c.h.b16 %v477
    %v861 = vunpack.c.l.b16 %v478
    %v862 = vunpack.c.h.b16 %v478
    %v863 = vunpack.c.l.b16 %v479
    %v864 = vunpack.c.h.b16 %v479
    %v865 = vunpack.c.l.b16 %v480
    %v866 = vunpack.c.h.b16 %v480
    %v867 = vunpack.c.l.b16 %v481
    %v868 = vunpack.c.h.b16 %v481
    %v869 = vunpack.c.l.b16 %v482
    %v870 = vunpack.c.h.b16 %v482
    %v871 = vunpack.c.l.b16 %v483
    %v872 = vunpack.c.h.b16 %v483
    %v873 = vunpack.c.l.b16 %v484
    %v874 = vunpack.c.h.b16 %v484
    %v875 = vpack.c.b16 %v621, %v619
    %v876 = vpack.c.b16 %v622, %v620
    %v877 = vpack.c.b16 %v625, %v623
    %v878 = vpack.c.b16 %v626, %v624
    %v879 = vpack.c.b16 %v629, %v627
    %v880 = vpack.c.b16 %v630, %v628
    %v881 = vpack.c.b16 %v633, %v631
    %v882 = vpack.c.b16 %v634, %v632
    %v883 = vpack.c.b16 %v637, %v635
    %v884 = vpack.c.b16 %v638, %v636
    %v885 = vpack.c.b16 %v641, %v639
    %v886 = vpack.c.b16 %v642, %v640
    %v887 = vpack.c.b16 %v645, %v643
    %v888 = vpack.c.b16 %v646, %v644
    %v889 = vpack.c.b16 %v649, %v647
    %v890 = vpack.c.b16 %v650, %v648
    %v891 = vpack.c.b16 %v653, %v651
    %v892 = vpack.c.b16 %v654, %v652
    %v893 = vpack.c.b16 %v657, %v655
    %v894 = vpack.c.b16 %v658, %v656
    %v895 = vpack.c.b16 %v661, %v659
    %v896 = vpack.c.b16 %v662, %v660
    %v897 = vpack.c.b16 %v665, %v663
    %v898 = vpack.c.b16 %v666, %v664
    %v899 = vpack.c.b16 %v669, %v667
    %v900 = vpack.c.b16 %v670, %v668
    %v901 = vpack.c.b16 %v673, %v671
    %v902 = vpack.c.b16 %v674, %v672
    %v903 = vpack.c.b16 %v677, %v675
    %v904 = vpack.c.b16 %v678, %v676
    %v905 = vpack.c.b16 %v681, %v679
    %v906 = vpack.c.b16 %v682, %v680
    %v907 = vpack.c.b16 %v685, %v683
    %v908 = vpack.c.b16 %v686, %v684
    %v909 = vpack.c.b16 %v689, %v687
    %v910 = vpack.c.b16 %v690, %v688
    %v911 = vpack.c.b16 %v693, %v691
    %v912 = vpack.c.b16 %v694, %v692
    %v913 = vpack.c.b16 %v697, %v695
    %v914 = vpack.c.b16 %v698, %v696
    %v915 = vpack.c.b16 %v701, %v699
    %v916 = vpack.c.b16 %v702, %v700
    %v917 = vpack.c.b16 %v705, %v703
    %v918 = vpack.c.b16 %v706, %v704
    %v919 = vpack.c.b16 %v709, %v707
    %v920 = vpack.c.b16 %v710, %v708
    %v921 = vpack.c.b16 %v713, %v711
    %v922 = vpack.c.b16 %v714, %v712
    %v923 = vpack.c.b16 %v717, %v715
    %v924 = vpack.c.b16 %v718, %v716
    %v925 = vpack.c.b16 %v721, %v719
    %v926 = vpack.c.b16 %v722, %v720
    %v927 = vpack.c.b16 %v725, %v723
    %v928 = vpack.c.b16 %v726, %v724
    %v929 = vpack.c.b16 %v729, %v727
    %v930 = vpack.c.b16 %v730, %v728
    %v931 = vpack.c.b16 %v733, %v731
    %v932 = vpack.c.b16 %v734, %v732
    %v933 = vpack.c.b16 %v737, %v735
    %v934 = vpack.c.b16 %v738, %v736
    %v935 = vpack.c.b16 %v741, %v739
    %v936 = vpack.c.b16 %v742, %v740
    %v937 = vpack.c.b16 %v745, %v743
    %v938 = vpack.c.b16 %v746, %v744
    %v939 = vpack.c.b16 %v749, %v747
    %v940 = vpack.c.b16 %v750, %v748
    %v941 = vpack.c.b16 %v753, %v751
    %v942 = vpack.c.b16 %v754, %v752
    %v943 = vpack.c.b16 %v757, %v755
    %v944 = vpack.c.b16 %v758, %v756
    %v945 = vpack.c.b16 %v761, %v759
    %v946 = vpack.c.b16 %v762, %v760
    %v947 = vpack.c.b16 %v765, %v763
    %v948 = vpack.c.b16 %v766, %v764
    %v949 = vpack.c.b16 %v769, %v767
    %v950 = vpack.c.b16 %v770, %v768
    %v951 = vpack.c.b16 %v773, %v771
    %v952 = vpack.c.b16 %v774, %v772
    %v953 = vpack.c.b16 %v777, %v775
    %v954 = vpack.c.b16 %v778, %v776
    %v955 = vpack.c.b16 %v781, %v779
    %v956 = vpack.c.b16 %v782, %v780
    %v957 = vpack.c.b16 %v785, %v783
    %v958 = vpack.c.b16 %v786, %v784
    %v959 = vpack.c.b16 %v789, %v787
    %v960 = vpack.c.b16 %v790, %v788
    %v961 = vpack.c.b16 %v793, %v791
    %v962 = vpack.c.b16 %v794, %v792
    %v963 = vpack.c.b16 %v797, %v795
    %v964 = vpack.c.b16 %v798, %v796
    %v965 = vpack.c.b16 %v801, %v799
    %v966 = vpack.c.b16 %v802, %v800
    %v967 = vpack.c.b16 %v805, %v803
    %v968 = vpack.c.b16 %v806, %v804
    %v969 = vpack.c.b16 %v809, %v807
    %v970 = vpack.c.b16 %v810, %v808
    %v971 = vpack.c.b16 %v813, %v811
    %v972 = vpack.c.b16 %v814, %v812
    %v973 = vpack.c.b16 %v817, %v815
    %v974 = vpack.c.b16 %v818, %v816
    %v975 = vpack.c.b16 %v821, %v819
    %v976 = vpack.c.b16 %v822, %v820
    %v977 = vpack.c.b16 %v825, %v823
    %v978 = vpack.c.b16 %v826, %v824
    %v979 = vpack.c.b16 %v829, %v827
    %v980 = vpack.c.b16 %v830, %v828
    %v981 = vpack.c.b16 %v833, %v831
    %v982 = vpack.c.b16 %v834, %v832
    %v983 = vpack.c.b16 %v837, %v835
    %v984 = vpack.c.b16 %v838, %v836
    %v985 = vpack.c.b16 %v841, %v839
    %v986 = vpack.c.b16 %v842, %v840
    %v987 = vpack.c.b16 %v845, %v843
    %v988 = vpack.c.b16 %v846, %v844
    %v989 = vpack.c.b16 %v849, %v847
    %v990 = vpack.c.b16 %v850, %v848
    %v991 = vpack.c.b16 %v853, %v851
    %v992 = vpack.c.b16 %v854, %v852
    %v993 = vpack.c.b16 %v857, %v855
    %v994 = vpack.c.b16 %v858, %v856
    %v995 = vpack.c.b16 %v861, %v859
    %v996 = vpack.c.b16 %v862, %v860
    %v997 = vpack.c.b16 %v865, %v863
    %v998 = vpack.c.b16 %v866, %v864
    %v999 = vpack.c.b16 %v869, %v867
    %v1000 = vpack.c.b16 %v870, %v868
    %v1001 = vpack.c.b16 %v873, %v871
    %v1002 = vpack.c.b16 %v874, %v872
    %1131 = vmatpush.bf16.msra.mxu0 %v889
    %1132 = vmatpush.bf16.msra.mxu0 %v887
    %1133 = vmatpush.bf16.msra.mxu0 %v885
    %1134 = vmatpush.bf16.msra.mxu0 %v883
    %1135 = vmatpush.bf16.msra.mxu0 %v881
    %1136 = vmatpush.bf16.msra.mxu0 %v879
    %1137 = vmatpush.bf16.msra.mxu0 %v877
    %1138 = vmatpush.bf16.msra.mxu0 %v875
    %1139 = vmatmul.bf16.gmra.mxu0 %v341
    %v1140 = vpop.f32.mrf.mxu0
    %v1141 = vadd.f32 %v487, %v1140
    %v1142 = vpop.f32.mrf.mxu0
    %v1143 = vadd.f32 %v487, %v1142
    %1144 = vmatmul.bf16.gmra.mxu0 %v349
    %v1145 = vpop.f32.mrf.mxu0
    %v1146 = vadd.f32 %v487, %v1145
    %v1147 = vpop.f32.mrf.mxu0
    %1148 = vdwg.mxu0
    %1149 = vmatpush.bf16.msra.mxu0 %v905
    %1150 = vmatpush.bf16.msra.mxu0 %v903
    %1151 = vmatpush.bf16.msra.mxu0 %v901
    %1152 = vmatpush.bf16.msra.mxu0 %v899
    %1153 = vmatpush.bf16.msra.mxu0 %v897
    %1154 = vmatpush.bf16.msra.mxu0 %v895
    %1155 = vmatpush.bf16.msra.mxu0 %v893
    %1156 = vmatpush.bf16.msra.mxu0 %v891
    %1157 = vmatmul.bf16.gmra.mxu0 %v342
    %v1158 = vpop.f32.mrf.mxu0
    %v1159 = vadd.f32 %v1141, %v1158
    %v1160 = vpop.f32.mrf.mxu0
    %v1161 = vadd.f32 %v1143, %v1160
    %1162 = vmatmul.bf16.gmra.mxu0 %v350
    %v1163 = vpop.f32.mrf.mxu0
    %v1164 = vadd.f32 %v1146, %v1163
    %v1165 = vpop.f32.mrf.mxu0
    %1166 = vdwg.mxu0
    %1167 = vmatpush.bf16.msra.mxu0 %v921
    %1168 = vmatpush.bf16.msra.mxu0 %v919
    %1169 = vmatpush.bf16.msra.mxu0 %v917
    %1170 = vmatpush.bf16.msra.mxu0 %v915
    %1171 = vmatpush.bf16.msra.mxu0 %v913
    %1172 = vmatpush.bf16.msra.mxu0 %v911
    %1173 = vmatpush.bf16.msra.mxu0 %v909
    %1174 = vmatpush.bf16.msra.mxu0 %v907
    %1175 = vmatmul.bf16.gmra.mxu0 %v343
    %v1176 = vpop.f32.mrf.mxu0
    %v1177 = vadd.f32 %v1159, %v1176
    %v1178 = vpop.f32.mrf.mxu0
    %v1179 = vadd.f32 %v1161, %v1178
    %1180 = vmatmul.bf16.gmra.mxu0 %v351
    %v1181 = vpop.f32.mrf.mxu0
    %v1182 = vadd.f32 %v1164, %v1181
    %v1183 = vpop.f32.mrf.mxu0
    %1184 = vdwg.mxu0
    %1185 = vmatpush.bf16.msra.mxu0 %v937
    %1186 = vmatpush.bf16.msra.mxu0 %v935
    %1187 = vmatpush.bf16.msra.mxu0 %v933
    %1188 = vmatpush.bf16.msra.mxu0 %v931
    %1189 = vmatpush.bf16.msra.mxu0 %v929
    %1190 = vmatpush.bf16.msra.mxu0 %v927
    %1191 = vmatpush.bf16.msra.mxu0 %v925
    %1192 = vmatpush.bf16.msra.mxu0 %v923
    %1193 = vmatmul.bf16.gmra.mxu0 %v344
    %v1194 = vpop.f32.mrf.mxu0
    %v1195 = vadd.f32 %v1177, %v1194
    %v1196 = vpop.f32.mrf.mxu0
    %v1197 = vadd.f32 %v1179, %v1196
    %1198 = vmatmul.bf16.gmra.mxu0 %v352
    %v1199 = vpop.f32.mrf.mxu0
    %v1200 = vadd.f32 %v1182, %v1199
    %v1201 = vpop.f32.mrf.mxu0
    %1202 = vdwg.mxu0
    %1203 = vmatpush.bf16.msra.mxu0 %v953
    %1204 = vmatpush.bf16.msra.mxu0 %v951
    %1205 = vmatpush.bf16.msra.mxu0 %v949
    %1206 = vmatpush.bf16.msra.mxu0 %v947
    %1207 = vmatpush.bf16.msra.mxu0 %v945
    %1208 = vmatpush.bf16.msra.mxu0 %v943
    %1209 = vmatpush.bf16.msra.mxu0 %v941
    %1210 = vmatpush.bf16.msra.mxu0 %v939
    %1211 = vmatmul.bf16.gmra.mxu0 %v345
    %v1212 = vpop.f32.mrf.mxu0
    %v1213 = vadd.f32 %v1195, %v1212
    %v1214 = vpop.f32.mrf.mxu0
    %v1215 = vadd.f32 %v1197, %v1214
    %1216 = vmatmul.bf16.gmra.mxu0 %v353
    %v1217 = vpop.f32.mrf.mxu0
    %v1218 = vadd.f32 %v1200, %v1217
    %v1219 = vpop.f32.mrf.mxu0
    %1220 = vdwg.mxu0
    %1221 = vmatpush.bf16.msra.mxu0 %v969
    %1222 = vmatpush.bf16.msra.mxu0 %v967
    %1223 = vmatpush.bf16.msra.mxu0 %v965
    %1224 = vmatpush.bf16.msra.mxu0 %v963
    %1225 = vmatpush.bf16.msra.mxu0 %v961
    %1226 = vmatpush.bf16.msra.mxu0 %v959
    %1227 = vmatpush.bf16.msra.mxu0 %v957
    %1228 = vmatpush.bf16.msra.mxu0 %v955
    %1229 = vmatmul.bf16.gmra.mxu0 %v346
    %v1230 = vpop.f32.mrf.mxu0
    %v1231 = vadd.f32 %v1213, %v1230
    %v1232 = vpop.f32.mrf.mxu0
    %v1233 = vadd.f32 %v1215, %v1232
    %1234 = vmatmul.bf16.gmra.mxu0 %v354
    %v1235 = vpop.f32.mrf.mxu0
    %v1236 = vadd.f32 %v1218, %v1235
    %v1237 = vpop.f32.mrf.mxu0
    %1238 = vdwg.mxu0
    %1239 = vmatpush.bf16.msra.mxu0 %v985
    %1240 = vmatpush.bf16.msra.mxu0 %v983
    %1241 = vmatpush.bf16.msra.mxu0 %v981
    %1242 = vmatpush.bf16.msra.mxu0 %v979
    %1243 = vmatpush.bf16.msra.mxu0 %v977
    %1244 = vmatpush.bf16.msra.mxu0 %v975
    %1245 = vmatpush.bf16.msra.mxu0 %v973
    %1246 = vmatpush.bf16.msra.mxu0 %v971
    %1247 = vmatmul.bf16.gmra.mxu0 %v347
    %v1248 = vpop.f32.mrf.mxu0
    %v1249 = vadd.f32 %v1231, %v1248
    %v1250 = vpop.f32.mrf.mxu0
    %v1251 = vadd.f32 %v1233, %v1250
    %1252 = vmatmul.bf16.gmra.mxu0 %v355
    %v1253 = vpop.f32.mrf.mxu0
    %v1254 = vadd.f32 %v1236, %v1253
    %v1255 = vpop.f32.mrf.mxu0
    %1256 = vdwg.mxu0
    %1257 = vmatpush.bf16.msra.mxu0 %v1001
    %1258 = vmatpush.bf16.msra.mxu0 %v999
    %1259 = vmatpush.bf16.msra.mxu0 %v997
    %1260 = vmatpush.bf16.msra.mxu0 %v995
    %1261 = vmatpush.bf16.msra.mxu0 %v993
    %1262 = vmatpush.bf16.msra.mxu0 %v991
    %1263 = vmatpush.bf16.msra.mxu0 %v989
    %1264 = vmatpush.bf16.msra.mxu0 %v987
    %1265 = vmatmul.bf16.gmra.mxu0 %v348
    %v1266 = vpop.f32.mrf.mxu0
    %v1267 = vadd.f32 %v1249, %v1266
    %v1268 = vpop.f32.mrf.mxu0
    %v1269 = vadd.f32 %v1251, %v1268
    %1270 = vmatmul.bf16.gmra.mxu0 %v356
    %v1271 = vpop.f32.mrf.mxu0
    %v1272 = vadd.f32 %v1254, %v1271
    %v1273 = vpop.f32.mrf.mxu0
    %1274 = vdwg.mxu0
    %1275 = vmatpush.bf16.msra.mxu0 %v890
    %1276 = vmatpush.bf16.msra.mxu0 %v888
    %1277 = vmatpush.bf16.msra.mxu0 %v886
    %1278 = vmatpush.bf16.msra.mxu0 %v884
    %1279 = vmatpush.bf16.msra.mxu0 %v882
    %1280 = vmatpush.bf16.msra.mxu0 %v880
    %1281 = vmatpush.bf16.msra.mxu0 %v878
    %1282 = vmatpush.bf16.msra.mxu0 %v876
    %1283 = vmatmul.bf16.gmra.mxu0 %v341
    %v1284 = vpop.f32.mrf.mxu0
    %v1285 = vadd.f32 %v488, %v1284
    %v1286 = vpop.f32.mrf.mxu0
    %v1287 = vadd.f32 %v488, %v1286
    %1288 = vmatmul.bf16.gmra.mxu0 %v349
    %v1289 = vpop.f32.mrf.mxu0
    %v1290 = vadd.f32 %v488, %v1289
    %v1291 = vpop.f32.mrf.mxu0
    %1292 = vdwg.mxu0
    %1293 = vmatpush.bf16.msra.mxu0 %v906
    %1294 = vmatpush.bf16.msra.mxu0 %v904
    %1295 = vmatpush.bf16.msra.mxu0 %v902
    %1296 = vmatpush.bf16.msra.mxu0 %v900
    %1297 = vmatpush.bf16.msra.mxu0 %v898
    %1298 = vmatpush.bf16.msra.mxu0 %v896
    %1299 = vmatpush.bf16.msra.mxu0 %v894
    %1300 = vmatpush.bf16.msra.mxu0 %v892
    %1301 = vmatmul.bf16.gmra.mxu0 %v342
    %v1302 = vpop.f32.mrf.mxu0
    %v1303 = vadd.f32 %v1285, %v1302
    %v1304 = vpop.f32.mrf.mxu0
    %v1305 = vadd.f32 %v1287, %v1304
    %1306 = vmatmul.bf16.gmra.mxu0 %v350
    %v1307 = vpop.f32.mrf.mxu0
    %v1308 = vadd.f32 %v1290, %v1307
    %v1309 = vpop.f32.mrf.mxu0
    %1310 = vdwg.mxu0
    %1311 = vmatpush.bf16.msra.mxu0 %v922
    %1312 = vmatpush.bf16.msra.mxu0 %v920
    %1313 = vmatpush.bf16.msra.mxu0 %v918
    %1314 = vmatpush.bf16.msra.mxu0 %v916
    %1315 = vmatpush.bf16.msra.mxu0 %v914
    %1316 = vmatpush.bf16.msra.mxu0 %v912
    %1317 = vmatpush.bf16.msra.mxu0 %v910
    %1318 = vmatpush.bf16.msra.mxu0 %v908
    %1319 = vmatmul.bf16.gmra.mxu0 %v343
    %v1320 = vpop.f32.mrf.mxu0
    %v1321 = vadd.f32 %v1303, %v1320
    %v1322 = vpop.f32.mrf.mxu0
    %v1323 = vadd.f32 %v1305, %v1322
    %1324 = vmatmul.bf16.gmra.mxu0 %v351
    %v1325 = vpop.f32.mrf.mxu0
    %v1326 = vadd.f32 %v1308, %v1325
    %v1327 = vpop.f32.mrf.mxu0
    %1328 = vdwg.mxu0
    %1329 = vmatpush.bf16.msra.mxu0 %v938
    %1330 = vmatpush.bf16.msra.mxu0 %v936
    %1331 = vmatpush.bf16.msra.mxu0 %v934
    %1332 = vmatpush.bf16.msra.mxu0 %v932
    %1333 = vmatpush.bf16.msra.mxu0 %v930
    %1334 = vmatpush.bf16.msra.mxu0 %v928
    %1335 = vmatpush.bf16.msra.mxu0 %v926
    %1336 = vmatpush.bf16.msra.mxu0 %v924
    %1337 = vmatmul.bf16.gmra.mxu0 %v344
    %v1338 = vpop.f32.mrf.mxu0
    %v1339 = vadd.f32 %v1321, %v1338
    %v1340 = vpop.f32.mrf.mxu0
    %v1341 = vadd.f32 %v1323, %v1340
    %1342 = vmatmul.bf16.gmra.mxu0 %v352
    %v1343 = vpop.f32.mrf.mxu0
    %v1344 = vadd.f32 %v1326, %v1343
    %v1345 = vpop.f32.mrf.mxu0
    %1346 = vdwg.mxu0
    %1347 = vmatpush.bf16.msra.mxu0 %v954
    %1348 = vmatpush.bf16.msra.mxu0 %v952
    %1349 = vmatpush.bf16.msra.mxu0 %v950
    %1350 = vmatpush.bf16.msra.mxu0 %v948
    %1351 = vmatpush.bf16.msra.mxu0 %v946
    %1352 = vmatpush.bf16.msra.mxu0 %v944
    %1353 = vmatpush.bf16.msra.mxu0 %v942
    %1354 = vmatpush.bf16.msra.mxu0 %v940
    %1355 = vmatmul.bf16.gmra.mxu0 %v345
    %v1356 = vpop.f32.mrf.mxu0
    %v1357 = vadd.f32 %v1339, %v1356
    %v1358 = vpop.f32.mrf.mxu0
    %v1359 = vadd.f32 %v1341, %v1358
    %1360 = vmatmul.bf16.gmra.mxu0 %v353
    %v1361 = vpop.f32.mrf.mxu0
    %v1362 = vadd.f32 %v1344, %v1361
    %v1363 = vpop.f32.mrf.mxu0
    %1364 = vdwg.mxu0
    %1365 = vmatpush.bf16.msra.mxu0 %v970
    %1366 = vmatpush.bf16.msra.mxu0 %v968
    %1367 = vmatpush.bf16.msra.mxu0 %v966
    %1368 = vmatpush.bf16.msra.mxu0 %v964
    %1369 = vmatpush.bf16.msra.mxu0 %v962
    %1370 = vmatpush.bf16.msra.mxu0 %v960
    %1371 = vmatpush.bf16.msra.mxu0 %v958
    %1372 = vmatpush.bf16.msra.mxu0 %v956
    %1373 = vmatmul.bf16.gmra.mxu0 %v346
    %v1374 = vpop.f32.mrf.mxu0
    %v1375 = vadd.f32 %v1357, %v1374
    %v1376 = vpop.f32.mrf.mxu0
    %v1377 = vadd.f32 %v1359, %v1376
    %1378 = vmatmul.bf16.gmra.mxu0 %v354
    %v1379 = vpop.f32.mrf.mxu0
    %v1380 = vadd.f32 %v1362, %v1379
    %v1381 = vpop.f32.mrf.mxu0
    %1382 = vdwg.mxu0
    %1383 = vmatpush.bf16.msra.mxu0 %v986
    %1384 = vmatpush.bf16.msra.mxu0 %v984
    %1385 = vmatpush.bf16.msra.mxu0 %v982
    %1386 = vmatpush.bf16.msra.mxu0 %v980
    %1387 = vmatpush.bf16.msra.mxu0 %v978
    %1388 = vmatpush.bf16.msra.mxu0 %v976
    %1389 = vmatpush.bf16.msra.mxu0 %v974
    %1390 = vmatpush.bf16.msra.mxu0 %v972
    %1391 = vmatmul.bf16.gmra.mxu0 %v347
    %v1392 = vpop.f32.mrf.mxu0
    %v1393 = vadd.f32 %v1375, %v1392
    %v1394 = vpop.f32.mrf.mxu0
    %v1395 = vadd.f32 %v1377, %v1394
    %1396 = vmatmul.bf16.gmra.mxu0 %v355
    %v1397 = vpop.f32.mrf.mxu0
    %v1398 = vadd.f32 %v1380, %v1397
    %v1399 = vpop.f32.mrf.mxu0
    %1400 = vdwg.mxu0
    %1401 = vmatpush.bf16.msra.mxu0 %v1002
    %1402 = vmatpush.bf16.msra.mxu0 %v1000
    %1403 = vmatpush.bf16.msra.mxu0 %v998
    %1404 = vmatpush.bf16.msra.mxu0 %v996
    %1405 = vmatpush.bf16.msra.mxu0 %v994
    %1406 = vmatpush.bf16.msra.mxu0 %v992
    %1407 = vmatpush.bf16.msra.mxu0 %v990
    %1408 = vmatpush.bf16.msra.mxu0 %v988
    %1409 = vmatmul.bf16.gmra.mxu0 %v348
    %v1410 = vpop.f32.mrf.mxu0
    %v1411 = vadd.f32 %v1393, %v1410
    %v1412 = vpop.f32.mrf.mxu0
    %v1413 = vadd.f32 %v1395, %v1412
    %1414 = vmatmul.bf16.gmra.mxu0 %v356
    %v1415 = vpop.f32.mrf.mxu0
    %v1416 = vadd.f32 %v1398, %v1415
    %v1417 = vpop.f32.mrf.mxu0
    %1418 = vdwg.mxu0
    %v1419 = vmax.f32 %v1267, 0.0
    %v1420 = vmax.f32 %v1411, 0.0
    %v1421 = vmax.f32 %v1269, 0.0
    %v1422 = vmax.f32 %v1413, 0.0
    %v1423 = vmax.f32 %v1272, 0.0
    %v1424 = vmax.f32 %v1416, 0.0
    %v1425 = vpack.c.bf16 %v1421, %v1419
    %v1426 = vpack.c.bf16 %v1422, %v1420
    %v1427 = vpack.c.bf16 %v1423, %v1423
    %v1428 = vpack.c.bf16 %v1424, %v1424
    %v1429 = vld [vmem:[%s5] sm:$0xf]
    %v1430 = vld [vmem:[%s5 + $0x4] sm:$0xf]
    %v1431 = vld [vmem:[%s5 + $0x8] sm:$0xf]
    %v1432 = vld [vmem:[%s5 + $0xc] sm:$0xf]
    %v1433 = vld [vmem:[%s5 + $0x10] sm:$0xf]
    %v1434 = vld [vmem:[%s5 + $0x14] sm:$0xf]
    %v1435 = vld [vmem:[%s5 + $0x18] sm:$0xf]
    %v1436 = vld [vmem:[%s5 + $0x1c] sm:$0xf]
    %v1437 = vld [vmem:[%s5 + $0x20] sm:$0xf]
    %v1438 = vld [vmem:[%s5 + $0x24] sm:$0xf]
    %v1439 = vld [vmem:[%s5 + $0x28] sm:$0xf]
    %v1440 = vld [vmem:[%s5 + $0x2c] sm:$0xf]
    %v1441 = vld [vmem:[%s5 + $0x30] sm:$0xf]
    %v1442 = vld [vmem:[%s5 + $0x34] sm:$0xf]
    %v1443 = vld [vmem:[%s5 + $0x38] sm:$0xf]
    %v1444 = vld [vmem:[%s5 + $0x3c] sm:$0xf]
    %v1445 = vld [vmem:[%s5 + $0x40] sm:$0xf]
    %v1446 = vld [vmem:[%s5 + $0x44] sm:$0xf]
    %v1447 = vld [vmem:[%s5 + $0x48] sm:$0xf]
    %v1448 = vld [vmem:[%s5 + $0x4c] sm:$0xf]
    %v1449 = vld [vmem:[%s5 + $0x50] sm:$0xf]
    %v1450 = vld [vmem:[%s5 + $0x54] sm:$0xf]
    %v1451 = vld [vmem:[%s5 + $0x58] sm:$0xf]
    %v1452 = vld [vmem:[%s5 + $0x5c] sm:$0xf]
    %v1453 = vld [vmem:[%s5 + $0x60] sm:$0xf]
    %v1454 = vld [vmem:[%s5 + $0x64] sm:$0xf]
    %v1455 = vld [vmem:[%s5 + $0x68] sm:$0xf]
    %v1456 = vld [vmem:[%s5 + $0x6c] sm:$0xf]
    %v1457 = vld [vmem:[%s5 + $0x70] sm:$0xf]
    %v1458 = vld [vmem:[%s5 + $0x74] sm:$0xf]
    %v1459 = vld [vmem:[%s5 + $0x78] sm:$0xf]
    %v1460 = vld [vmem:[%s5 + $0x7c] sm:$0xf]
    %v1461 = vld [vmem:[%s6] sm:$0x1]
    %v1463 = vperm.slane %v1461, 0
    %v1497 = vunpack.c.l.b16 %v1429
    %v1498 = vunpack.c.l.b16 %v1430
    %v1499 = vunpack.c.l.b16 %v1431
    %v1500 = vunpack.c.l.b16 %v1432
    %v1501 = vunpack.c.l.b16 %v1433
    %v1502 = vunpack.c.l.b16 %v1434
    %v1503 = vunpack.c.l.b16 %v1435
    %v1504 = vunpack.c.l.b16 %v1436
    %v1505 = vunpack.c.l.b16 %v1437
    %v1506 = vunpack.c.l.b16 %v1438
    %v1507 = vunpack.c.l.b16 %v1439
    %v1508 = vunpack.c.l.b16 %v1440
    %v1509 = vunpack.c.l.b16 %v1441
    %v1510 = vunpack.c.l.b16 %v1442
    %v1511 = vunpack.c.l.b16 %v1443
    %v1512 = vunpack.c.l.b16 %v1444
    %v1513 = vunpack.c.l.b16 %v1445
    %v1514 = vunpack.c.l.b16 %v1446
    %v1515 = vunpack.c.l.b16 %v1447
    %v1516 = vunpack.c.l.b16 %v1448
    %v1517 = vunpack.c.l.b16 %v1449
    %v1518 = vunpack.c.l.b16 %v1450
    %v1519 = vunpack.c.l.b16 %v1451
    %v1520 = vunpack.c.l.b16 %v1452
    %v1521 = vunpack.c.l.b16 %v1453
    %v1522 = vunpack.c.l.b16 %v1454
    %v1523 = vunpack.c.l.b16 %v1455
    %v1524 = vunpack.c.l.b16 %v1456
    %v1525 = vunpack.c.l.b16 %v1457
    %v1526 = vunpack.c.l.b16 %v1458
    %v1527 = vunpack.c.l.b16 %v1459
    %v1528 = vunpack.c.l.b16 %v1460
    %v1529 = vpack.c.b16 %v1498, %v1497
    %v1530 = vpack.c.b16 %v1500, %v1499
    %v1531 = vpack.c.b16 %v1502, %v1501
    %v1532 = vpack.c.b16 %v1504, %v1503
    %v1533 = vpack.c.b16 %v1506, %v1505
    %v1534 = vpack.c.b16 %v1508, %v1507
    %v1535 = vpack.c.b16 %v1510, %v1509
    %v1536 = vpack.c.b16 %v1512, %v1511
    %v1537 = vpack.c.b16 %v1514, %v1513
    %v1538 = vpack.c.b16 %v1516, %v1515
    %v1539 = vpack.c.b16 %v1518, %v1517
    %v1540 = vpack.c.b16 %v1520, %v1519
    %v1541 = vpack.c.b16 %v1522, %v1521
    %v1542 = vpack.c.b16 %v1524, %v1523
    %v1543 = vpack.c.b16 %v1526, %v1525
    %v1544 = vpack.c.b16 %v1528, %v1527
    %1561 = vmatpush.bf16.msra.mxu0 %v1536
    %1562 = vmatpush.bf16.msra.mxu0 %v1535
    %1563 = vmatpush.bf16.msra.mxu0 %v1534
    %1564 = vmatpush.bf16.msra.mxu0 %v1533
    %1565 = vmatpush.bf16.msra.mxu0 %v1532
    %1566 = vmatpush.bf16.msra.mxu0 %v1531
    %1567 = vmatpush.bf16.msra.mxu0 %v1530
    %1568 = vmatpush.bf16.msra.mxu0 %v1529
    %1569 = vmatmul.bf16.gmra.mxu0 %v1425
    %v1570 = vpop.f32.mrf.mxu0
    %v1571 = vadd.f32 %v1463, %v1570
    %v1572 = vpop.f32.mrf.mxu0
    %v1573 = vadd.f32 %v1463, %v1572
    %1574 = vmatmul.bf16.gmra.mxu0 %v1427
    %v1575 = vpop.f32.mrf.mxu0
    %v1576 = vadd.f32 %v1463, %v1575
    %v1577 = vpop.f32.mrf.mxu0
    %1578 = vdwg.mxu0
    %1579 = vmatpush.bf16.msra.mxu0 %v1544
    %1580 = vmatpush.bf16.msra.mxu0 %v1543
    %1581 = vmatpush.bf16.msra.mxu0 %v1542
    %1582 = vmatpush.bf16.msra.mxu0 %v1541
    %1583 = vmatpush.bf16.msra.mxu0 %v1540
    %1584 = vmatpush.bf16.msra.mxu0 %v1539
    %1585 = vmatpush.bf16.msra.mxu0 %v1538
    %1586 = vmatpush.bf16.msra.mxu0 %v1537
    %1587 = vmatmul.bf16.gmra.mxu0 %v1426
    %v1588 = vpop.f32.mrf.mxu0
    %v1589 = vadd.f32 %v1571, %v1588
    %v1590 = vpop.f32.mrf.mxu0
    %v1591 = vadd.f32 %v1573, %v1590
    %1592 = vmatmul.bf16.gmra.mxu0 %v1428
    %v1593 = vpop.f32.mrf.mxu0
    %v1594 = vadd.f32 %v1576, %v1593
    %v1595 = vpop.f32.mrf.mxu0
    %1596 = vdwg.mxu0
    %vm1597 = vcmask 80896
    %1598 = vst.msk [vmem:[%s7] sm:$0xff] %vm1597, %v1589
    %1599 = vst.msk [vmem:[%s7 + $0x8] sm:$0xff] %vm1597, %v1591
    %1600 = vst.msk [vmem:[%s7 + $0x10] sm:$0xff] %vm1597, %v1594
    // Predicated region
    $region34: #{tln_forward.7} parent=1 // pred_check
      _
    $region35: #{tln_forward.7} parent=1 // pred_check_branch
      %1602 = sbr.rel (0) target = $region37
    $region36: #{tln_forward.7} parent=1 // pred_region
      _
    $region37: #{tln_forward.7} parent=1 // pred_fallthru
      _
    // Predicated region
    $region38: #{tln_forward.7} parent=1 // pred_check
      _
    $region39: #{tln_forward.7} parent=1 // pred_check_branch
      %1604 = sbr.rel (0) target = $region41
    $region40: #{tln_forward.7} parent=1 // pred_region
      _
    $region41: #{tln_forward.7} parent=1 // pred_fallthru
      _
    %1605 = vsyncpa [#allocation3], 1

</llo_original>
